<compile_context>
chip_gen: v7x
topology: tpu7x:2x2x1
jax: 0.10.0
libtpu: 0.0.40
codegen_flags: <defaults>
</compile_context>

<pallas_src>
import functools
import math

import jax
import jax.numpy as jnp
from jax.experimental import pallas as pl
from jax.experimental.pallas import tpu as pltpu

LANES = 128
TM = 256   # node-row tile
TK = 512   # reduction (neighbor) tile


def _round_up(x, m):
    return (x + m - 1) // m * m


def _pad2(a, rows, cols):
    r, c = a.shape
    return jnp.pad(a, ((0, rows - r), (0, cols - c)))


# ---------------------------------------------------------------------------
# Kernel 1: scaled feature transform   XW1_scaled = diag(dinv) @ (X @ W1)
# ---------------------------------------------------------------------------
def _transform_kernel(x_ref, w_ref, dinv_ref, o_ref):
    xw = jnp.dot(x_ref[...], w_ref[...], preferred_element_type=jnp.float32)
    o_ref[...] = (dinv_ref[...] * xw).astype(o_ref.dtype)


def feature_transform(x, w, dinv, *, tm=TM):
    n, f = x.shape
    c = w.shape[1]
    assert n % tm == 0
    return pl.pallas_call(
        _transform_kernel,
        out_shape=jax.ShapeDtypeStruct((n, c), jnp.bfloat16),
        grid_spec=pltpu.PrefetchScalarGridSpec(
            num_scalar_prefetch=0,
            grid=(n // tm,),
            in_specs=[
                pl.BlockSpec((tm, f), lambda i: (i, 0)),
                pl.BlockSpec((f, c), lambda i: (0, 0)),      # W1 resident
                pl.BlockSpec((tm, 1), lambda i: (i, 0)),     # dinv rows
            ],
            out_specs=pl.BlockSpec((tm, c), lambda i: (i, 0)),
        ),
        compiler_params=pltpu.CompilerParams(dimension_semantics=("parallel",)),
    )(x, w, dinv)


# ---------------------------------------------------------------------------
# Kernel 2: layer-1 aggregation (binary A, folded norm) fused with layer-2
#           feature transform:
#   acc  = sum_k A_bin[i, k*tk:(k+1)*tk] @ XW1_scaled[k*tk:(k+1)*tk]
#   h    = relu(dinv_i * acc + b1)
#   out  = dinv_i * (h @ W2)        (right-normalized HW2 for layer 2)
# ---------------------------------------------------------------------------
def _agg1_kernel(a_ref, xw_ref, dinv_ref, b_ref, wn_ref, o_ref, acc_ref, *, tk):
    k = pl.program_id(1)

    @pl.when(k == 0)
    def _():
        acc_ref[...] = jnp.zeros_like(acc_ref)

    off = pl.multiple_of(k * tk, tk)
    acc_ref[...] += jnp.dot(
        a_ref[...], xw_ref[pl.ds(off, tk), :], preferred_element_type=jnp.float32
    )

    @pl.when(k == pl.num_programs(1) - 1)
    def _():
        h = jnp.maximum(dinv_ref[...] * acc_ref[...] + b_ref[...], 0.0)
        hw = jnp.dot(
            h.astype(wn_ref.dtype), wn_ref[...], preferred_element_type=jnp.float32
        )
        o_ref[...] = (dinv_ref[...] * hw).astype(o_ref.dtype)


def aggregate_relu_transform(a_bin, xw, dinv, b1, w2, *, tm=TM, tk=TK):
    n_pad = a_bin.shape[0]
    c = xw.shape[1]
    c_out = w2.shape[1]
    assert n_pad % tm == 0 and n_pad % tk == 0
    kernel = functools.partial(_agg1_kernel, tk=tk)
    return pl.pallas_call(
        kernel,
        out_shape=jax.ShapeDtypeStruct((n_pad, c_out), jnp.bfloat16),
        grid_spec=pltpu.PrefetchScalarGridSpec(
            num_scalar_prefetch=0,
            grid=(n_pad // tm, n_pad // tk),           # reduction axis last
            in_specs=[
                pl.BlockSpec((tm, tk), lambda i, k: (i, k)),     # A_bin tile
                pl.BlockSpec((n_pad, c), lambda i, k: (0, 0)),   # XW1 resident
                pl.BlockSpec((tm, 1), lambda i, k: (i, 0)),      # dinv rows
                pl.BlockSpec((1, c), lambda i, k: (0, 0)),       # b1 resident
                pl.BlockSpec((c, c_out), lambda i, k: (0, 0)),   # W2 resident
            ],
            out_specs=pl.BlockSpec((tm, c_out), lambda i, k: (i, 0)),
            scratch_shapes=[pltpu.VMEM((tm, c), jnp.float32)],
        ),
        compiler_params=pltpu.CompilerParams(
            dimension_semantics=("parallel", "arbitrary")
        ),
    )(a_bin, xw, dinv, b1, w2)


# ---------------------------------------------------------------------------
# Kernel 3: layer-2 aggregation:  out = dinv_i * (A_bin @ HW2_scaled) + b2
# ---------------------------------------------------------------------------
def _agg2_kernel(a_ref, hw_ref, dinv_ref, b_ref, o_ref, acc_ref, *, tk):
    k = pl.program_id(1)

    @pl.when(k == 0)
    def _():
        acc_ref[...] = jnp.zeros_like(acc_ref)

    off = pl.multiple_of(k * tk, tk)
    acc_ref[...] += jnp.dot(
        a_ref[...], hw_ref[pl.ds(off, tk), :], preferred_element_type=jnp.float32
    )

    @pl.when(k == pl.num_programs(1) - 1)
    def _():
        o_ref[...] = (dinv_ref[...] * acc_ref[...] + b_ref[...]).astype(o_ref.dtype)


def aggregate_bias(a_bin, hw, dinv, b2, *, tm=TM, tk=TK):
    n_pad = a_bin.shape[0]
    c = hw.shape[1]
    assert n_pad % tm == 0 and n_pad % tk == 0
    kernel = functools.partial(_agg2_kernel, tk=tk)
    return pl.pallas_call(
        kernel,
        out_shape=jax.ShapeDtypeStruct((n_pad, c), jnp.bfloat16),   # bf16 writeback
        grid_spec=pltpu.PrefetchScalarGridSpec(
            num_scalar_prefetch=0,
            grid=(n_pad // tm, n_pad // tk),           # reduction axis last
            in_specs=[
                pl.BlockSpec((tm, tk), lambda i, k: (i, k)),     # A_bin tile
                pl.BlockSpec((n_pad, c), lambda i, k: (0, 0)),   # HW2 resident
                pl.BlockSpec((tm, 1), lambda i, k: (i, 0)),      # dinv rows
                pl.BlockSpec((1, c), lambda i, k: (0, 0)),       # b2 resident
            ],
            out_specs=pl.BlockSpec((tm, c), lambda i, k: (i, 0)),
            scratch_shapes=[pltpu.VMEM((tm, c), jnp.float32)],
        ),
        compiler_params=pltpu.CompilerParams(
            dimension_semantics=("parallel", "arbitrary")
        ),
    )(a_bin, hw, dinv, b2)


# ---------------------------------------------------------------------------
# Glue (plain JAX): graph preprocessing (hoisted, graph-static), params, forward
# ---------------------------------------------------------------------------
def build_binary_adjacency(edge_index, num_nodes):
    """Binary (A + I): messages flow src -> dst, self-loops set to exactly 1."""
    src = edge_index[0]
    dst = edge_index[1]
    a = jnp.zeros((num_nodes, num_nodes), jnp.float32)
    a = a.at[dst, src].set(1.0)                 # duplicates collapse to 1
    idx = jnp.arange(num_nodes)
    a = a.at[idx, idx].set(1.0)                 # self-loops, no double counting
    return a


def precompute_graph(edge_index, num_nodes, *, tm=TM, tk=TK):
    """Graph-static: binary (A+I) padded/bf16 (exact) and D^-1/2 column vector."""
    a = build_binary_adjacency(edge_index, num_nodes)
    deg = a.sum(axis=1)
    dinv = jnp.where(deg > 0, jax.lax.rsqrt(deg), 0.0)
    n_pad = _round_up(num_nodes, math.lcm(tm, tk))
    a_p = _pad2(a, n_pad, n_pad).astype(jnp.bfloat16)       # {0,1} exact in bf16
    dinv_p = jnp.pad(dinv, (0, n_pad - num_nodes)).reshape(n_pad, 1)
    return a_p, dinv_p


def init_params(key, in_channels, hidden_channels, out_channels):
    k1, k2 = jax.random.split(key)
    w1 = jax.random.normal(k1, (in_channels, hidden_channels), jnp.float32)
    w1 = w1 * jnp.sqrt(2.0 / (in_channels + hidden_channels))
    w2 = jax.random.normal(k2, (hidden_channels, out_channels), jnp.float32)
    w2 = w2 * jnp.sqrt(2.0 / (hidden_channels + out_channels))
    b1 = jnp.zeros((hidden_channels,), jnp.float32)
    b2 = jnp.zeros((out_channels,), jnp.float32)
    return dict(w1=w1, b1=b1, w2=w2, b2=b2)


def gcn_forward(params, x, a_bin_p, dinv_p, *, tm=TM, tk=TK):
    """relu(conv1(x)) -> dropout(eval, identity) -> conv2, via Pallas kernels."""
    n, f_in = x.shape
    n_pad = a_bin_p.shape[0]
    hidden = params["w1"].shape[1]
    out_c = params["w2"].shape[1]
    assert n_pad % tm == 0 and n_pad % tk == 0, "pad N to lcm(tm, tk)"

    f_pad = _round_up(f_in, LANES)
    h_pad = _round_up(hidden, LANES)
    c_pad = _round_up(out_c, LANES)

    # Per-forward layout plumbing (small: features + weights only).
    x_p = _pad2(x, n_pad, f_pad).astype(jnp.bfloat16)
    w1_p = _pad2(params["w1"], f_pad, h_pad).astype(jnp.bfloat16)
    w2_p = _pad2(params["w2"], h_pad, c_pad).astype(jnp.bfloat16)
    b1_p = jnp.pad(params["b1"], (0, h_pad - hidden)).reshape(1, h_pad)
    b2_p = jnp.pad(params["b2"], (0, c_pad - out_c)).reshape(1, c_pad)

    # Layer 1 feature transform with right-normalization folded in.
    xw1 = feature_transform(x_p, w1_p, dinv_p, tm=tm)
    # Layer 1 aggregation + bias + ReLU, fused with layer-2 transform (h @ W2),
    # output already right-normalized for layer 2.
    hw2 = aggregate_relu_transform(a_bin_p, xw1, dinv_p, b1_p, w2_p, tm=tm, tk=tk)
    # Layer 2 aggregation + left normalization + bias.
    out = aggregate_bias(a_bin_p, hw2, dinv_p, b2_p, tm=tm, tk=tk)
    return out[:n, :out_c]


# ---------------------------------------------------------------------------
# Demo
# ---------------------------------------------------------------------------
if __name__ == "__main__":
    num_nodes = 256
    num_edges = 1024
    in_channels = 64
    hidden_channels = 32
    out_channels = 7

    key = jax.random.PRNGKey(0)
    k_x, k_e, k_p = jax.random.split(key, 3)

    x = jax.random.normal(k_x, (num_nodes, in_channels), jnp.float32)
    edge_index = jax.random.randint(k_e, (2, num_edges), 0, num_nodes, jnp.int32)
    params = init_params(k_p, in_channels, hidden_channels, out_channels)

    # Graph-static preprocessing hoisted out of the forward (cached once).
    a_bin_p, dinv_p = precompute_graph(edge_index, num_nodes, tm=TM, tk=TK)

    fwd = jax.jit(functools.partial(gcn_forward, tm=TM, tk=TK))
    out = fwd(params, x, a_bin_p, dinv_p)
    out = jax.block_until_ready(out)
    assert out.shape == (num_nodes, out_channels)

    # Pure-JAX f32 reference of the same math (bf16 kernels -> loose tolerance).
    a_bin = build_binary_adjacency(edge_index, num_nodes)
    deg = a_bin.sum(axis=1)
    dinv = jnp.where(deg > 0, 1.0 / jnp.sqrt(deg), 0.0)
    a_hat = dinv[:, None] * a_bin * dinv[None, :]
    ref_h = jnp.maximum(a_hat @ (x @ params["w1"]) + params["b1"], 0.0)
    ref = a_hat @ (ref_h @ params["w2"]) + params["b2"]

    out_f32 = out.astype(jnp.float32)
    err = float(jnp.max(jnp.abs(out_f32 - ref)))
    assert jnp.allclose(out_f32, ref, atol=5e-2, rtol=5e-2), f"max abs err {err}"

    print("KERNEL_OK")
</pallas_src>

<mosaic_0001>
module attributes {stable_mosaic.version = 11 : i64} {
  func.func @_transform_kernel(%arg0: i32, %arg1: memref<256x128xbf16, #tpu.memory_space<vmem>>, %arg2: memref<128x128xbf16, #tpu.memory_space<vmem>>, %arg3: memref<256x1xf32, #tpu.memory_space<vmem>>, %arg4: memref<256x128xbf16, #tpu.memory_space<vmem>>) attributes {dimension_semantics = [#tpu.dimension_semantics<parallel>], iteration_bounds = array<i64: 2>, scalar_prefetch = 0 : i64, scratch_operands = 0 : i64, tpu.core_type = #tpu.core_type<tc>, window_params = [{transform_indices = @transform_0, window_bounds = array<i64: 256, 128>}, {pipeline_mode = #tpu.pipeline_mode<synchronous>, transform_indices = @transform_1, window_bounds = array<i64: 128, 128>}, {transform_indices = @transform_2, window_bounds = array<i64: 256, 1>}, {transform_indices = @transform_3, window_bounds = array<i64: 256, 128>}]} {
    %c0 = arith.constant 0 : index
    %c0_0 = arith.constant 0 : index
    %0 = vector.load %arg1[%c0, %c0_0] : memref<256x128xbf16, #tpu.memory_space<vmem>>, vector<256x128xbf16>
    %c0_1 = arith.constant 0 : index
    %c0_2 = arith.constant 0 : index
    %1 = vector.load %arg2[%c0_1, %c0_2] : memref<128x128xbf16, #tpu.memory_space<vmem>>, vector<128x128xbf16>
    %cst = arith.constant dense<0.000000e+00> : vector<256x128xf32>
    %2 = tpu.matmul %0, %1, %cst {dimension_numbers = #tpu.dot_dimension_numbers<[1], [0], [0], [1], [0, 0, 1, 1], [], []>} : vector<256x128xbf16>, vector<128x128xbf16>, vector<256x128xf32> -> vector<256x128xf32>
    %c0_3 = arith.constant 0 : index
    %c0_4 = arith.constant 0 : index
    %3 = vector.load %arg3[%c0_3, %c0_4] : memref<256x1xf32, #tpu.memory_space<vmem>>, vector<256x1xf32>
    %4 = vector.broadcast %3 : vector<256x1xf32> to vector<256x128xf32>
    %5 = arith.mulf %4, %2 : vector<256x128xf32>
    %6 = arith.truncf %5 : vector<256x128xf32> to vector<256x128xbf16>
    %c0_5 = arith.constant 0 : index
    %c0_6 = arith.constant 0 : index
    %7 = vector.load %arg4[%c0_5, %c0_6] : memref<256x128xbf16, #tpu.memory_space<vmem>>, vector<256x128xbf16>
    tpu.vector_store %arg4[%c0_5, %c0_6], %6 {strides = array<i32>} : memref<256x128xbf16, #tpu.memory_space<vmem>>, vector<256x128xbf16>,
    return
  }
  func.func @transform_0(%arg0: i32) -> (i32, i32) {
    %c0_i32 = arith.constant 0 : i32
    %c0_i32_0 = arith.constant 0 : i32
    return %arg0, %c0_i32 : i32, i32
  }
  func.func @transform_1(%arg0: i32) -> (i32, i32) {
    %c0_i32 = arith.constant 0 : i32
    %c0_i32_0 = arith.constant 0 : i32
    %c0_i32_1 = arith.constant 0 : i32
    return %c0_i32, %c0_i32_0 : i32, i32
  }
  func.func @transform_2(%arg0: i32) -> (i32, i32) {
    %c0_i32 = arith.constant 0 : i32
    %c0_i32_0 = arith.constant 0 : i32
    return %arg0, %c0_i32 : i32, i32
  }
  func.func @transform_3(%arg0: i32) -> (i32, i32) {
    %c0_i32 = arith.constant 0 : i32
    %c0_i32_0 = arith.constant 0 : i32
    return %arg0, %c0_i32 : i32, i32
  }
}

module attributes {stable_mosaic.version = 11 : i64} {
  func.func @_agg1_kernel(%arg0: i32, %arg1: i32, %arg2: memref<256x512xbf16, #tpu.memory_space<vmem>>, %arg3: memref<512x128xbf16, #tpu.memory_space<vmem>>, %arg4: memref<256x1xf32, #tpu.memory_space<vmem>>, %arg5: memref<1x128xf32, #tpu.memory_space<vmem>>, %arg6: memref<128x128xbf16, #tpu.memory_space<vmem>>, %arg7: memref<256x128xbf16, #tpu.memory_space<vmem>>, %arg8: memref<256x128xf32, #tpu.memory_space<vmem>>) attributes {dimension_semantics = [#tpu.dimension_semantics<parallel>, #tpu.dimension_semantics<arbitrary>], iteration_bounds = array<i64: 2, 1>, scalar_prefetch = 0 : i64, scratch_operands = 1 : i64, tpu.core_type = #tpu.core_type<tc>, window_params = [{transform_indices = @transform_0, window_bounds = array<i64: 256, 512>}, {pipeline_mode = #tpu.pipeline_mode<synchronous>, transform_indices = @transform_1, window_bounds = array<i64: 512, 128>}, {transform_indices = @transform_2, window_bounds = array<i64: 256, 1>}, {pipeline_mode = #tpu.pipeline_mode<synchronous>, transform_indices = @transform_3, window_bounds = array<i64: 1, 128>}, {pipeline_mode = #tpu.pipeline_mode<synchronous>, transform_indices = @transform_4, window_bounds = array<i64: 128, 128>}, {transform_indices = @transform_5, window_bounds = array<i64: 256, 128>}]} {
    %c0_i32 = arith.constant 0 : i32
    %0 = arith.cmpi eq, %arg1, %c0_i32 : i32
    %1 = arith.extui %0 : i1 to i32
    %c0_i32_0 = arith.constant 0 : i32
    %2 = arith.cmpi ne, %1, %c0_i32_0 : i32
    scf.if %2 {
      %cst_9 = arith.constant 0.000000e+00 : f32
      %15 = vector.broadcast %cst_9 : f32 to vector<256x128xf32>
      %c0_10 = arith.constant 0 : index
      %c0_11 = arith.constant 0 : index
      %16 = vector.load %arg8[%c0_10, %c0_11] : memref<256x128xf32, #tpu.memory_space<vmem>>, vector<256x128xf32>
      tpu.vector_store %arg8[%c0_10, %c0_11], %15 {strides = array<i32>} : memref<256x128xf32, #tpu.memory_space<vmem>>, vector<256x128xf32>,
    } else {
    }
    %c512_i32 = arith.constant 512 : i32
    %3 = arith.muli %arg1, %c512_i32 : i32
    %4 = tpu.assume_multiple %3, 512 : i32
    %c0 = arith.constant 0 : index
    %c0_1 = arith.constant 0 : index
    %5 = vector.load %arg8[%c0, %c0_1] : memref<256x128xf32, #tpu.memory_space<vmem>>, vector<256x128xf32>
    %c0_2 = arith.constant 0 : index
    %c0_3 = arith.constant 0 : index
    %6 = vector.load %arg2[%c0_2, %c0_3] : memref<256x512xbf16, #tpu.memory_space<vmem>>, vector<256x512xbf16>
    %7 = arith.index_cast %4 : i32 to index
    %c0_4 = arith.constant 0 : index
    %8 = vector.load %arg3[%7, %c0_4] : memref<512x128xbf16, #tpu.memory_space<vmem>>, vector<512x128xbf16>
    %cst = arith.constant dense<0.000000e+00> : vector<256x128xf32>
    %9 = tpu.matmul %6, %8, %cst {dimension_numbers = #tpu.dot_dimension_numbers<[1], [0], [0], [1], [0, 0, 1, 1], [], []>} : vector<256x512xbf16>, vector<512x128xbf16>, vector<256x128xf32> -> vector<256x128xf32>
    %10 = arith.addf %5, %9 : vector<256x128xf32>
    %c0_5 = arith.constant 0 : index
    %c0_6 = arith.constant 0 : index
    %11 = vector.load %arg8[%c0_5, %c0_6] : memref<256x128xf32, #tpu.memory_space<vmem>>, vector<256x128xf32>
    tpu.vector_store %arg8[%c0_5, %c0_6], %10 {strides = array<i32>} : memref<256x128xf32, #tpu.memory_space<vmem>>, vector<256x128xf32>,
    %c0_i32_7 = arith.constant 0 : i32
    %12 = arith.cmpi eq, %arg1, %c0_i32_7 : i32
    %13 = arith.extui %12 : i1 to i32
    %c0_i32_8 = arith.constant 0 : i32
    %14 = arith.cmpi ne, %13, %c0_i32_8 : i32
    scf.if %14 {
      %c0_9 = arith.constant 0 : index
      %c0_10 = arith.constant 0 : index
      %15 = vector.load %arg4[%c0_9, %c0_10] : memref<256x1xf32, #tpu.memory_space<vmem>>, vector<256x1xf32>
      %c0_11 = arith.constant 0 : index
      %c0_12 = arith.constant 0 : index
      %16 = vector.load %arg8[%c0_11, %c0_12] : memref<256x128xf32, #tpu.memory_space<vmem>>, vector<256x128xf32>
      %17 = vector.broadcast %15 : vector<256x1xf32> to vector<256x128xf32>
      %18 = arith.mulf %17, %16 : vector<256x128xf32>
      %c0_13 = arith.constant 0 : index
      %c0_14 = arith.constant 0 : index
      %19 = vector.load %arg5[%c0_13, %c0_14] : memref<1x128xf32, #tpu.memory_space<vmem>>, vector<1x128xf32>
      %20 = vector.broadcast %19 : vector<1x128xf32> to vector<256x128xf32>
      %21 = arith.addf %18, %20 : vector<256x128xf32>
      %cst_15 = arith.constant 0.000000e+00 : f32
      %22 = vector.broadcast %cst_15 : f32 to vector<256x128xf32>
      %23 = arith.maximumf %21, %22 : vector<256x128xf32>
      %24 = arith.truncf %23 : vector<256x128xf32> to vector<256x128xbf16>
      %c0_16 = arith.constant 0 : index
      %c0_17 = arith.constant 0 : index
      %25 = vector.load %arg6[%c0_16, %c0_17] : memref<128x128xbf16, #tpu.memory_space<vmem>>, vector<128x128xbf16>
      %cst_18 = arith.constant dense<0.000000e+00> : vector<256x128xf32>
      %26 = tpu.matmul %24, %25, %cst_18 {dimension_numbers = #tpu.dot_dimension_numbers<[1], [0], [0], [1], [0, 0, 1, 1], [], []>} : vector<256x128xbf16>, vector<128x128xbf16>, vector<256x128xf32> -> vector<256x128xf32>
      %c0_19 = arith.constant 0 : index
      %c0_20 = arith.constant 0 : index
      %27 = vector.load %arg4[%c0_19, %c0_20] : memref<256x1xf32, #tpu.memory_space<vmem>>, vector<256x1xf32>
      %28 = vector.broadcast %27 : vector<256x1xf32> to vector<256x128xf32>
      %29 = arith.mulf %28, %26 : vector<256x128xf32>
      %30 = arith.truncf %29 : vector<256x128xf32> to vector<256x128xbf16>
      %c0_21 = arith.constant 0 : index
      %c0_22 = arith.constant 0 : index
      %31 = vector.load %arg7[%c0_21, %c0_22] : memref<256x128xbf16, #tpu.memory_space<vmem>>, vector<256x128xbf16>
      tpu.vector_store %arg7[%c0_21, %c0_22], %30 {strides = array<i32>} : memref<256x128xbf16, #tpu.memory_space<vmem>>, vector<256x128xbf16>,
    } else {
    }
    return
  }
  func.func @transform_0(%arg0: i32, %arg1: i32) -> (i32, i32) {
    %c0_i32 = arith.constant 0 : i32
    return %arg0, %arg1 : i32, i32
  }
  func.func @transform_1(%arg0: i32, %arg1: i32) -> (i32, i32) {
    %c0_i32 = arith.constant 0 : i32
    %c0_i32_0 = arith.constant 0 : i32
    %c0_i32_1 = arith.constant 0 : i32
    return %c0_i32, %c0_i32_0 : i32, i32
  }
  func.func @transform_2(%arg0: i32, %arg1: i32) -> (i32, i32) {
    %c0_i32 = arith.constant 0 : i32
    %c0_i32_0 = arith.constant 0 : i32
    return %arg0, %c0_i32 : i32, i32
  }
  func.func @transform_3(%arg0: i32, %arg1: i32) -> (i32, i32) {
    %c0_i32 = arith.constant 0 : i32
    %c0_i32_0 = arith.constant 0 : i32
    %c0_i32_1 = arith.constant 0 : i32
    return %c0_i32, %c0_i32_0 : i32, i32
  }
  func.func @transform_4(%arg0: i32, %arg1: i32) -> (i32, i32) {
    %c0_i32 = arith.constant 0 : i32
    %c0_i32_0 = arith.constant 0 : i32
    %c0_i32_1 = arith.constant 0 : i32
    return %c0_i32, %c0_i32_0 : i32, i32
  }
  func.func @transform_5(%arg0: i32, %arg1: i32) -> (i32, i32) {
    %c0_i32 = arith.constant 0 : i32
    %c0_i32_0 = arith.constant 0 : i32
    return %arg0, %c0_i32 : i32, i32
  }
}

module attributes {stable_mosaic.version = 11 : i64} {
  func.func @_agg2_kernel(%arg0: i32, %arg1: i32, %arg2: memref<256x512xbf16, #tpu.memory_space<vmem>>, %arg3: memref<512x128xbf16, #tpu.memory_space<vmem>>, %arg4: memref<256x1xf32, #tpu.memory_space<vmem>>, %arg5: memref<1x128xf32, #tpu.memory_space<vmem>>, %arg6: memref<256x128xbf16, #tpu.memory_space<vmem>>, %arg7: memref<256x128xf32, #tpu.memory_space<vmem>>) attributes {dimension_semantics = [#tpu.dimension_semantics<parallel>, #tpu.dimension_semantics<arbitrary>], iteration_bounds = array<i64: 2, 1>, scalar_prefetch = 0 : i64, scratch_operands = 1 : i64, tpu.core_type = #tpu.core_type<tc>, window_params = [{transform_indices = @transform_0, window_bounds = array<i64: 256, 512>}, {pipeline_mode = #tpu.pipeline_mode<synchronous>, transform_indices = @transform_1, window_bounds = array<i64: 512, 128>}, {transform_indices = @transform_2, window_bounds = array<i64: 256, 1>}, {pipeline_mode = #tpu.pipeline_mode<synchronous>, transform_indices = @transform_3, window_bounds = array<i64: 1, 128>}, {transform_indices = @transform_4, window_bounds = array<i64: 256, 128>}]} {
    %c0_i32 = arith.constant 0 : i32
    %0 = arith.cmpi eq, %arg1, %c0_i32 : i32
    %1 = arith.extui %0 : i1 to i32
    %c0_i32_0 = arith.constant 0 : i32
    %2 = arith.cmpi ne, %1, %c0_i32_0 : i32
    scf.if %2 {
      %cst_9 = arith.constant 0.000000e+00 : f32
      %15 = vector.broadcast %cst_9 : f32 to vector<256x128xf32>
      %c0_10 = arith.constant 0 : index
      %c0_11 = arith.constant 0 : index
      %16 = vector.load %arg7[%c0_10, %c0_11] : memref<256x128xf32, #tpu.memory_space<vmem>>, vector<256x128xf32>
      tpu.vector_store %arg7[%c0_10, %c0_11], %15 {strides = array<i32>} : memref<256x128xf32, #tpu.memory_space<vmem>>, vector<256x128xf32>,
    } else {
    }
    %c512_i32 = arith.constant 512 : i32
    %3 = arith.muli %arg1, %c512_i32 : i32
    %4 = tpu.assume_multiple %3, 512 : i32
    %c0 = arith.constant 0 : index
    %c0_1 = arith.constant 0 : index
    %5 = vector.load %arg7[%c0, %c0_1] : memref<256x128xf32, #tpu.memory_space<vmem>>, vector<256x128xf32>
    %c0_2 = arith.constant 0 : index
    %c0_3 = arith.constant 0 : index
    %6 = vector.load %arg2[%c0_2, %c0_3] : memref<256x512xbf16, #tpu.memory_space<vmem>>, vector<256x512xbf16>
    %7 = arith.index_cast %4 : i32 to index
    %c0_4 = arith.constant 0 : index
    %8 = vector.load %arg3[%7, %c0_4] : memref<512x128xbf16, #tpu.memory_space<vmem>>, vector<512x128xbf16>
    %cst = arith.constant dense<0.000000e+00> : vector<256x128xf32>
    %9 = tpu.matmul %6, %8, %cst {dimension_numbers = #tpu.dot_dimension_numbers<[1], [0], [0], [1], [0, 0, 1, 1], [], []>} : vector<256x512xbf16>, vector<512x128xbf16>, vector<256x128xf32> -> vector<256x128xf32>
    %10 = arith.addf %5, %9 : vector<256x128xf32>
    %c0_5 = arith.constant 0 : index
    %c0_6 = arith.constant 0 : index
    %11 = vector.load %arg7[%c0_5, %c0_6] : memref<256x128xf32, #tpu.memory_space<vmem>>, vector<256x128xf32>
    tpu.vector_store %arg7[%c0_5, %c0_6], %10 {strides = array<i32>} : memref<256x128xf32, #tpu.memory_space<vmem>>, vector<256x128xf32>,
    %c0_i32_7 = arith.constant 0 : i32
    %12 = arith.cmpi eq, %arg1, %c0_i32_7 : i32
    %13 = arith.extui %12 : i1 to i32
    %c0_i32_8 = arith.constant 0 : i32
    %14 = arith.cmpi ne, %13, %c0_i32_8 : i32
    scf.if %14 {
      %c0_9 = arith.constant 0 : index
      %c0_10 = arith.constant 0 : index
      %15 = vector.load %arg4[%c0_9, %c0_10] : memref<256x1xf32, #tpu.memory_space<vmem>>, vector<256x1xf32>
      %c0_11 = arith.constant 0 : index
      %c0_12 = arith.constant 0 : index
      %16 = vector.load %arg7[%c0_11, %c0_12] : memref<256x128xf32, #tpu.memory_space<vmem>>, vector<256x128xf32>
      %17 = vector.broadcast %15 : vector<256x1xf32> to vector<256x128xf32>
      %18 = arith.mulf %17, %16 : vector<256x128xf32>
      %c0_13 = arith.constant 0 : index
      %c0_14 = arith.constant 0 : index
      %19 = vector.load %arg5[%c0_13, %c0_14] : memref<1x128xf32, #tpu.memory_space<vmem>>, vector<1x128xf32>
      %20 = vector.broadcast %19 : vector<1x128xf32> to vector<256x128xf32>
      %21 = arith.addf %18, %20 : vector<256x128xf32>
      %22 = arith.truncf %21 : vector<256x128xf32> to vector<256x128xbf16>
      %c0_15 = arith.constant 0 : index
      %c0_16 = arith.constant 0 : index
      %23 = vector.load %arg6[%c0_15, %c0_16] : memref<256x128xbf16, #tpu.memory_space<vmem>>, vector<256x128xbf16>
      tpu.vector_store %arg6[%c0_15, %c0_16], %22 {strides = array<i32>} : memref<256x128xbf16, #tpu.memory_space<vmem>>, vector<256x128xbf16>,
    } else {
    }
    return
  }
  func.func @transform_0(%arg0: i32, %arg1: i32) -> (i32, i32) {
    %c0_i32 = arith.constant 0 : i32
    return %arg0, %arg1 : i32, i32
  }
  func.func @transform_1(%arg0: i32, %arg1: i32) -> (i32, i32) {
    %c0_i32 = arith.constant 0 : i32
    %c0_i32_0 = arith.constant 0 : i32
    %c0_i32_1 = arith.constant 0 : i32
    return %c0_i32, %c0_i32_0 : i32, i32
  }
  func.func @transform_2(%arg0: i32, %arg1: i32) -> (i32, i32) {
    %c0_i32 = arith.constant 0 : i32
    %c0_i32_0 = arith.constant 0 : i32
    return %arg0, %c0_i32 : i32, i32
  }
  func.func @transform_3(%arg0: i32, %arg1: i32) -> (i32, i32) {
    %c0_i32 = arith.constant 0 : i32
    %c0_i32_0 = arith.constant 0 : i32
    %c0_i32_1 = arith.constant 0 : i32
    return %c0_i32, %c0_i32_0 : i32, i32
  }
  func.func @transform_4(%arg0: i32, %arg1: i32) -> (i32, i32) {
    %c0_i32 = arith.constant 0 : i32
    %c0_i32_0 = arith.constant 0 : i32
    return %arg0, %c0_i32 : i32, i32
  }
}

</mosaic_0001>

<llo_original>
// kernel: gcn_forward.3
$region0: #{gcn_forward.3}
  #allocation0 [shape = 'u32[]', space=smem, size = 0x4, offset = 0x4, fixed_abs, tag = 'smem constant byte address 0x4 - core index']
  #allocation1 [shape = 'u32[144,128]{1,0:T(1,128)}', space=vmem, size = 0x12000, scoped, tag = 'internal scratch']
  %s0 = inlined_call_operand.vmem [shape: bf16[512,128], index: 0, kind: input, shape index: {}]
  %s1 = inlined_call_operand.vmem [shape: bf16[128,128], index: 1, kind: input, shape index: {}]
  %s2 = inlined_call_operand.vmem [shape: f32[512,1], index: 2, kind: input, shape index: {}]
  %s3 = inlined_call_operand.vmem [shape: bf16[512,128], index: 3, kind: output, shape index: {}]
  %s4 = sld [smem:[#allocation0]]
  $region45: #{gcn_forward.3} parent=0
    _
  %s6 = ssub.s32 1, %s4
  %s7 = scalar_select 0, %s6, %s4
  loop: start=0, step=1, limit=4
  $region2: #{gcn_forward.3} parent=0 // loop_pre_header
    _
  $region3: #{gcn_forward.3} parent=0 // loop_header
    %s9 = sphi 0, %s13
    %p10 = scmp.ge.s32.totalorder %s9, 4
    %s19 = sphi 0, %s21
    %s22 = sphi 0, %s19
    %s23 = sphi 0, %s22
    %s39 = sphi 0, %s23
    %s43 = sphi 0, %s43
    %s45 = sphi 0, %s43
    %s46 = sphi 0, %s45
    %s60 = sphi 0, %s46
    %s66 = sphi 0, %s68
    %s69 = sphi 0, %s66
    %s70 = sphi 0, %s69
    %s86 = sphi 0, %s70
    %s92 = sphi 0, %s94
    %s95 = sphi 0, %s92
    %s96 = sphi 0, %s95
    %s112 = sphi 0, %s96
  $region4: #{gcn_forward.3} parent=0 // loop_header_branch
    %12 = sbr.rel (%p10) target = $region8
  $region5: #{gcn_forward.3} parent=0 // loop_body
    %s14 = ssub.s32 %s9, 1
    %s15 = ssub.s32 %s9, 2
    %s16 = sadd.s32 %s9, 1
    %s17 = ssub.s32 %s9, %s16
    %p18 = scmp.eq.s32.totalorder %s17, 0
    %s20 = sadd.s32 %s19, 1
    %s21 = scalar_select %p18, %s19, %s20
    %p24 = pneg %p18
    %p25 = scmp.eq.s32.totalorder %s9, 1
    %p26 = por %p24, %p25
    %p27 = scmp.ne.s32.totalorder %s19, %s22
    %p28 = scmp.eq.s32.totalorder %s9, 0
    %p29 = por %p27, %p28
    %p30 = scmp.ne.s32.totalorder %s19, %s22
    %p31 = scmp.eq.s32.totalorder %s14, 1
    %p32 = por %p30, %p31
    %p33 = scmp.ne.s32.totalorder %s22, %s23
    %p34 = scmp.eq.s32.totalorder %s14, 0
    %p35 = por %p33, %p34
    %p36 = scmp.ne.s32.totalorder %s22, %s23
    %p37 = scmp.eq.s32.totalorder %s15, 1
    %p38 = por %p36, %p37
    %p40 = scmp.ne.s32.totalorder %s23, %s39
    %p41 = scmp.eq.s32.totalorder %s15, 0
    %p42 = por %p40, %p41
    %s44 = sadd.s32 %s43, 1
    %p47 = scmp.eq.s32.totalorder %s9, 1
    %p48 = scmp.ne.s32.totalorder %s43, %s45
    %p49 = scmp.eq.s32.totalorder %s9, 0
    %p50 = por %p48, %p49
    %p51 = scmp.ne.s32.totalorder %s43, %s45
    %p52 = scmp.eq.s32.totalorder %s14, 1
    %p53 = por %p51, %p52
    %p54 = scmp.ne.s32.totalorder %s45, %s46
    %p55 = scmp.eq.s32.totalorder %s14, 0
    %p56 = por %p54, %p55
    %p57 = scmp.ne.s32.totalorder %s45, %s46
    %p58 = scmp.eq.s32.totalorder %s15, 1
    %p59 = por %p57, %p58
    %p61 = scmp.ne.s32.totalorder %s46, %s60
    %p62 = scmp.eq.s32.totalorder %s15, 0
    %p63 = por %p61, %p62
    %s64 = ssub.s32 %s9, %s16
    %p65 = scmp.eq.s32.totalorder %s64, 0
    %s67 = sadd.s32 %s66, 1
    %s68 = scalar_select %p65, %s66, %s67
    %p71 = pneg %p65
    %p72 = scmp.eq.s32.totalorder %s9, 1
    %p73 = por %p71, %p72
    %p74 = scmp.ne.s32.totalorder %s66, %s69
    %p75 = scmp.eq.s32.totalorder %s9, 0
    %p76 = por %p74, %p75
    %p77 = scmp.ne.s32.totalorder %s66, %s69
    %p78 = scmp.eq.s32.totalorder %s14, 1
    %p79 = por %p77, %p78
    %p80 = scmp.ne.s32.totalorder %s69, %s70
    %p81 = scmp.eq.s32.totalorder %s14, 0
    %p82 = por %p80, %p81
    %p83 = scmp.ne.s32.totalorder %s69, %s70
    %p84 = scmp.eq.s32.totalorder %s15, 1
    %p85 = por %p83, %p84
    %p87 = scmp.ne.s32.totalorder %s70, %s86
    %p88 = scmp.eq.s32.totalorder %s15, 0
    %p89 = por %p87, %p88
    %s90 = ssub.s32 %s9, %s16
    %p91 = scmp.eq.s32.totalorder %s90, 0
    %s93 = sadd.s32 %s92, 1
    %s94 = scalar_select %p91, %s92, %s93
    %p97 = pneg %p91
    %p98 = scmp.eq.s32.totalorder %s9, 1
    %p99 = por %p97, %p98
    %p100 = scmp.ne.s32.totalorder %s92, %s95
    %p101 = scmp.eq.s32.totalorder %s9, 0
    %p102 = por %p100, %p101
    %p103 = scmp.ne.s32.totalorder %s92, %s95
    %p104 = scmp.eq.s32.totalorder %s14, 1
    %p105 = por %p103, %p104
    %p106 = scmp.ne.s32.totalorder %s95, %s96
    %p107 = scmp.eq.s32.totalorder %s14, 0
    %p108 = por %p106, %p107
    %p109 = scmp.ne.s32.totalorder %s95, %s96
    %p110 = scmp.eq.s32.totalorder %s15, 1
    %p111 = por %p109, %p110
    %p113 = scmp.ne.s32.totalorder %s96, %s112
    %p114 = scmp.eq.s32.totalorder %s15, 0
    %p115 = por %p113, %p114
    %p116 = scmp.le.s32.totalorder 1, %s9
    %p117 = scmp.lt.s32.totalorder %s9, 3
    %p118 = pnand %p116, %p117
    %p119 = pneg %p118
    // Predicated region
    $region9: #{gcn_forward.3} parent=5 // pred_check
      _
    $region10: #{gcn_forward.3} parent=5 // pred_check_branch
      %121 = sbr.rel (%p118) target = $region12
    $region11: #{gcn_forward.3} parent=5 // pred_region
      %s122 = ssub.s32 %s9, 1
      // Predicated region
      $region13: #{gcn_forward.3} parent=11 // pred_check
        %p123 = pneg %p56
      $region14: #{gcn_forward.3} parent=11 // pred_check_branch
        %125 = sbr.rel (%p123) target = $region16
      $region15: #{gcn_forward.3} parent=11 // pred_region
        _
      $region16: #{gcn_forward.3} parent=11 // pred_fallthru
        _
    $region12: #{gcn_forward.3} parent=5 // pred_fallthru
      _
    %p126 = scmp.lt.s32.totalorder %s9, 2
    // Predicated region
    $region17: #{gcn_forward.3} parent=5 // pred_check
      %p127 = pneg %p126
    $region18: #{gcn_forward.3} parent=5 // pred_check_branch
      %129 = sbr.rel (%p127) target = $region20
    $region19: #{gcn_forward.3} parent=5 // pred_region
      // Predicated region
      $region21: #{gcn_forward.3} parent=19 // pred_check
        %p130 = pneg %p29
      $region22: #{gcn_forward.3} parent=19 // pred_check_branch
        %132 = sbr.rel (%p130) target = $region24
      $region23: #{gcn_forward.3} parent=19 // pred_region
        %s133 = smul.u32 32, %s9
        %p134 = scmp.lt.s32.totalorder %s133, 63
        %s135 = scalar_select %p134, %s133, 63
        %s136 = smul.addr %s135, 4
        %s137 = scalar_lea.vmem %s0, %s136
        %s138 = smul.u32 32, %s9
      $region24: #{gcn_forward.3} parent=19 // pred_fallthru
        _
      // Predicated region
      $region25: #{gcn_forward.3} parent=19 // pred_check
        %p139 = pneg %p76
      $region26: #{gcn_forward.3} parent=19 // pred_check_branch
        %141 = sbr.rel (%p139) target = $region28
      $region27: #{gcn_forward.3} parent=19 // pred_region
        %s142 = smul.u32 32, %s9
        %p143 = scmp.lt.s32.totalorder %s142, 63
        %s144 = scalar_select %p143, %s142, 63
        %s145 = smul.addr %s144, 8
        %s146 = scalar_lea.vmem %s2, %s145
        %s147 = smul.u32 32, %s9
      $region28: #{gcn_forward.3} parent=19 // pred_fallthru
        _
    $region20: #{gcn_forward.3} parent=5 // pred_fallthru
      _
    %p148 = scmp.le.s32.totalorder 1, %s9
    %p149 = scmp.lt.s32.totalorder %s9, 3
    %p150 = pnand %p148, %p149
    %p151 = pneg %p150
    // Predicated region
    $region29: #{gcn_forward.3} parent=5 // pred_check
      _
    $region30: #{gcn_forward.3} parent=5 // pred_check_branch
      %153 = sbr.rel (%p150) target = $region32
    $region31: #{gcn_forward.3} parent=5 // pred_region
      %s154 = ssub.s32 %s9, 1
      %s155 = smul.u32 32, %s14
      %p156 = scmp.lt.s32.totalorder %s155, 63
      %s157 = scalar_select %p156, %s155, 63
      %s158 = smul.addr %s157, 4
      %s159 = scalar_lea.vmem %s0, %s158
      %p160 = pneg %p35
      %p161 = pneg %p32
      %p162 = pneg %p56
      %p163 = pneg %p53
      %s164 = smul.u32 32, %s14
      %p165 = scmp.lt.s32.totalorder %s164, 63
      %s166 = scalar_select %p165, %s164, 63
      %s167 = smul.addr %s166, 8
      %s168 = scalar_lea.vmem %s2, %s167
      %p169 = pneg %p82
      %p170 = pneg %p79
      %p171 = pneg %p108
      %p172 = pneg %p105
      %s173 = smul.u32 32, %s14
      %p174 = scmp.lt.s32.totalorder %s173, 63
      %s175 = scalar_select %p174, %s173, 63
      %s176 = smul.addr %s175, 4
      %s177 = scalar_lea.vmem %s3, %s176
      %s178 = smul.u32 32, %s14
      %p179 = scmp.lt.s32.totalorder %s178, 63
      %s180 = scalar_select %p179, %s178, 63
      %s181 = smul.addr %s180, 4
      %s182 = scalar_lea.vmem %s0, %s181
      %s183 = smul.u32 32, %s14
      %s184 = smul.u32 32, %s14
      %p185 = scmp.lt.s32.totalorder %s184, 63
      %s186 = scalar_select %p185, %s184, 63
      %s187 = smul.addr %s186, 8
      %s188 = scalar_lea.vmem %s2, %s187
      %s189 = smul.u32 32, %s14
      %s190 = smul.u32 32, %s14
      %p191 = scmp.lt.s32.totalorder %s190, 63
      %s192 = scalar_select %p191, %s190, 63
      %s193 = smul.addr %s192, 4
      %s194 = scalar_lea.vmem %s3, %s193
      %s195 = smul.u32 32, %s14
      %v197 = vld [vmem:[%s182] sm:$0xf]
      %v198 = vld [vmem:[%s182 + $0x4] sm:$0xf]
      %v199 = vld [vmem:[%s182 + $0x8] sm:$0xf]
      %v200 = vld [vmem:[%s182 + $0xc] sm:$0xf]
      %v201 = vld [vmem:[%s182 + $0x10] sm:$0xf]
      %v202 = vld [vmem:[%s182 + $0x14] sm:$0xf]
      %v203 = vld [vmem:[%s182 + $0x18] sm:$0xf]
      %v204 = vld [vmem:[%s182 + $0x1c] sm:$0xf]
      %v205 = vld [vmem:[%s182 + $0x20] sm:$0xf]
      %v206 = vld [vmem:[%s182 + $0x24] sm:$0xf]
      %v207 = vld [vmem:[%s182 + $0x28] sm:$0xf]
      %v208 = vld [vmem:[%s182 + $0x2c] sm:$0xf]
      %v209 = vld [vmem:[%s182 + $0x30] sm:$0xf]
      %v210 = vld [vmem:[%s182 + $0x34] sm:$0xf]
      %v211 = vld [vmem:[%s182 + $0x38] sm:$0xf]
      %v212 = vld [vmem:[%s182 + $0x3c] sm:$0xf]
      %v213 = vld [vmem:[%s182 + $0x40] sm:$0xf]
      %v214 = vld [vmem:[%s182 + $0x44] sm:$0xf]
      %v215 = vld [vmem:[%s182 + $0x48] sm:$0xf]
      %v216 = vld [vmem:[%s182 + $0x4c] sm:$0xf]
      %v217 = vld [vmem:[%s182 + $0x50] sm:$0xf]
      %v218 = vld [vmem:[%s182 + $0x54] sm:$0xf]
      %v219 = vld [vmem:[%s182 + $0x58] sm:$0xf]
      %v220 = vld [vmem:[%s182 + $0x5c] sm:$0xf]
      %v221 = vld [vmem:[%s182 + $0x60] sm:$0xf]
      %v222 = vld [vmem:[%s182 + $0x64] sm:$0xf]
      %v223 = vld [vmem:[%s182 + $0x68] sm:$0xf]
      %v224 = vld [vmem:[%s182 + $0x6c] sm:$0xf]
      %v225 = vld [vmem:[%s182 + $0x70] sm:$0xf]
      %v226 = vld [vmem:[%s182 + $0x74] sm:$0xf]
      %v227 = vld [vmem:[%s182 + $0x78] sm:$0xf]
      %v228 = vld [vmem:[%s182 + $0x7c] sm:$0xf]
      %v229 = vld [vmem:[%s1] sm:$0xf]
      %v230 = vld [vmem:[%s1 + $0x4] sm:$0xf]
      %v231 = vld [vmem:[%s1 + $0x8] sm:$0xf]
      %v232 = vld [vmem:[%s1 + $0xc] sm:$0xf]
      %v233 = vld [vmem:[%s1 + $0x10] sm:$0xf]
      %v234 = vld [vmem:[%s1 + $0x14] sm:$0xf]
      %v235 = vld [vmem:[%s1 + $0x18] sm:$0xf]
      %v236 = vld [vmem:[%s1 + $0x1c] sm:$0xf]
      %v237 = vld [vmem:[%s1 + $0x20] sm:$0xf]
      %v238 = vld [vmem:[%s1 + $0x24] sm:$0xf]
      %v239 = vld [vmem:[%s1 + $0x28] sm:$0xf]
      %v240 = vld [vmem:[%s1 + $0x2c] sm:$0xf]
      %v241 = vld [vmem:[%s1 + $0x30] sm:$0xf]
      %v242 = vld [vmem:[%s1 + $0x34] sm:$0xf]
      %v243 = vld [vmem:[%s1 + $0x38] sm:$0xf]
      %v244 = vld [vmem:[%s1 + $0x3c] sm:$0xf]
      %v277 = vunpack.c.l.b16 %v197
      %v278 = vunpack.c.l.b16 %v198
      %v279 = vunpack.c.l.b16 %v199
      %v280 = vunpack.c.l.b16 %v200
      %v281 = vunpack.c.l.b16 %v201
      %v282 = vunpack.c.l.b16 %v202
      %v283 = vunpack.c.l.b16 %v203
      %v284 = vunpack.c.l.b16 %v204
      %v285 = vunpack.c.l.b16 %v205
      %v286 = vunpack.c.l.b16 %v206
      %v287 = vunpack.c.l.b16 %v207
      %v288 = vunpack.c.l.b16 %v208
      %v289 = vunpack.c.l.b16 %v209
      %v290 = vunpack.c.l.b16 %v210
      %v291 = vunpack.c.l.b16 %v211
      %v292 = vunpack.c.l.b16 %v212
      %v293 = vunpack.c.l.b16 %v213
      %v294 = vunpack.c.l.b16 %v214
      %v295 = vunpack.c.l.b16 %v215
      %v296 = vunpack.c.l.b16 %v216
      %v297 = vunpack.c.l.b16 %v217
      %v298 = vunpack.c.l.b16 %v218
      %v299 = vunpack.c.l.b16 %v219
      %v300 = vunpack.c.l.b16 %v220
      %v301 = vunpack.c.l.b16 %v221
      %v302 = vunpack.c.l.b16 %v222
      %v303 = vunpack.c.l.b16 %v223
      %v304 = vunpack.c.l.b16 %v224
      %v305 = vunpack.c.l.b16 %v225
      %v306 = vunpack.c.l.b16 %v226
      %v307 = vunpack.c.l.b16 %v227
      %v308 = vunpack.c.l.b16 %v228
      %v309 = vpack.c.b16 %v278, %v277
      %v310 = vpack.c.b16 %v280, %v279
      %v311 = vpack.c.b16 %v282, %v281
      %v312 = vpack.c.b16 %v284, %v283
      %v313 = vpack.c.b16 %v286, %v285
      %v314 = vpack.c.b16 %v288, %v287
      %v315 = vpack.c.b16 %v290, %v289
      %v316 = vpack.c.b16 %v292, %v291
      %v317 = vpack.c.b16 %v294, %v293
      %v318 = vpack.c.b16 %v296, %v295
      %v319 = vpack.c.b16 %v298, %v297
      %v320 = vpack.c.b16 %v300, %v299
      %v321 = vpack.c.b16 %v302, %v301
      %v322 = vpack.c.b16 %v304, %v303
      %v323 = vpack.c.b16 %v306, %v305
      %v324 = vpack.c.b16 %v308, %v307
      %v357 = vunpack.c.l.b16 %v229
      %v358 = vunpack.c.l.b16 %v230
      %v359 = vunpack.c.l.b16 %v231
      %v360 = vunpack.c.l.b16 %v232
      %v361 = vunpack.c.l.b16 %v233
      %v362 = vunpack.c.l.b16 %v234
      %v363 = vunpack.c.l.b16 %v235
      %v364 = vunpack.c.l.b16 %v236
      %v365 = vunpack.c.l.b16 %v237
      %v366 = vunpack.c.l.b16 %v238
      %v367 = vunpack.c.l.b16 %v239
      %v368 = vunpack.c.l.b16 %v240
      %v369 = vunpack.c.l.b16 %v241
      %v370 = vunpack.c.l.b16 %v242
      %v371 = vunpack.c.l.b16 %v243
      %v372 = vunpack.c.l.b16 %v244
      %v373 = vpack.c.b16 %v358, %v357
      %v374 = vpack.c.b16 %v360, %v359
      %v375 = vpack.c.b16 %v362, %v361
      %v376 = vpack.c.b16 %v364, %v363
      %v377 = vpack.c.b16 %v366, %v365
      %v378 = vpack.c.b16 %v368, %v367
      %v379 = vpack.c.b16 %v370, %v369
      %v380 = vpack.c.b16 %v372, %v371
      %389 = vmatprep.subr.bf16.mxu0 0
      %390 = vmatpush1.bf16.msra.mxu0 %v373
      %391 = vmatprep.subr.bf16.mxu0 0
      %392 = vmatpush1.bf16.msra.mxu0 %v374
      %393 = vmatprep.subr.bf16.mxu0 0
      %394 = vmatpush1.bf16.msra.mxu0 %v375
      %395 = vmatprep.subr.bf16.mxu0 0
      %396 = vmatpush1.bf16.msra.mxu0 %v376
      %397 = vmatprep.subr.bf16.mxu0 0
      %398 = vmatpush1.bf16.msra.mxu0 %v377
      %399 = vmatprep.subr.bf16.mxu0 0
      %400 = vmatpush1.bf16.msra.mxu0 %v378
      %401 = vmatprep.subr.bf16.mxu0 0
      %402 = vmatpush1.bf16.msra.mxu0 %v379
      %403 = vmatprep.subr.bf16.mxu0 0
      %404 = vmatpush1.bf16.msra.mxu0 %v380
      %405 = vmatprep.subr.bf16.mxu0 0
      %406 = vmatpush1.bf16.msra.mxu0 0
      %407 = vmatprep.subr.bf16.mxu0 0
      %408 = vmatpush1.bf16.msra.mxu0 0
      %409 = vmatprep.subr.bf16.mxu0 0
      %410 = vmatpush1.bf16.msra.mxu0 0
      %411 = vmatprep.subr.bf16.mxu0 0
      %412 = vmatpush1.bf16.msra.mxu0 0
      %413 = vmatprep.subr.bf16.mxu0 0
      %414 = vmatpush1.bf16.msra.mxu0 0
      %415 = vmatprep.subr.bf16.mxu0 0
      %416 = vmatpush1.bf16.msra.mxu0 0
      %417 = vmatprep.subr.bf16.mxu0 0
      %418 = vmatpush1.bf16.msra.mxu0 0
      %419 = vmatprep.subr.bf16.mxu0 0
      %420 = vmatpush1.bf16.msra.mxu0 0
      %421 = vmatprep.mubr.bf16.mxu0 0
      %422 = vmatmul.mubr.bf16.gmra.mrb[0].mxu0 %v309
      %v423 = vpop.f32.mrb[0].mxu0
      %v424 = vadd.f32 0.0, %v423
      %v425 = vpop.f32.mrb[0].mxu0
      %v426 = vpop.f32.mrb[0].mxu0
      %v427 = vadd.f32 0.0, %v426
      %v428 = vpop.f32.mrb[0].mxu0
      %429 = vmatprep.mubr.bf16.mxu0 0
      %430 = vmatmul.mubr.bf16.gmra.mrb[0].mxu0 %v310
      %v431 = vpop.f32.mrb[0].mxu0
      %v432 = vadd.f32 0.0, %v431
      %v433 = vpop.f32.mrb[0].mxu0
      %v434 = vpop.f32.mrb[0].mxu0
      %v435 = vadd.f32 0.0, %v434
      %v436 = vpop.f32.mrb[0].mxu0
      %437 = vmatprep.mubr.bf16.mxu0 0
      %438 = vmatmul.mubr.bf16.gmra.mrb[0].mxu0 %v311
      %v439 = vpop.f32.mrb[0].mxu0
      %v440 = vadd.f32 0.0, %v439
      %v441 = vpop.f32.mrb[0].mxu0
      %v442 = vpop.f32.mrb[0].mxu0
      %v443 = vadd.f32 0.0, %v442
      %v444 = vpop.f32.mrb[0].mxu0
      %445 = vmatprep.mubr.bf16.mxu0 0
      %446 = vmatmul.mubr.bf16.gmra.mrb[0].mxu0 %v312
      %v447 = vpop.f32.mrb[0].mxu0
      %v448 = vadd.f32 0.0, %v447
      %v449 = vpop.f32.mrb[0].mxu0
      %v450 = vpop.f32.mrb[0].mxu0
      %v451 = vadd.f32 0.0, %v450
      %v452 = vpop.f32.mrb[0].mxu0
      %453 = vmatprep.mubr.bf16.mxu0 0
      %454 = vmatmul.mubr.bf16.gmra.mrb[0].mxu0 %v313
      %v455 = vpop.f32.mrb[0].mxu0
      %v456 = vadd.f32 0.0, %v455
      %v457 = vpop.f32.mrb[0].mxu0
      %v458 = vpop.f32.mrb[0].mxu0
      %v459 = vadd.f32 0.0, %v458
      %v460 = vpop.f32.mrb[0].mxu0
      %461 = vmatprep.mubr.bf16.mxu0 0
      %462 = vmatmul.mubr.bf16.gmra.mrb[0].mxu0 %v314
      %v463 = vpop.f32.mrb[0].mxu0
      %v464 = vadd.f32 0.0, %v463
      %v465 = vpop.f32.mrb[0].mxu0
      %v466 = vpop.f32.mrb[0].mxu0
      %v467 = vadd.f32 0.0, %v466
      %v468 = vpop.f32.mrb[0].mxu0
      %469 = vmatprep.mubr.bf16.mxu0 0
      %470 = vmatmul.mubr.bf16.gmra.mrb[0].mxu0 %v315
      %v471 = vpop.f32.mrb[0].mxu0
      %v472 = vadd.f32 0.0, %v471
      %v473 = vpop.f32.mrb[0].mxu0
      %v474 = vpop.f32.mrb[0].mxu0
      %v475 = vadd.f32 0.0, %v474
      %v476 = vpop.f32.mrb[0].mxu0
      %477 = vmatprep.mubr.bf16.mxu0 0
      %478 = vmatmul.mubr.bf16.gmra.mrb[0].mxu0 %v316
      %v479 = vpop.f32.mrb[0].mxu0
      %v480 = vadd.f32 0.0, %v479
      %v481 = vpop.f32.mrb[0].mxu0
      %v482 = vpop.f32.mrb[0].mxu0
      %v483 = vadd.f32 0.0, %v482
      %v484 = vpop.f32.mrb[0].mxu0
      %485 = vmatprep.mubr.bf16.mxu0 0
      %486 = vmatmul.mubr.bf16.gmra.mrb[0].mxu0 %v317
      %v487 = vpop.f32.mrb[0].mxu0
      %v488 = vadd.f32 0.0, %v487
      %v489 = vpop.f32.mrb[0].mxu0
      %v490 = vpop.f32.mrb[0].mxu0
      %v491 = vadd.f32 0.0, %v490
      %v492 = vpop.f32.mrb[0].mxu0
      %493 = vmatprep.mubr.bf16.mxu0 0
      %494 = vmatmul.mubr.bf16.gmra.mrb[0].mxu0 %v318
      %v495 = vpop.f32.mrb[0].mxu0
      %v496 = vadd.f32 0.0, %v495
      %v497 = vpop.f32.mrb[0].mxu0
      %v498 = vpop.f32.mrb[0].mxu0
      %v499 = vadd.f32 0.0, %v498
      %v500 = vpop.f32.mrb[0].mxu0
      %501 = vmatprep.mubr.bf16.mxu0 0
      %502 = vmatmul.mubr.bf16.gmra.mrb[0].mxu0 %v319
      %v503 = vpop.f32.mrb[0].mxu0
      %v504 = vadd.f32 0.0, %v503
      %v505 = vpop.f32.mrb[0].mxu0
      %v506 = vpop.f32.mrb[0].mxu0
      %v507 = vadd.f32 0.0, %v506
      %v508 = vpop.f32.mrb[0].mxu0
      %509 = vmatprep.mubr.bf16.mxu0 0
      %510 = vmatmul.mubr.bf16.gmra.mrb[0].mxu0 %v320
      %v511 = vpop.f32.mrb[0].mxu0
      %v512 = vadd.f32 0.0, %v511
      %v513 = vpop.f32.mrb[0].mxu0
      %v514 = vpop.f32.mrb[0].mxu0
      %v515 = vadd.f32 0.0, %v514
      %v516 = vpop.f32.mrb[0].mxu0
      %517 = vmatprep.mubr.bf16.mxu0 0
      %518 = vmatmul.mubr.bf16.gmra.mrb[0].mxu0 %v321
      %v519 = vpop.f32.mrb[0].mxu0
      %v520 = vadd.f32 0.0, %v519
      %v521 = vpop.f32.mrb[0].mxu0
      %v522 = vpop.f32.mrb[0].mxu0
      %v523 = vadd.f32 0.0, %v522
      %v524 = vpop.f32.mrb[0].mxu0
      %525 = vmatprep.mubr.bf16.mxu0 0
      %526 = vmatmul.mubr.bf16.gmra.mrb[0].mxu0 %v322
      %v527 = vpop.f32.mrb[0].mxu0
      %v528 = vadd.f32 0.0, %v527
      %v529 = vpop.f32.mrb[0].mxu0
      %v530 = vpop.f32.mrb[0].mxu0
      %v531 = vadd.f32 0.0, %v530
      %v532 = vpop.f32.mrb[0].mxu0
      %533 = vmatprep.mubr.bf16.mxu0 0
      %534 = vmatmul.mubr.bf16.gmra.mrb[0].mxu0 %v323
      %v535 = vpop.f32.mrb[0].mxu0
      %v536 = vadd.f32 0.0, %v535
      %v537 = vpop.f32.mrb[0].mxu0
      %v538 = vpop.f32.mrb[0].mxu0
      %v539 = vadd.f32 0.0, %v538
      %v540 = vpop.f32.mrb[0].mxu0
      %541 = vmatprep.mubr.bf16.mxu0 0
      %542 = vmatmul.mubr.bf16.gmra.mrb[0].mxu0 %v324
      %v543 = vpop.f32.mrb[0].mxu0
      %v544 = vadd.f32 0.0, %v543
      %v545 = vpop.f32.mrb[0].mxu0
      %v546 = vpop.f32.mrb[0].mxu0
      %v547 = vadd.f32 0.0, %v546
      %v548 = vpop.f32.mrb[0].mxu0
      %549 = vdwg.mxu0
      %v550 = vld [vmem:[%s188] sm:$0xff]
      %v551 = vld [vmem:[%s188 + $0x8] sm:$0xff]
      %v552 = vld [vmem:[%s188 + $0x10] sm:$0xff]
      %v553 = vld [vmem:[%s188 + $0x18] sm:$0xff]
      %v554 = vld [vmem:[%s188 + $0x20] sm:$0xff]
      %v555 = vld [vmem:[%s188 + $0x28] sm:$0xff]
      %v556 = vld [vmem:[%s188 + $0x30] sm:$0xff]
      %v557 = vld [vmem:[%s188 + $0x38] sm:$0xff]
      %v558 = vld [vmem:[%s188 + $0x40] sm:$0xff]
      %v559 = vld [vmem:[%s188 + $0x48] sm:$0xff]
      %v560 = vld [vmem:[%s188 + $0x50] sm:$0xff]
      %v561 = vld [vmem:[%s188 + $0x58] sm:$0xff]
      %v562 = vld [vmem:[%s188 + $0x60] sm:$0xff]
      %v563 = vld [vmem:[%s188 + $0x68] sm:$0xff]
      %v564 = vld [vmem:[%s188 + $0x70] sm:$0xff]
      %v565 = vld [vmem:[%s188 + $0x78] sm:$0xff]
      %v566 = vld [vmem:[%s188 + $0x80] sm:$0xff]
      %v567 = vld [vmem:[%s188 + $0x88] sm:$0xff]
      %v568 = vld [vmem:[%s188 + $0x90] sm:$0xff]
      %v569 = vld [vmem:[%s188 + $0x98] sm:$0xff]
      %v570 = vld [vmem:[%s188 + $0xa0] sm:$0xff]
      %v571 = vld [vmem:[%s188 + $0xa8] sm:$0xff]
      %v572 = vld [vmem:[%s188 + $0xb0] sm:$0xff]
      %v573 = vld [vmem:[%s188 + $0xb8] sm:$0xff]
      %v574 = vld [vmem:[%s188 + $0xc0] sm:$0xff]
      %v575 = vld [vmem:[%s188 + $0xc8] sm:$0xff]
      %v576 = vld [vmem:[%s188 + $0xd0] sm:$0xff]
      %v577 = vld [vmem:[%s188 + $0xd8] sm:$0xff]
      %v578 = vld [vmem:[%s188 + $0xe0] sm:$0xff]
      %v579 = vld [vmem:[%s188 + $0xe8] sm:$0xff]
      %v580 = vld [vmem:[%s188 + $0xf0] sm:$0xff]
      %v581 = vld [vmem:[%s188 + $0xf8] sm:$0xff]
      %583 = vset.pattern.permute.xlu0 0
      %584 = vperm.xlu0 %583, %v550
      %v585 = vpop.permute.xlu0 %584
      %588 = vset.pattern.permute.xlu0 0
      %589 = vperm.xlu0 %588, %v551
      %v590 = vpop.permute.xlu0 %589
      %593 = vset.pattern.permute.xlu0 0
      %594 = vperm.xlu0 %593, %v552
      %v595 = vpop.permute.xlu0 %594
      %598 = vset.pattern.permute.xlu0 0
      %599 = vperm.xlu0 %598, %v553
      %v600 = vpop.permute.xlu0 %599
      %603 = vset.pattern.permute.xlu0 0
      %604 = vperm.xlu0 %603, %v554
      %v605 = vpop.permute.xlu0 %604
      %608 = vset.pattern.permute.xlu0 0
      %609 = vperm.xlu0 %608, %v555
      %v610 = vpop.permute.xlu0 %609
      %613 = vset.pattern.permute.xlu0 0
      %614 = vperm.xlu0 %613, %v556
      %v615 = vpop.permute.xlu0 %614
      %618 = vset.pattern.permute.xlu0 0
      %619 = vperm.xlu0 %618, %v557
      %v620 = vpop.permute.xlu0 %619
      %623 = vset.pattern.permute.xlu0 0
      %624 = vperm.xlu0 %623, %v558
      %v625 = vpop.permute.xlu0 %624
      %628 = vset.pattern.permute.xlu0 0
      %629 = vperm.xlu0 %628, %v559
      %v630 = vpop.permute.xlu0 %629
      %633 = vset.pattern.permute.xlu0 0
      %634 = vperm.xlu0 %633, %v560
      %v635 = vpop.permute.xlu0 %634
      %638 = vset.pattern.permute.xlu0 0
      %639 = vperm.xlu0 %638, %v561
      %v640 = vpop.permute.xlu0 %639
      %643 = vset.pattern.permute.xlu0 0
      %644 = vperm.xlu0 %643, %v562
      %v645 = vpop.permute.xlu0 %644
      %648 = vset.pattern.permute.xlu0 0
      %649 = vperm.xlu0 %648, %v563
      %v650 = vpop.permute.xlu0 %649
      %653 = vset.pattern.permute.xlu0 0
      %654 = vperm.xlu0 %653, %v564
      %v655 = vpop.permute.xlu0 %654
      %658 = vset.pattern.permute.xlu0 0
      %659 = vperm.xlu0 %658, %v565
      %v660 = vpop.permute.xlu0 %659
      %663 = vset.pattern.permute.xlu0 0
      %664 = vperm.xlu0 %663, %v566
      %v665 = vpop.permute.xlu0 %664
      %668 = vset.pattern.permute.xlu0 0
      %669 = vperm.xlu0 %668, %v567
      %v670 = vpop.permute.xlu0 %669
      %673 = vset.pattern.permute.xlu0 0
      %674 = vperm.xlu0 %673, %v568
      %v675 = vpop.permute.xlu0 %674
      %678 = vset.pattern.permute.xlu0 0
      %679 = vperm.xlu0 %678, %v569
      %v680 = vpop.permute.xlu0 %679
      %683 = vset.pattern.permute.xlu0 0
      %684 = vperm.xlu0 %683, %v570
      %v685 = vpop.permute.xlu0 %684
      %688 = vset.pattern.permute.xlu0 0
      %689 = vperm.xlu0 %688, %v571
      %v690 = vpop.permute.xlu0 %689
      %693 = vset.pattern.permute.xlu0 0
      %694 = vperm.xlu0 %693, %v572
      %v695 = vpop.permute.xlu0 %694
      %698 = vset.pattern.permute.xlu0 0
      %699 = vperm.xlu0 %698, %v573
      %v700 = vpop.permute.xlu0 %699
      %703 = vset.pattern.permute.xlu0 0
      %704 = vperm.xlu0 %703, %v574
      %v705 = vpop.permute.xlu0 %704
      %708 = vset.pattern.permute.xlu0 0
      %709 = vperm.xlu0 %708, %v575
      %v710 = vpop.permute.xlu0 %709
      %713 = vset.pattern.permute.xlu0 0
      %714 = vperm.xlu0 %713, %v576
      %v715 = vpop.permute.xlu0 %714
      %718 = vset.pattern.permute.xlu0 0
      %719 = vperm.xlu0 %718, %v577
      %v720 = vpop.permute.xlu0 %719
      %723 = vset.pattern.permute.xlu0 0
      %724 = vperm.xlu0 %723, %v578
      %v725 = vpop.permute.xlu0 %724
      %728 = vset.pattern.permute.xlu0 0
      %729 = vperm.xlu0 %728, %v579
      %v730 = vpop.permute.xlu0 %729
      %733 = vset.pattern.permute.xlu0 0
      %734 = vperm.xlu0 %733, %v580
      %v735 = vpop.permute.xlu0 %734
      %738 = vset.pattern.permute.xlu0 0
      %739 = vperm.xlu0 %738, %v581
      %v740 = vpop.permute.xlu0 %739
      %v742 = vmul.f32 %v585, %v424
      %v743 = vmul.f32 %v590, %v427
      %v744 = vmul.f32 %v595, %v432
      %v745 = vmul.f32 %v600, %v435
      %v746 = vmul.f32 %v605, %v440
      %v747 = vmul.f32 %v610, %v443
      %v748 = vmul.f32 %v615, %v448
      %v749 = vmul.f32 %v620, %v451
      %v750 = vmul.f32 %v625, %v456
      %v751 = vmul.f32 %v630, %v459
      %v752 = vmul.f32 %v635, %v464
      %v753 = vmul.f32 %v640, %v467
      %v754 = vmul.f32 %v645, %v472
      %v755 = vmul.f32 %v650, %v475
      %v756 = vmul.f32 %v655, %v480
      %v757 = vmul.f32 %v660, %v483
      %v758 = vmul.f32 %v665, %v488
      %v759 = vmul.f32 %v670, %v491
      %v760 = vmul.f32 %v675, %v496
      %v761 = vmul.f32 %v680, %v499
      %v762 = vmul.f32 %v685, %v504
      %v763 = vmul.f32 %v690, %v507
      %v764 = vmul.f32 %v695, %v512
      %v765 = vmul.f32 %v700, %v515
      %v766 = vmul.f32 %v705, %v520
      %v767 = vmul.f32 %v710, %v523
      %v768 = vmul.f32 %v715, %v528
      %v769 = vmul.f32 %v720, %v531
      %v770 = vmul.f32 %v725, %v536
      %v771 = vmul.f32 %v730, %v539
      %v772 = vmul.f32 %v735, %v544
      %v773 = vmul.f32 %v740, %v547
      %v774 = vpack.c.bf16 %v743, %v742
      %v775 = vpack.c.bf16 %v745, %v744
      %v776 = vpack.c.bf16 %v747, %v746
      %v777 = vpack.c.bf16 %v749, %v748
      %v778 = vpack.c.bf16 %v751, %v750
      %v779 = vpack.c.bf16 %v753, %v752
      %v780 = vpack.c.bf16 %v755, %v754
      %v781 = vpack.c.bf16 %v757, %v756
      %v782 = vpack.c.bf16 %v759, %v758
      %v783 = vpack.c.bf16 %v761, %v760
      %v784 = vpack.c.bf16 %v763, %v762
      %v785 = vpack.c.bf16 %v765, %v764
      %v786 = vpack.c.bf16 %v767, %v766
      %v787 = vpack.c.bf16 %v769, %v768
      %v788 = vpack.c.bf16 %v771, %v770
      %v789 = vpack.c.bf16 %v773, %v772
      %v806 = vunpack.c.l.b16 %v774
      %v807 = vunpack.c.h.b16 %v774
      %v808 = vunpack.c.l.b16 %v775
      %v809 = vunpack.c.h.b16 %v775
      %v810 = vunpack.c.l.b16 %v776
      %v811 = vunpack.c.h.b16 %v776
      %v812 = vunpack.c.l.b16 %v777
      %v813 = vunpack.c.h.b16 %v777
      %v814 = vunpack.c.l.b16 %v778
      %v815 = vunpack.c.h.b16 %v778
      %v816 = vunpack.c.l.b16 %v779
      %v817 = vunpack.c.h.b16 %v779
      %v818 = vunpack.c.l.b16 %v780
      %v819 = vunpack.c.h.b16 %v780
      %v820 = vunpack.c.l.b16 %v781
      %v821 = vunpack.c.h.b16 %v781
      %v822 = vunpack.c.l.b16 %v782
      %v823 = vunpack.c.h.b16 %v782
      %v824 = vunpack.c.l.b16 %v783
      %v825 = vunpack.c.h.b16 %v783
      %v826 = vunpack.c.l.b16 %v784
      %v827 = vunpack.c.h.b16 %v784
      %v828 = vunpack.c.l.b16 %v785
      %v829 = vunpack.c.h.b16 %v785
      %v830 = vunpack.c.l.b16 %v786
      %v831 = vunpack.c.h.b16 %v786
      %v832 = vunpack.c.l.b16 %v787
      %v833 = vunpack.c.h.b16 %v787
      %v834 = vunpack.c.l.b16 %v788
      %v835 = vunpack.c.h.b16 %v788
      %v836 = vunpack.c.l.b16 %v789
      %v837 = vunpack.c.h.b16 %v789
      %v838 = vpack.c.b16 %v806, %v806
      %v839 = vpack.c.b16 %v807, %v807
      %v840 = vpack.c.b16 %v808, %v808
      %v841 = vpack.c.b16 %v809, %v809
      %v842 = vpack.c.b16 %v810, %v810
      %v843 = vpack.c.b16 %v811, %v811
      %v844 = vpack.c.b16 %v812, %v812
      %v845 = vpack.c.b16 %v813, %v813
      %v846 = vpack.c.b16 %v814, %v814
      %v847 = vpack.c.b16 %v815, %v815
      %v848 = vpack.c.b16 %v816, %v816
      %v849 = vpack.c.b16 %v817, %v817
      %v850 = vpack.c.b16 %v818, %v818
      %v851 = vpack.c.b16 %v819, %v819
      %v852 = vpack.c.b16 %v820, %v820
      %v853 = vpack.c.b16 %v821, %v821
      %v854 = vpack.c.b16 %v822, %v822
      %v855 = vpack.c.b16 %v823, %v823
      %v856 = vpack.c.b16 %v824, %v824
      %v857 = vpack.c.b16 %v825, %v825
      %v858 = vpack.c.b16 %v826, %v826
      %v859 = vpack.c.b16 %v827, %v827
      %v860 = vpack.c.b16 %v828, %v828
      %v861 = vpack.c.b16 %v829, %v829
      %v862 = vpack.c.b16 %v830, %v830
      %v863 = vpack.c.b16 %v831, %v831
      %v864 = vpack.c.b16 %v832, %v832
      %v865 = vpack.c.b16 %v833, %v833
      %v866 = vpack.c.b16 %v834, %v834
      %v867 = vpack.c.b16 %v835, %v835
      %v868 = vpack.c.b16 %v836, %v836
      %v869 = vpack.c.b16 %v837, %v837
      %902 = vst [vmem:[%s194] sm:$0xf] %v838
      %903 = vst [vmem:[%s194 + $0x4] sm:$0xf] %v839
      %904 = vst [vmem:[%s194 + $0x8] sm:$0xf] %v840
      %905 = vst [vmem:[%s194 + $0xc] sm:$0xf] %v841
      %906 = vst [vmem:[%s194 + $0x10] sm:$0xf] %v842
      %907 = vst [vmem:[%s194 + $0x14] sm:$0xf] %v843
      %908 = vst [vmem:[%s194 + $0x18] sm:$0xf] %v844
      %909 = vst [vmem:[%s194 + $0x1c] sm:$0xf] %v845
      %910 = vst [vmem:[%s194 + $0x20] sm:$0xf] %v846
      %911 = vst [vmem:[%s194 + $0x24] sm:$0xf] %v847
      %912 = vst [vmem:[%s194 + $0x28] sm:$0xf] %v848
      %913 = vst [vmem:[%s194 + $0x2c] sm:$0xf] %v849
      %914 = vst [vmem:[%s194 + $0x30] sm:$0xf] %v850
      %915 = vst [vmem:[%s194 + $0x34] sm:$0xf] %v851
      %916 = vst [vmem:[%s194 + $0x38] sm:$0xf] %v852
      %917 = vst [vmem:[%s194 + $0x3c] sm:$0xf] %v853
      %918 = vst [vmem:[%s194 + $0x40] sm:$0xf] %v854
      %919 = vst [vmem:[%s194 + $0x44] sm:$0xf] %v855
      %920 = vst [vmem:[%s194 + $0x48] sm:$0xf] %v856
      %921 = vst [vmem:[%s194 + $0x4c] sm:$0xf] %v857
      %922 = vst [vmem:[%s194 + $0x50] sm:$0xf] %v858
      %923 = vst [vmem:[%s194 + $0x54] sm:$0xf] %v859
      %924 = vst [vmem:[%s194 + $0x58] sm:$0xf] %v860
      %925 = vst [vmem:[%s194 + $0x5c] sm:$0xf] %v861
      %926 = vst [vmem:[%s194 + $0x60] sm:$0xf] %v862
      %927 = vst [vmem:[%s194 + $0x64] sm:$0xf] %v863
      %928 = vst [vmem:[%s194 + $0x68] sm:$0xf] %v864
      %929 = vst [vmem:[%s194 + $0x6c] sm:$0xf] %v865
      %930 = vst [vmem:[%s194 + $0x70] sm:$0xf] %v866
      %931 = vst [vmem:[%s194 + $0x74] sm:$0xf] %v867
      %932 = vst [vmem:[%s194 + $0x78] sm:$0xf] %v868
      %933 = vst [vmem:[%s194 + $0x7c] sm:$0xf] %v869
      %s934 = smul.u32 32, %s14
      %p935 = scmp.lt.s32.totalorder %s934, 63
      %s936 = scalar_select %p935, %s934, 63
      %s937 = smul.addr %s936, 4
      %s938 = scalar_lea.vmem %s3, %s937
      // Predicated region
      $region33: #{gcn_forward.3} parent=31 // pred_check
        %p939 = pneg %p105
      $region34: #{gcn_forward.3} parent=31 // pred_check_branch
        %941 = sbr.rel (%p939) target = $region36
      $region35: #{gcn_forward.3} parent=31 // pred_region
        %s942 = smul.u32 32, %s14
      $region36: #{gcn_forward.3} parent=31 // pred_fallthru
        _
    $region32: #{gcn_forward.3} parent=5 // pred_fallthru
      _
    %p943 = scmp.le.s32.totalorder 2, %s9
    // Predicated region
    $region37: #{gcn_forward.3} parent=5 // pred_check
      %p944 = pneg %p943
    $region38: #{gcn_forward.3} parent=5 // pred_check_branch
      %946 = sbr.rel (%p944) target = $region40
    $region39: #{gcn_forward.3} parent=5 // pred_region
      %s947 = ssub.s32 %s9, 2
      // Predicated region
      $region41: #{gcn_forward.3} parent=39 // pred_check
        %p948 = pneg %p111
      $region42: #{gcn_forward.3} parent=39 // pred_check_branch
        %950 = sbr.rel (%p948) target = $region44
      $region43: #{gcn_forward.3} parent=39 // pred_region
        %s951 = smul.u32 32, %s15
        %p952 = scmp.lt.s32.totalorder %s951, 63
        %s953 = scalar_select %p952, %s951, 63
        %s954 = smul.addr %s953, 4
        %s955 = scalar_lea.vmem %s3, %s954
      $region44: #{gcn_forward.3} parent=39 // pred_fallthru
        _
    $region40: #{gcn_forward.3} parent=5 // pred_fallthru
      _
  $region6: #{gcn_forward.3} parent=0 // loop_footer
    %s13 = sadd.s32 1, %s9
  $region7: #{gcn_forward.3} parent=0 // loop_footer_branch
    %8 = sbr.rel target = $region3
  $region8: #{gcn_forward.3} parent=0 // loop_exit
    _

// kernel: gcn_forward.4
$region0: #{gcn_forward.4}
  #allocation0 [shape = 'u32[]', space=smem, size = 0x4, offset = 0x4, fixed_abs, tag = 'smem constant byte address 0x4 - core index']
  #allocation1 [shape = 'u32[144,128]{1,0:T(1,128)}', space=vmem, size = 0x12000, scoped, tag = 'internal scratch']
  #allocation2 [shape = 'f32[256,128]{1,0:T(8,128)}', space=vmem, size = 0x20000, scoped, tag = 'scratch operand']
  %s0 = inlined_call_operand.vmem [shape: bf16[512,512], index: 0, kind: input, shape index: {}]
  %s1 = inlined_call_operand.vmem [shape: bf16[512,128], index: 1, kind: input, shape index: {}]
  %s2 = inlined_call_operand.vmem [shape: f32[512,1], index: 2, kind: input, shape index: {}]
  %s3 = inlined_call_operand.vmem [shape: f32[1,128], index: 3, kind: input, shape index: {}]
  %s4 = inlined_call_operand.vmem [shape: bf16[128,128], index: 4, kind: input, shape index: {}]
  %s5 = inlined_call_operand.vmem [shape: bf16[512,128], index: 5, kind: output, shape index: {}]
  %s6 = sld [smem:[#allocation0]]
  $region61: #{gcn_forward.4} parent=0
    _
  %s8 = ssub.s32 1, %s6
  %s9 = scalar_select 0, %s8, %s6
  loop: start=0, step=1, limit=4
  $region2: #{gcn_forward.4} parent=0 // loop_pre_header
    _
  $region3: #{gcn_forward.4} parent=0 // loop_header
    %s11 = sphi 0, %s15
    %p12 = scmp.ge.s32.totalorder %s11, 4
    %s18 = sphi 0, %s30
    %s19 = sphi 0, %s26
    %s20 = sphi 0, %s18
    %s21 = sphi 0, %s19
    %s22 = sphi 0, %s20
    %s23 = sphi 0, %s21
    %s35 = sphi 0, %s37
    %s38 = sphi 0, %s35
    %s39 = sphi 0, %s38
    %s55 = sphi 0, %s39
    %s59 = sphi 0, %s59
    %s61 = sphi 0, %s59
    %s62 = sphi 0, %s61
    %s76 = sphi 0, %s62
    %s82 = sphi 0, %s84
    %s85 = sphi 0, %s82
    %s86 = sphi 0, %s85
    %s102 = sphi 0, %s86
    %s106 = sphi 0, %s106
    %s108 = sphi 0, %s106
    %s109 = sphi 0, %s108
    %s123 = sphi 0, %s109
    %s127 = sphi 0, %s127
    %s129 = sphi 0, %s127
    %s130 = sphi 0, %s129
    %s144 = sphi 0, %s130
    %s150 = sphi 0, %s152
    %s153 = sphi 0, %s150
    %s154 = sphi 0, %s153
    %s170 = sphi 0, %s154
  $region4: #{gcn_forward.4} parent=0 // loop_header_branch
    %14 = sbr.rel (%p12) target = $region8
  $region5: #{gcn_forward.4} parent=0 // loop_body
    %s16 = ssub.s32 %s11, 1
    %s17 = ssub.s32 %s11, 2
    %s24 = sadd.s32 1, %s19
    %p25 = scmp.ge.s32.totalorder %s24, 1
    %s26 = scalar_select %p25, 0, %s24
    %s27 = sadd.s32 1, %s18
    %s28 = scalar_select %p25, %s27, %s18
    %p29 = scmp.ge.s32.totalorder %s28, 2
    %s30 = scalar_select %p29, 0, %s28
    %s31 = ssub.s32 %s18, %s30
    %s32 = ssub.s32 %s19, %s26
    %s33 = sor.u32 %s31, %s32
    %p34 = scmp.eq.s32.totalorder %s33, 0
    %s36 = sadd.s32 %s35, 1
    %s37 = scalar_select %p34, %s35, %s36
    %p40 = pneg %p34
    %p41 = scmp.eq.s32.totalorder %s11, 1
    %p42 = por %p40, %p41
    %p43 = scmp.ne.s32.totalorder %s35, %s38
    %p44 = scmp.eq.s32.totalorder %s11, 0
    %p45 = por %p43, %p44
    %p46 = scmp.ne.s32.totalorder %s35, %s38
    %p47 = scmp.eq.s32.totalorder %s16, 1
    %p48 = por %p46, %p47
    %p49 = scmp.ne.s32.totalorder %s38, %s39
    %p50 = scmp.eq.s32.totalorder %s16, 0
    %p51 = por %p49, %p50
    %p52 = scmp.ne.s32.totalorder %s38, %s39
    %p53 = scmp.eq.s32.totalorder %s17, 1
    %p54 = por %p52, %p53
    %p56 = scmp.ne.s32.totalorder %s39, %s55
    %p57 = scmp.eq.s32.totalorder %s17, 0
    %p58 = por %p56, %p57
    %s60 = sadd.s32 %s59, 1
    %p63 = scmp.eq.s32.totalorder %s11, 1
    %p64 = scmp.ne.s32.totalorder %s59, %s61
    %p65 = scmp.eq.s32.totalorder %s11, 0
    %p66 = por %p64, %p65
    %p67 = scmp.ne.s32.totalorder %s59, %s61
    %p68 = scmp.eq.s32.totalorder %s16, 1
    %p69 = por %p67, %p68
    %p70 = scmp.ne.s32.totalorder %s61, %s62
    %p71 = scmp.eq.s32.totalorder %s16, 0
    %p72 = por %p70, %p71
    %p73 = scmp.ne.s32.totalorder %s61, %s62
    %p74 = scmp.eq.s32.totalorder %s17, 1
    %p75 = por %p73, %p74
    %p77 = scmp.ne.s32.totalorder %s62, %s76
    %p78 = scmp.eq.s32.totalorder %s17, 0
    %p79 = por %p77, %p78
    %s80 = ssub.s32 %s18, %s30
    %p81 = scmp.eq.s32.totalorder %s80, 0
    %s83 = sadd.s32 %s82, 1
    %s84 = scalar_select %p81, %s82, %s83
    %p87 = pneg %p81
    %p88 = scmp.eq.s32.totalorder %s11, 1
    %p89 = por %p87, %p88
    %p90 = scmp.ne.s32.totalorder %s82, %s85
    %p91 = scmp.eq.s32.totalorder %s11, 0
    %p92 = por %p90, %p91
    %p93 = scmp.ne.s32.totalorder %s82, %s85
    %p94 = scmp.eq.s32.totalorder %s16, 1
    %p95 = por %p93, %p94
    %p96 = scmp.ne.s32.totalorder %s85, %s86
    %p97 = scmp.eq.s32.totalorder %s16, 0
    %p98 = por %p96, %p97
    %p99 = scmp.ne.s32.totalorder %s85, %s86
    %p100 = scmp.eq.s32.totalorder %s17, 1
    %p101 = por %p99, %p100
    %p103 = scmp.ne.s32.totalorder %s86, %s102
    %p104 = scmp.eq.s32.totalorder %s17, 0
    %p105 = por %p103, %p104
    %s107 = sadd.s32 %s106, 1
    %p110 = scmp.eq.s32.totalorder %s11, 1
    %p111 = scmp.ne.s32.totalorder %s106, %s108
    %p112 = scmp.eq.s32.totalorder %s11, 0
    %p113 = por %p111, %p112
    %p114 = scmp.ne.s32.totalorder %s106, %s108
    %p115 = scmp.eq.s32.totalorder %s16, 1
    %p116 = por %p114, %p115
    %p117 = scmp.ne.s32.totalorder %s108, %s109
    %p118 = scmp.eq.s32.totalorder %s16, 0
    %p119 = por %p117, %p118
    %p120 = scmp.ne.s32.totalorder %s108, %s109
    %p121 = scmp.eq.s32.totalorder %s17, 1
    %p122 = por %p120, %p121
    %p124 = scmp.ne.s32.totalorder %s109, %s123
    %p125 = scmp.eq.s32.totalorder %s17, 0
    %p126 = por %p124, %p125
    %s128 = sadd.s32 %s127, 1
    %p131 = scmp.eq.s32.totalorder %s11, 1
    %p132 = scmp.ne.s32.totalorder %s127, %s129
    %p133 = scmp.eq.s32.totalorder %s11, 0
    %p134 = por %p132, %p133
    %p135 = scmp.ne.s32.totalorder %s127, %s129
    %p136 = scmp.eq.s32.totalorder %s16, 1
    %p137 = por %p135, %p136
    %p138 = scmp.ne.s32.totalorder %s129, %s130
    %p139 = scmp.eq.s32.totalorder %s16, 0
    %p140 = por %p138, %p139
    %p141 = scmp.ne.s32.totalorder %s129, %s130
    %p142 = scmp.eq.s32.totalorder %s17, 1
    %p143 = por %p141, %p142
    %p145 = scmp.ne.s32.totalorder %s130, %s144
    %p146 = scmp.eq.s32.totalorder %s17, 0
    %p147 = por %p145, %p146
    %s148 = ssub.s32 %s18, %s30
    %p149 = scmp.eq.s32.totalorder %s148, 0
    %s151 = sadd.s32 %s150, 1
    %s152 = scalar_select %p149, %s150, %s151
    %p155 = pneg %p149
    %p156 = scmp.eq.s32.totalorder %s11, 1
    %p157 = por %p155, %p156
    %p158 = scmp.ne.s32.totalorder %s150, %s153
    %p159 = scmp.eq.s32.totalorder %s11, 0
    %p160 = por %p158, %p159
    %p161 = scmp.ne.s32.totalorder %s150, %s153
    %p162 = scmp.eq.s32.totalorder %s16, 1
    %p163 = por %p161, %p162
    %p164 = scmp.ne.s32.totalorder %s153, %s154
    %p165 = scmp.eq.s32.totalorder %s16, 0
    %p166 = por %p164, %p165
    %p167 = scmp.ne.s32.totalorder %s153, %s154
    %p168 = scmp.eq.s32.totalorder %s17, 1
    %p169 = por %p167, %p168
    %p171 = scmp.ne.s32.totalorder %s154, %s170
    %p172 = scmp.eq.s32.totalorder %s17, 0
    %p173 = por %p171, %p172
    %p174 = scmp.le.s32.totalorder 1, %s11
    %p175 = scmp.lt.s32.totalorder %s11, 3
    %p176 = pnand %p174, %p175
    %p177 = pneg %p176
    // Predicated region
    $region9: #{gcn_forward.4} parent=5 // pred_check
      _
    $region10: #{gcn_forward.4} parent=5 // pred_check_branch
      %179 = sbr.rel (%p176) target = $region12
    $region11: #{gcn_forward.4} parent=5 // pred_region
      %s180 = ssub.s32 %s11, 1
      // Predicated region
      $region13: #{gcn_forward.4} parent=11 // pred_check
        %p181 = pneg %p72
      $region14: #{gcn_forward.4} parent=11 // pred_check_branch
        %183 = sbr.rel (%p181) target = $region16
      $region15: #{gcn_forward.4} parent=11 // pred_region
        _
      $region16: #{gcn_forward.4} parent=11 // pred_fallthru
        _
      // Predicated region
      $region17: #{gcn_forward.4} parent=11 // pred_check
        %p184 = pneg %p119
      $region18: #{gcn_forward.4} parent=11 // pred_check_branch
        %186 = sbr.rel (%p184) target = $region20
      $region19: #{gcn_forward.4} parent=11 // pred_region
        _
      $region20: #{gcn_forward.4} parent=11 // pred_fallthru
        _
      // Predicated region
      $region21: #{gcn_forward.4} parent=11 // pred_check
        %p187 = pneg %p140
      $region22: #{gcn_forward.4} parent=11 // pred_check_branch
        %189 = sbr.rel (%p187) target = $region24
      $region23: #{gcn_forward.4} parent=11 // pred_region
        _
      $region24: #{gcn_forward.4} parent=11 // pred_fallthru
        _
    $region12: #{gcn_forward.4} parent=5 // pred_fallthru
      _
    %p190 = scmp.lt.s32.totalorder %s11, 2
    // Predicated region
    $region25: #{gcn_forward.4} parent=5 // pred_check
      %p191 = pneg %p190
    $region26: #{gcn_forward.4} parent=5 // pred_check_branch
      %193 = sbr.rel (%p191) target = $region28
    $region27: #{gcn_forward.4} parent=5 // pred_region
      // Predicated region
      $region29: #{gcn_forward.4} parent=27 // pred_check
        %p194 = pneg %p45
      $region30: #{gcn_forward.4} parent=27 // pred_check_branch
        %196 = sbr.rel (%p194) target = $region32
      $region31: #{gcn_forward.4} parent=27 // pred_region
        %s197 = smul.u32 32, %s18
        %s198 = smul.u32 4, %s19
        %p199 = scmp.lt.s32.totalorder %s197, 63
        %s200 = scalar_select %p199, %s197, 63
        %p201 = scmp.lt.s32.totalorder %s198, 3
        %s202 = scalar_select %p201, %s198, 3
        %s203 = smul.addr %s200, 4
        %s204 = sadd.s32 %s202, %s203
        %s205 = smul.addr %s204, 4
        %s206 = scalar_lea.vmem %s0, %s205
        %s207 = smul.u32 32, %s18
        %s208 = smul.u32 4, %s19
      $region32: #{gcn_forward.4} parent=27 // pred_fallthru
        _
      // Predicated region
      $region33: #{gcn_forward.4} parent=27 // pred_check
        %p209 = pneg %p92
      $region34: #{gcn_forward.4} parent=27 // pred_check_branch
        %211 = sbr.rel (%p209) target = $region36
      $region35: #{gcn_forward.4} parent=27 // pred_region
        %s212 = smul.u32 32, %s18
        %p213 = scmp.lt.s32.totalorder %s212, 63
        %s214 = scalar_select %p213, %s212, 63
        %s215 = smul.addr %s214, 8
        %s216 = scalar_lea.vmem %s2, %s215
        %s217 = smul.u32 32, %s18
      $region36: #{gcn_forward.4} parent=27 // pred_fallthru
        _
    $region28: #{gcn_forward.4} parent=5 // pred_fallthru
      _
    %p218 = scmp.le.s32.totalorder 1, %s11
    %p219 = scmp.lt.s32.totalorder %s11, 3
    %p220 = pnand %p218, %p219
    %p221 = pneg %p220
    // Predicated region
    $region37: #{gcn_forward.4} parent=5 // pred_check
      _
    $region38: #{gcn_forward.4} parent=5 // pred_check_branch
      %223 = sbr.rel (%p220) target = $region40
    $region39: #{gcn_forward.4} parent=5 // pred_region
      %s224 = ssub.s32 %s11, 1
      %s225 = smul.u32 32, %s20
      %s226 = smul.u32 4, %s21
      %p227 = scmp.lt.s32.totalorder %s225, 63
      %s228 = scalar_select %p227, %s225, 63
      %p229 = scmp.lt.s32.totalorder %s226, 3
      %s230 = scalar_select %p229, %s226, 3
      %s231 = smul.addr %s228, 4
      %s232 = sadd.s32 %s230, %s231
      %s233 = smul.addr %s232, 4
      %s234 = scalar_lea.vmem %s0, %s233
      %p235 = pneg %p51
      %p236 = pneg %p48
      %p237 = pneg %p72
      %p238 = pneg %p69
      %s239 = smul.u32 32, %s20
      %p240 = scmp.lt.s32.totalorder %s239, 63
      %s241 = scalar_select %p240, %s239, 63
      %s242 = smul.addr %s241, 8
      %s243 = scalar_lea.vmem %s2, %s242
      %p244 = pneg %p98
      %p245 = pneg %p95
      %p246 = pneg %p119
      %p247 = pneg %p116
      %p248 = pneg %p140
      %p249 = pneg %p137
      %p250 = pneg %p166
      %p251 = pneg %p163
      %s252 = smul.u32 32, %s20
      %p253 = scmp.lt.s32.totalorder %s252, 63
      %s254 = scalar_select %p253, %s252, 63
      %s255 = smul.addr %s254, 4
      %s256 = scalar_lea.vmem %s5, %s255
      %s257 = smul.u32 32, %s20
      %s258 = smul.u32 4, %s21
      %p259 = scmp.lt.s32.totalorder %s257, 63
      %s260 = scalar_select %p259, %s257, 63
      %p261 = scmp.lt.s32.totalorder %s258, 3
      %s262 = scalar_select %p261, %s258, 3
      %s263 = smul.addr %s260, 4
      %s264 = sadd.s32 %s262, %s263
      %s265 = smul.addr %s264, 4
      %s266 = scalar_lea.vmem %s0, %s265
      %s267 = smul.u32 32, %s20
      %s268 = smul.u32 4, %s21
      %s269 = smul.u32 32, %s20
      %p270 = scmp.lt.s32.totalorder %s269, 63
      %s271 = scalar_select %p270, %s269, 63
      %s272 = smul.addr %s271, 8
      %s273 = scalar_lea.vmem %s2, %s272
      %s274 = smul.u32 32, %s20
      %s275 = smul.u32 32, %s20
      %p276 = scmp.lt.s32.totalorder %s275, 63
      %s277 = scalar_select %p276, %s275, 63
      %s278 = smul.addr %s277, 4
      %s279 = scalar_lea.vmem %s5, %s278
      %s280 = smul.u32 32, %s20
      %p282 = scmp.eq.s32.totalorder %s21, 0
      // Predicated region
      $region41: #{gcn_forward.4} parent=39 // pred_check
        %p283 = pneg %p282
      $region42: #{gcn_forward.4} parent=39 // pred_check_branch
        %285 = sbr.rel (%p283) target = $region44
      $region43: #{gcn_forward.4} parent=39 // pred_region
        %286 = vst [vmem:[#allocation2] sm:$0xff] 0.0
        %287 = vst [vmem:[#allocation2 + $0x8] sm:$0xff] 0.0
        %288 = vst [vmem:[#allocation2 + $0x10] sm:$0xff] 0.0
        %289 = vst [vmem:[#allocation2 + $0x18] sm:$0xff] 0.0
        %290 = vst [vmem:[#allocation2 + $0x20] sm:$0xff] 0.0
        %291 = vst [vmem:[#allocation2 + $0x28] sm:$0xff] 0.0
        %292 = vst [vmem:[#allocation2 + $0x30] sm:$0xff] 0.0
        %293 = vst [vmem:[#allocation2 + $0x38] sm:$0xff] 0.0
        %294 = vst [vmem:[#allocation2 + $0x40] sm:$0xff] 0.0
        %295 = vst [vmem:[#allocation2 + $0x48] sm:$0xff] 0.0
        %296 = vst [vmem:[#allocation2 + $0x50] sm:$0xff] 0.0
        %297 = vst [vmem:[#allocation2 + $0x58] sm:$0xff] 0.0
        %298 = vst [vmem:[#allocation2 + $0x60] sm:$0xff] 0.0
        %299 = vst [vmem:[#allocation2 + $0x68] sm:$0xff] 0.0
        %300 = vst [vmem:[#allocation2 + $0x70] sm:$0xff] 0.0
        %301 = vst [vmem:[#allocation2 + $0x78] sm:$0xff] 0.0
        %302 = vst [vmem:[#allocation2 + $0x80] sm:$0xff] 0.0
        %303 = vst [vmem:[#allocation2 + $0x88] sm:$0xff] 0.0
        %304 = vst [vmem:[#allocation2 + $0x90] sm:$0xff] 0.0
        %305 = vst [vmem:[#allocation2 + $0x98] sm:$0xff] 0.0
        %306 = vst [vmem:[#allocation2 + $0xa0] sm:$0xff] 0.0
        %307 = vst [vmem:[#allocation2 + $0xa8] sm:$0xff] 0.0
        %308 = vst [vmem:[#allocation2 + $0xb0] sm:$0xff] 0.0
        %309 = vst [vmem:[#allocation2 + $0xb8] sm:$0xff] 0.0
        %310 = vst [vmem:[#allocation2 + $0xc0] sm:$0xff] 0.0
        %311 = vst [vmem:[#allocation2 + $0xc8] sm:$0xff] 0.0
        %312 = vst [vmem:[#allocation2 + $0xd0] sm:$0xff] 0.0
        %313 = vst [vmem:[#allocation2 + $0xd8] sm:$0xff] 0.0
        %314 = vst [vmem:[#allocation2 + $0xe0] sm:$0xff] 0.0
        %315 = vst [vmem:[#allocation2 + $0xe8] sm:$0xff] 0.0
        %316 = vst [vmem:[#allocation2 + $0xf0] sm:$0xff] 0.0
        %317 = vst [vmem:[#allocation2 + $0xf8] sm:$0xff] 0.0
      $region44: #{gcn_forward.4} parent=39 // pred_fallthru
        _
      %s318 = smul.u32 %s21, 512
      %v319 = vld [vmem:[#allocation2] sm:$0xff]
      %v320 = vld [vmem:[#allocation2 + $0x8] sm:$0xff]
      %v321 = vld [vmem:[#allocation2 + $0x10] sm:$0xff]
      %v322 = vld [vmem:[#allocation2 + $0x18] sm:$0xff]
      %v323 = vld [vmem:[#allocation2 + $0x20] sm:$0xff]
      %v324 = vld [vmem:[#allocation2 + $0x28] sm:$0xff]
      %v325 = vld [vmem:[#allocation2 + $0x30] sm:$0xff]
      %v326 = vld [vmem:[#allocation2 + $0x38] sm:$0xff]
      %v327 = vld [vmem:[#allocation2 + $0x40] sm:$0xff]
      %v328 = vld [vmem:[#allocation2 + $0x48] sm:$0xff]
      %v329 = vld [vmem:[#allocation2 + $0x50] sm:$0xff]
      %v330 = vld [vmem:[#allocation2 + $0x58] sm:$0xff]
      %v331 = vld [vmem:[#allocation2 + $0x60] sm:$0xff]
      %v332 = vld [vmem:[#allocation2 + $0x68] sm:$0xff]
      %v333 = vld [vmem:[#allocation2 + $0x70] sm:$0xff]
      %v334 = vld [vmem:[#allocation2 + $0x78] sm:$0xff]
      %v335 = vld [vmem:[#allocation2 + $0x80] sm:$0xff]
      %v336 = vld [vmem:[#allocation2 + $0x88] sm:$0xff]
      %v337 = vld [vmem:[#allocation2 + $0x90] sm:$0xff]
      %v338 = vld [vmem:[#allocation2 + $0x98] sm:$0xff]
      %v339 = vld [vmem:[#allocation2 + $0xa0] sm:$0xff]
      %v340 = vld [vmem:[#allocation2 + $0xa8] sm:$0xff]
      %v341 = vld [vmem:[#allocation2 + $0xb0] sm:$0xff]
      %v342 = vld [vmem:[#allocation2 + $0xb8] sm:$0xff]
      %v343 = vld [vmem:[#allocation2 + $0xc0] sm:$0xff]
      %v344 = vld [vmem:[#allocation2 + $0xc8] sm:$0xff]
      %v345 = vld [vmem:[#allocation2 + $0xd0] sm:$0xff]
      %v346 = vld [vmem:[#allocation2 + $0xd8] sm:$0xff]
      %v347 = vld [vmem:[#allocation2 + $0xe0] sm:$0xff]
      %v348 = vld [vmem:[#allocation2 + $0xe8] sm:$0xff]
      %v349 = vld [vmem:[#allocation2 + $0xf0] sm:$0xff]
      %v350 = vld [vmem:[#allocation2 + $0xf8] sm:$0xff]
      %v351 = vld [vmem:[%s266] sm:$0xff]
      %v352 = vld [vmem:[%s266 + $0x8] sm:$0xff]
      %v353 = vld [vmem:[%s266 + $0x10] sm:$0xff]
      %v354 = vld [vmem:[%s266 + $0x18] sm:$0xff]
      %v355 = vld [vmem:[%s266 + $0x20] sm:$0xff]
      %v356 = vld [vmem:[%s266 + $0x28] sm:$0xff]
      %v357 = vld [vmem:[%s266 + $0x30] sm:$0xff]
      %v358 = vld [vmem:[%s266 + $0x38] sm:$0xff]
      %v359 = vld [vmem:[%s266 + $0x40] sm:$0xff]
      %v360 = vld [vmem:[%s266 + $0x48] sm:$0xff]
      %v361 = vld [vmem:[%s266 + $0x50] sm:$0xff]
      %v362 = vld [vmem:[%s266 + $0x58] sm:$0xff]
      %v363 = vld [vmem:[%s266 + $0x60] sm:$0xff]
      %v364 = vld [vmem:[%s266 + $0x68] sm:$0xff]
      %v365 = vld [vmem:[%s266 + $0x70] sm:$0xff]
      %v366 = vld [vmem:[%s266 + $0x78] sm:$0xff]
      %v367 = vld [vmem:[%s266 + $0x80] sm:$0xff]
      %v368 = vld [vmem:[%s266 + $0x88] sm:$0xff]
      %v369 = vld [vmem:[%s266 + $0x90] sm:$0xff]
      %v370 = vld [vmem:[%s266 + $0x98] sm:$0xff]
      %v371 = vld [vmem:[%s266 + $0xa0] sm:$0xff]
      %v372 = vld [vmem:[%s266 + $0xa8] sm:$0xff]
      %v373 = vld [vmem:[%s266 + $0xb0] sm:$0xff]
      %v374 = vld [vmem:[%s266 + $0xb8] sm:$0xff]
      %v375 = vld [vmem:[%s266 + $0xc0] sm:$0xff]
      %v376 = vld [vmem:[%s266 + $0xc8] sm:$0xff]
      %v377 = vld [vmem:[%s266 + $0xd0] sm:$0xff]
      %v378 = vld [vmem:[%s266 + $0xd8] sm:$0xff]
      %v379 = vld [vmem:[%s266 + $0xe0] sm:$0xff]
      %v380 = vld [vmem:[%s266 + $0xe8] sm:$0xff]
      %v381 = vld [vmem:[%s266 + $0xf0] sm:$0xff]
      %v382 = vld [vmem:[%s266 + $0xf8] sm:$0xff]
      %v383 = vld [vmem:[%s266 + $0x100] sm:$0xff]
      %v384 = vld [vmem:[%s266 + $0x108] sm:$0xff]
      %v385 = vld [vmem:[%s266 + $0x110] sm:$0xff]
      %v386 = vld [vmem:[%s266 + $0x118] sm:$0xff]
      %v387 = vld [vmem:[%s266 + $0x120] sm:$0xff]
      %v388 = vld [vmem:[%s266 + $0x128] sm:$0xff]
      %v389 = vld [vmem:[%s266 + $0x130] sm:$0xff]
      %v390 = vld [vmem:[%s266 + $0x138] sm:$0xff]
      %v391 = vld [vmem:[%s266 + $0x140] sm:$0xff]
      %v392 = vld [vmem:[%s266 + $0x148] sm:$0xff]
      %v393 = vld [vmem:[%s266 + $0x150] sm:$0xff]
      %v394 = vld [vmem:[%s266 + $0x158] sm:$0xff]
      %v395 = vld [vmem:[%s266 + $0x160] sm:$0xff]
      %v396 = vld [vmem:[%s266 + $0x168] sm:$0xff]
      %v397 = vld [vmem:[%s266 + $0x170] sm:$0xff]
      %v398 = vld [vmem:[%s266 + $0x178] sm:$0xff]
      %v399 = vld [vmem:[%s266 + $0x180] sm:$0xff]
      %v400 = vld [vmem:[%s266 + $0x188] sm:$0xff]
      %v401 = vld [vmem:[%s266 + $0x190] sm:$0xff]
      %v402 = vld [vmem:[%s266 + $0x198] sm:$0xff]
      %v403 = vld [vmem:[%s266 + $0x1a0] sm:$0xff]
      %v404 = vld [vmem:[%s266 + $0x1a8] sm:$0xff]
      %v405 = vld [vmem:[%s266 + $0x1b0] sm:$0xff]
      %v406 = vld [vmem:[%s266 + $0x1b8] sm:$0xff]
      %v407 = vld [vmem:[%s266 + $0x1c0] sm:$0xff]
      %v408 = vld [vmem:[%s266 + $0x1c8] sm:$0xff]
      %v409 = vld [vmem:[%s266 + $0x1d0] sm:$0xff]
      %v410 = vld [vmem:[%s266 + $0x1d8] sm:$0xff]
      %v411 = vld [vmem:[%s266 + $0x1e0] sm:$0xff]
      %v412 = vld [vmem:[%s266 + $0x1e8] sm:$0xff]
      %v413 = vld [vmem:[%s266 + $0x1f0] sm:$0xff]
      %v414 = vld [vmem:[%s266 + $0x1f8] sm:$0xff]
      %s415 = sshra.s32 %s318, 3
      %s416 = sand.u32 %s318, 7
      %s417 = smul.addr %s415, 4
      %s418 = scalar_lea.vmem %s1, %s417
      %v419 = vld [vmem:[%s418] sm:$0xf]
      %v420 = vld [vmem:[%s418 + $0x4] sm:$0xf]
      %v421 = vld [vmem:[%s418 + $0x8] sm:$0xf]
      %v422 = vld [vmem:[%s418 + $0xc] sm:$0xf]
      %v423 = vld [vmem:[%s418 + $0x10] sm:$0xf]
      %v424 = vld [vmem:[%s418 + $0x14] sm:$0xf]
      %v425 = vld [vmem:[%s418 + $0x18] sm:$0xf]
      %v426 = vld [vmem:[%s418 + $0x1c] sm:$0xf]
      %v427 = vld [vmem:[%s418 + $0x20] sm:$0xf]
      %v428 = vld [vmem:[%s418 + $0x24] sm:$0xf]
      %v429 = vld [vmem:[%s418 + $0x28] sm:$0xf]
      %v430 = vld [vmem:[%s418 + $0x2c] sm:$0xf]
      %v431 = vld [vmem:[%s418 + $0x30] sm:$0xf]
      %v432 = vld [vmem:[%s418 + $0x34] sm:$0xf]
      %v433 = vld [vmem:[%s418 + $0x38] sm:$0xf]
      %v434 = vld [vmem:[%s418 + $0x3c] sm:$0xf]
      %v435 = vld [vmem:[%s418 + $0x40] sm:$0xf]
      %v436 = vld [vmem:[%s418 + $0x44] sm:$0xf]
      %v437 = vld [vmem:[%s418 + $0x48] sm:$0xf]
      %v438 = vld [vmem:[%s418 + $0x4c] sm:$0xf]
      %v439 = vld [vmem:[%s418 + $0x50] sm:$0xf]
      %v440 = vld [vmem:[%s418 + $0x54] sm:$0xf]
      %v441 = vld [vmem:[%s418 + $0x58] sm:$0xf]
      %v442 = vld [vmem:[%s418 + $0x5c] sm:$0xf]
      %v443 = vld [vmem:[%s418 + $0x60] sm:$0xf]
      %v444 = vld [vmem:[%s418 + $0x64] sm:$0xf]
      %v445 = vld [vmem:[%s418 + $0x68] sm:$0xf]
      %v446 = vld [vmem:[%s418 + $0x6c] sm:$0xf]
      %v447 = vld [vmem:[%s418 + $0x70] sm:$0xf]
      %v448 = vld [vmem:[%s418 + $0x74] sm:$0xf]
      %v449 = vld [vmem:[%s418 + $0x78] sm:$0xf]
      %v450 = vld [vmem:[%s418 + $0x7c] sm:$0xf]
      %v451 = vld [vmem:[%s418 + $0x80] sm:$0xf]
      %v452 = vld [vmem:[%s418 + $0x84] sm:$0xf]
      %v453 = vld [vmem:[%s418 + $0x88] sm:$0xf]
      %v454 = vld [vmem:[%s418 + $0x8c] sm:$0xf]
      %v455 = vld [vmem:[%s418 + $0x90] sm:$0xf]
      %v456 = vld [vmem:[%s418 + $0x94] sm:$0xf]
      %v457 = vld [vmem:[%s418 + $0x98] sm:$0xf]
      %v458 = vld [vmem:[%s418 + $0x9c] sm:$0xf]
      %v459 = vld [vmem:[%s418 + $0xa0] sm:$0xf]
      %v460 = vld [vmem:[%s418 + $0xa4] sm:$0xf]
      %v461 = vld [vmem:[%s418 + $0xa8] sm:$0xf]
      %v462 = vld [vmem:[%s418 + $0xac] sm:$0xf]
      %v463 = vld [vmem:[%s418 + $0xb0] sm:$0xf]
      %v464 = vld [vmem:[%s418 + $0xb4] sm:$0xf]
      %v465 = vld [vmem:[%s418 + $0xb8] sm:$0xf]
      %v466 = vld [vmem:[%s418 + $0xbc] sm:$0xf]
      %v467 = vld [vmem:[%s418 + $0xc0] sm:$0xf]
      %v468 = vld [vmem:[%s418 + $0xc4] sm:$0xf]
      %v469 = vld [vmem:[%s418 + $0xc8] sm:$0xf]
      %v470 = vld [vmem:[%s418 + $0xcc] sm:$0xf]
      %v471 = vld [vmem:[%s418 + $0xd0] sm:$0xf]
      %v472 = vld [vmem:[%s418 + $0xd4] sm:$0xf]
      %v473 = vld [vmem:[%s418 + $0xd8] sm:$0xf]
      %v474 = vld [vmem:[%s418 + $0xdc] sm:$0xf]
      %v475 = vld [vmem:[%s418 + $0xe0] sm:$0xf]
      %v476 = vld [vmem:[%s418 + $0xe4] sm:$0xf]
      %v477 = vld [vmem:[%s418 + $0xe8] sm:$0xf]
      %v478 = vld [vmem:[%s418 + $0xec] sm:$0xf]
      %v479 = vld [vmem:[%s418 + $0xf0] sm:$0xf]
      %v480 = vld [vmem:[%s418 + $0xf4] sm:$0xf]
      %v481 = vld [vmem:[%s418 + $0xf8] sm:$0xf]
      %v482 = vld [vmem:[%s418 + $0xfc] sm:$0xf]
      %v547 = vunpack.c.l.b16 %v351
      %v548 = vunpack.c.h.b16 %v351
      %v549 = vunpack.c.l.b16 %v352
      %v550 = vunpack.c.h.b16 %v352
      %v551 = vunpack.c.l.b16 %v353
      %v552 = vunpack.c.h.b16 %v353
      %v553 = vunpack.c.l.b16 %v354
      %v554 = vunpack.c.h.b16 %v354
      %v555 = vunpack.c.l.b16 %v355
      %v556 = vunpack.c.h.b16 %v355
      %v557 = vunpack.c.l.b16 %v356
      %v558 = vunpack.c.h.b16 %v356
      %v559 = vunpack.c.l.b16 %v357
      %v560 = vunpack.c.h.b16 %v357
      %v561 = vunpack.c.l.b16 %v358
      %v562 = vunpack.c.h.b16 %v358
      %v563 = vunpack.c.l.b16 %v359
      %v564 = vunpack.c.h.b16 %v359
      %v565 = vunpack.c.l.b16 %v360
      %v566 = vunpack.c.h.b16 %v360
      %v567 = vunpack.c.l.b16 %v361
      %v568 = vunpack.c.h.b16 %v361
      %v569 = vunpack.c.l.b16 %v362
      %v570 = vunpack.c.h.b16 %v362
      %v571 = vunpack.c.l.b16 %v363
      %v572 = vunpack.c.h.b16 %v363
      %v573 = vunpack.c.l.b16 %v364
      %v574 = vunpack.c.h.b16 %v364
      %v575 = vunpack.c.l.b16 %v365
      %v576 = vunpack.c.h.b16 %v365
      %v577 = vunpack.c.l.b16 %v366
      %v578 = vunpack.c.h.b16 %v366
      %v579 = vunpack.c.l.b16 %v367
      %v580 = vunpack.c.h.b16 %v367
      %v581 = vunpack.c.l.b16 %v368
      %v582 = vunpack.c.h.b16 %v368
      %v583 = vunpack.c.l.b16 %v369
      %v584 = vunpack.c.h.b16 %v369
      %v585 = vunpack.c.l.b16 %v370
      %v586 = vunpack.c.h.b16 %v370
      %v587 = vunpack.c.l.b16 %v371
      %v588 = vunpack.c.h.b16 %v371
      %v589 = vunpack.c.l.b16 %v372
      %v590 = vunpack.c.h.b16 %v372
      %v591 = vunpack.c.l.b16 %v373
      %v592 = vunpack.c.h.b16 %v373
      %v593 = vunpack.c.l.b16 %v374
      %v594 = vunpack.c.h.b16 %v374
      %v595 = vunpack.c.l.b16 %v375
      %v596 = vunpack.c.h.b16 %v375
      %v597 = vunpack.c.l.b16 %v376
      %v598 = vunpack.c.h.b16 %v376
      %v599 = vunpack.c.l.b16 %v377
      %v600 = vunpack.c.h.b16 %v377
      %v601 = vunpack.c.l.b16 %v378
      %v602 = vunpack.c.h.b16 %v378
      %v603 = vunpack.c.l.b16 %v379
      %v604 = vunpack.c.h.b16 %v379
      %v605 = vunpack.c.l.b16 %v380
      %v606 = vunpack.c.h.b16 %v380
      %v607 = vunpack.c.l.b16 %v381
      %v608 = vunpack.c.h.b16 %v381
      %v609 = vunpack.c.l.b16 %v382
      %v610 = vunpack.c.h.b16 %v382
      %v611 = vunpack.c.l.b16 %v383
      %v612 = vunpack.c.h.b16 %v383
      %v613 = vunpack.c.l.b16 %v384
      %v614 = vunpack.c.h.b16 %v384
      %v615 = vunpack.c.l.b16 %v385
      %v616 = vunpack.c.h.b16 %v385
      %v617 = vunpack.c.l.b16 %v386
      %v618 = vunpack.c.h.b16 %v386
      %v619 = vunpack.c.l.b16 %v387
      %v620 = vunpack.c.h.b16 %v387
      %v621 = vunpack.c.l.b16 %v388
      %v622 = vunpack.c.h.b16 %v388
      %v623 = vunpack.c.l.b16 %v389
      %v624 = vunpack.c.h.b16 %v389
      %v625 = vunpack.c.l.b16 %v390
      %v626 = vunpack.c.h.b16 %v390
      %v627 = vunpack.c.l.b16 %v391
      %v628 = vunpack.c.h.b16 %v391
      %v629 = vunpack.c.l.b16 %v392
      %v630 = vunpack.c.h.b16 %v392
      %v631 = vunpack.c.l.b16 %v393
      %v632 = vunpack.c.h.b16 %v393
      %v633 = vunpack.c.l.b16 %v394
      %v634 = vunpack.c.h.b16 %v394
      %v635 = vunpack.c.l.b16 %v395
      %v636 = vunpack.c.h.b16 %v395
      %v637 = vunpack.c.l.b16 %v396
      %v638 = vunpack.c.h.b16 %v396
      %v639 = vunpack.c.l.b16 %v397
      %v640 = vunpack.c.h.b16 %v397
      %v641 = vunpack.c.l.b16 %v398
      %v642 = vunpack.c.h.b16 %v398
      %v643 = vunpack.c.l.b16 %v399
      %v644 = vunpack.c.h.b16 %v399
      %v645 = vunpack.c.l.b16 %v400
      %v646 = vunpack.c.h.b16 %v400
      %v647 = vunpack.c.l.b16 %v401
      %v648 = vunpack.c.h.b16 %v401
      %v649 = vunpack.c.l.b16 %v402
      %v650 = vunpack.c.h.b16 %v402
      %v651 = vunpack.c.l.b16 %v403
      %v652 = vunpack.c.h.b16 %v403
      %v653 = vunpack.c.l.b16 %v404
      %v654 = vunpack.c.h.b16 %v404
      %v655 = vunpack.c.l.b16 %v405
      %v656 = vunpack.c.h.b16 %v405
      %v657 = vunpack.c.l.b16 %v406
      %v658 = vunpack.c.h.b16 %v406
      %v659 = vunpack.c.l.b16 %v407
      %v660 = vunpack.c.h.b16 %v407
      %v661 = vunpack.c.l.b16 %v408
      %v662 = vunpack.c.h.b16 %v408
      %v663 = vunpack.c.l.b16 %v409
      %v664 = vunpack.c.h.b16 %v409
      %v665 = vunpack.c.l.b16 %v410
      %v666 = vunpack.c.h.b16 %v410
      %v667 = vunpack.c.l.b16 %v411
      %v668 = vunpack.c.h.b16 %v411
      %v669 = vunpack.c.l.b16 %v412
      %v670 = vunpack.c.h.b16 %v412
      %v671 = vunpack.c.l.b16 %v413
      %v672 = vunpack.c.h.b16 %v413
      %v673 = vunpack.c.l.b16 %v414
      %v674 = vunpack.c.h.b16 %v414
      %v675 = vpack.c.b16 %v551, %v547
      %v676 = vpack.c.b16 %v552, %v548
      %v677 = vpack.c.b16 %v553, %v549
      %v678 = vpack.c.b16 %v554, %v550
      %v679 = vpack.c.b16 %v559, %v555
      %v680 = vpack.c.b16 %v560, %v556
      %v681 = vpack.c.b16 %v561, %v557
      %v682 = vpack.c.b16 %v562, %v558
      %v683 = vpack.c.b16 %v567, %v563
      %v684 = vpack.c.b16 %v568, %v564
      %v685 = vpack.c.b16 %v569, %v565
      %v686 = vpack.c.b16 %v570, %v566
      %v687 = vpack.c.b16 %v575, %v571
      %v688 = vpack.c.b16 %v576, %v572
      %v689 = vpack.c.b16 %v577, %v573
      %v690 = vpack.c.b16 %v578, %v574
      %v691 = vpack.c.b16 %v583, %v579
      %v692 = vpack.c.b16 %v584, %v580
      %v693 = vpack.c.b16 %v585, %v581
      %v694 = vpack.c.b16 %v586, %v582
      %v695 = vpack.c.b16 %v591, %v587
      %v696 = vpack.c.b16 %v592, %v588
      %v697 = vpack.c.b16 %v593, %v589
      %v698 = vpack.c.b16 %v594, %v590
      %v699 = vpack.c.b16 %v599, %v595
      %v700 = vpack.c.b16 %v600, %v596
      %v701 = vpack.c.b16 %v601, %v597
      %v702 = vpack.c.b16 %v602, %v598
      %v703 = vpack.c.b16 %v607, %v603
      %v704 = vpack.c.b16 %v608, %v604
      %v705 = vpack.c.b16 %v609, %v605
      %v706 = vpack.c.b16 %v610, %v606
      %v707 = vpack.c.b16 %v615, %v611
      %v708 = vpack.c.b16 %v616, %v612
      %v709 = vpack.c.b16 %v617, %v613
      %v710 = vpack.c.b16 %v618, %v614
      %v711 = vpack.c.b16 %v623, %v619
      %v712 = vpack.c.b16 %v624, %v620
      %v713 = vpack.c.b16 %v625, %v621
      %v714 = vpack.c.b16 %v626, %v622
      %v715 = vpack.c.b16 %v631, %v627
      %v716 = vpack.c.b16 %v632, %v628
      %v717 = vpack.c.b16 %v633, %v629
      %v718 = vpack.c.b16 %v634, %v630
      %v719 = vpack.c.b16 %v639, %v635
      %v720 = vpack.c.b16 %v640, %v636
      %v721 = vpack.c.b16 %v641, %v637
      %v722 = vpack.c.b16 %v642, %v638
      %v723 = vpack.c.b16 %v647, %v643
      %v724 = vpack.c.b16 %v648, %v644
      %v725 = vpack.c.b16 %v649, %v645
      %v726 = vpack.c.b16 %v650, %v646
      %v727 = vpack.c.b16 %v655, %v651
      %v728 = vpack.c.b16 %v656, %v652
      %v729 = vpack.c.b16 %v657, %v653
      %v730 = vpack.c.b16 %v658, %v654
      %v731 = vpack.c.b16 %v663, %v659
      %v732 = vpack.c.b16 %v664, %v660
      %v733 = vpack.c.b16 %v665, %v661
      %v734 = vpack.c.b16 %v666, %v662
      %v735 = vpack.c.b16 %v671, %v667
      %v736 = vpack.c.b16 %v672, %v668
      %v737 = vpack.c.b16 %v673, %v669
      %v738 = vpack.c.b16 %v674, %v670
      %v867 = vunpack.c.l.b16 %v419
      %v868 = vunpack.c.l.b16 %v420
      %v869 = vunpack.c.l.b16 %v421
      %v870 = vunpack.c.l.b16 %v422
      %v871 = vunpack.c.l.b16 %v423
      %v872 = vunpack.c.l.b16 %v424
      %v873 = vunpack.c.l.b16 %v425
      %v874 = vunpack.c.l.b16 %v426
      %v875 = vunpack.c.l.b16 %v427
      %v876 = vunpack.c.l.b16 %v428
      %v877 = vunpack.c.l.b16 %v429
      %v878 = vunpack.c.l.b16 %v430
      %v879 = vunpack.c.l.b16 %v431
      %v880 = vunpack.c.l.b16 %v432
      %v881 = vunpack.c.l.b16 %v433
      %v882 = vunpack.c.l.b16 %v434
      %v883 = vunpack.c.l.b16 %v435
      %v884 = vunpack.c.l.b16 %v436
      %v885 = vunpack.c.l.b16 %v437
      %v886 = vunpack.c.l.b16 %v438
      %v887 = vunpack.c.l.b16 %v439
      %v888 = vunpack.c.l.b16 %v440
      %v889 = vunpack.c.l.b16 %v441
      %v890 = vunpack.c.l.b16 %v442
      %v891 = vunpack.c.l.b16 %v443
      %v892 = vunpack.c.l.b16 %v444
      %v893 = vunpack.c.l.b16 %v445
      %v894 = vunpack.c.l.b16 %v446
      %v895 = vunpack.c.l.b16 %v447
      %v896 = vunpack.c.l.b16 %v448
      %v897 = vunpack.c.l.b16 %v449
      %v898 = vunpack.c.l.b16 %v450
      %v899 = vunpack.c.l.b16 %v451
      %v900 = vunpack.c.l.b16 %v452
      %v901 = vunpack.c.l.b16 %v453
      %v902 = vunpack.c.l.b16 %v454
      %v903 = vunpack.c.l.b16 %v455
      %v904 = vunpack.c.l.b16 %v456
      %v905 = vunpack.c.l.b16 %v457
      %v906 = vunpack.c.l.b16 %v458
      %v907 = vunpack.c.l.b16 %v459
      %v908 = vunpack.c.l.b16 %v460
      %v909 = vunpack.c.l.b16 %v461
      %v910 = vunpack.c.l.b16 %v462
      %v911 = vunpack.c.l.b16 %v463
      %v912 = vunpack.c.l.b16 %v464
      %v913 = vunpack.c.l.b16 %v465
      %v914 = vunpack.c.l.b16 %v466
      %v915 = vunpack.c.l.b16 %v467
      %v916 = vunpack.c.l.b16 %v468
      %v917 = vunpack.c.l.b16 %v469
      %v918 = vunpack.c.l.b16 %v470
      %v919 = vunpack.c.l.b16 %v471
      %v920 = vunpack.c.l.b16 %v472
      %v921 = vunpack.c.l.b16 %v473
      %v922 = vunpack.c.l.b16 %v474
      %v923 = vunpack.c.l.b16 %v475
      %v924 = vunpack.c.l.b16 %v476
      %v925 = vunpack.c.l.b16 %v477
      %v926 = vunpack.c.l.b16 %v478
      %v927 = vunpack.c.l.b16 %v479
      %v928 = vunpack.c.l.b16 %v480
      %v929 = vunpack.c.l.b16 %v481
      %v930 = vunpack.c.l.b16 %v482
      %v931 = vpack.c.b16 %v868, %v867
      %v932 = vpack.c.b16 %v870, %v869
      %v933 = vpack.c.b16 %v872, %v871
      %v934 = vpack.c.b16 %v874, %v873
      %v935 = vpack.c.b16 %v876, %v875
      %v936 = vpack.c.b16 %v878, %v877
      %v937 = vpack.c.b16 %v880, %v879
      %v938 = vpack.c.b16 %v882, %v881
      %v939 = vpack.c.b16 %v884, %v883
      %v940 = vpack.c.b16 %v886, %v885
      %v941 = vpack.c.b16 %v888, %v887
      %v942 = vpack.c.b16 %v890, %v889
      %v943 = vpack.c.b16 %v892, %v891
      %v944 = vpack.c.b16 %v894, %v893
      %v945 = vpack.c.b16 %v896, %v895
      %v946 = vpack.c.b16 %v898, %v897
      %v947 = vpack.c.b16 %v900, %v899
      %v948 = vpack.c.b16 %v902, %v901
      %v949 = vpack.c.b16 %v904, %v903
      %v950 = vpack.c.b16 %v906, %v905
      %v951 = vpack.c.b16 %v908, %v907
      %v952 = vpack.c.b16 %v910, %v909
      %v953 = vpack.c.b16 %v912, %v911
      %v954 = vpack.c.b16 %v914, %v913
      %v955 = vpack.c.b16 %v916, %v915
      %v956 = vpack.c.b16 %v918, %v917
      %v957 = vpack.c.b16 %v920, %v919
      %v958 = vpack.c.b16 %v922, %v921
      %v959 = vpack.c.b16 %v924, %v923
      %v960 = vpack.c.b16 %v926, %v925
      %v961 = vpack.c.b16 %v928, %v927
      %v962 = vpack.c.b16 %v930, %v929
      %995 = vmatprep.subr.bf16.mxu0 0
      %996 = vmatpush1.bf16.msra.mxu0 %v931
      %997 = vmatprep.subr.bf16.mxu0 0
      %998 = vmatpush1.bf16.msra.mxu0 %v932
      %999 = vmatprep.subr.bf16.mxu0 0
      %1000 = vmatpush1.bf16.msra.mxu0 %v933
      %1001 = vmatprep.subr.bf16.mxu0 0
      %1002 = vmatpush1.bf16.msra.mxu0 %v934
      %1003 = vmatprep.subr.bf16.mxu0 0
      %1004 = vmatpush1.bf16.msra.mxu0 %v935
      %1005 = vmatprep.subr.bf16.mxu0 0
      %1006 = vmatpush1.bf16.msra.mxu0 %v936
      %1007 = vmatprep.subr.bf16.mxu0 0
      %1008 = vmatpush1.bf16.msra.mxu0 %v937
      %1009 = vmatprep.subr.bf16.mxu0 0
      %1010 = vmatpush1.bf16.msra.mxu0 %v938
      %1011 = vmatprep.subr.bf16.mxu0 0
      %1012 = vmatpush1.bf16.msra.mxu0 %v939
      %1013 = vmatprep.subr.bf16.mxu0 0
      %1014 = vmatpush1.bf16.msra.mxu0 %v940
      %1015 = vmatprep.subr.bf16.mxu0 0
      %1016 = vmatpush1.bf16.msra.mxu0 %v941
      %1017 = vmatprep.subr.bf16.mxu0 0
      %1018 = vmatpush1.bf16.msra.mxu0 %v942
      %1019 = vmatprep.subr.bf16.mxu0 0
      %1020 = vmatpush1.bf16.msra.mxu0 %v943
      %1021 = vmatprep.subr.bf16.mxu0 0
      %1022 = vmatpush1.bf16.msra.mxu0 %v944
      %1023 = vmatprep.subr.bf16.mxu0 0
      %1024 = vmatpush1.bf16.msra.mxu0 %v945
      %1025 = vmatprep.subr.bf16.mxu0 0
      %1026 = vmatpush1.bf16.msra.mxu0 %v946
      %1027 = vmatprep.mubr.bf16.mxu0 %v676
      %1028 = vmatmul.mubr.bf16.gmra.mrb[0].mxu0 %v675
      %v1029 = vpop.f32.mrb[0].mxu0
      %v1030 = vadd.f32 0.0, %v1029
      %v1031 = vpop.f32.mrb[0].mxu0
      %v1032 = vpop.f32.mrb[0].mxu0
      %v1033 = vadd.f32 0.0, %v1032
      %v1034 = vpop.f32.mrb[0].mxu0
      %1035 = vmatprep.mubr.bf16.mxu0 %v680
      %1036 = vmatmul.mubr.bf16.gmra.mrb[0].mxu0 %v679
      %v1037 = vpop.f32.mrb[0].mxu0
      %v1038 = vadd.f32 0.0, %v1037
      %v1039 = vpop.f32.mrb[0].mxu0
      %v1040 = vpop.f32.mrb[0].mxu0
      %v1041 = vadd.f32 0.0, %v1040
      %v1042 = vpop.f32.mrb[0].mxu0
      %1043 = vmatprep.mubr.bf16.mxu0 %v684
      %1044 = vmatmul.mubr.bf16.gmra.mrb[0].mxu0 %v683
      %v1045 = vpop.f32.mrb[0].mxu0
      %v1046 = vadd.f32 0.0, %v1045
      %v1047 = vpop.f32.mrb[0].mxu0
      %v1048 = vpop.f32.mrb[0].mxu0
      %v1049 = vadd.f32 0.0, %v1048
      %v1050 = vpop.f32.mrb[0].mxu0
      %1051 = vmatprep.mubr.bf16.mxu0 %v688
      %1052 = vmatmul.mubr.bf16.gmra.mrb[0].mxu0 %v687
      %v1053 = vpop.f32.mrb[0].mxu0
      %v1054 = vadd.f32 0.0, %v1053
      %v1055 = vpop.f32.mrb[0].mxu0
      %v1056 = vpop.f32.mrb[0].mxu0
      %v1057 = vadd.f32 0.0, %v1056
      %v1058 = vpop.f32.mrb[0].mxu0
      %1059 = vmatprep.mubr.bf16.mxu0 %v692
      %1060 = vmatmul.mubr.bf16.gmra.mrb[0].mxu0 %v691
      %v1061 = vpop.f32.mrb[0].mxu0
      %v1062 = vadd.f32 0.0, %v1061
      %v1063 = vpop.f32.mrb[0].mxu0
      %v1064 = vpop.f32.mrb[0].mxu0
      %v1065 = vadd.f32 0.0, %v1064
      %v1066 = vpop.f32.mrb[0].mxu0
      %1067 = vmatprep.mubr.bf16.mxu0 %v696
      %1068 = vmatmul.mubr.bf16.gmra.mrb[0].mxu0 %v695
      %v1069 = vpop.f32.mrb[0].mxu0
      %v1070 = vadd.f32 0.0, %v1069
      %v1071 = vpop.f32.mrb[0].mxu0
      %v1072 = vpop.f32.mrb[0].mxu0
      %v1073 = vadd.f32 0.0, %v1072
      %v1074 = vpop.f32.mrb[0].mxu0
      %1075 = vmatprep.mubr.bf16.mxu0 %v700
      %1076 = vmatmul.mubr.bf16.gmra.mrb[0].mxu0 %v699
      %v1077 = vpop.f32.mrb[0].mxu0
      %v1078 = vadd.f32 0.0, %v1077
      %v1079 = vpop.f32.mrb[0].mxu0
      %v1080 = vpop.f32.mrb[0].mxu0
      %v1081 = vadd.f32 0.0, %v1080
      %v1082 = vpop.f32.mrb[0].mxu0
      %1083 = vmatprep.mubr.bf16.mxu0 %v704
      %1084 = vmatmul.mubr.bf16.gmra.mrb[0].mxu0 %v703
      %v1085 = vpop.f32.mrb[0].mxu0
      %v1086 = vadd.f32 0.0, %v1085
      %v1087 = vpop.f32.mrb[0].mxu0
      %v1088 = vpop.f32.mrb[0].mxu0
      %v1089 = vadd.f32 0.0, %v1088
      %v1090 = vpop.f32.mrb[0].mxu0
      %1091 = vmatprep.mubr.bf16.mxu0 %v708
      %1092 = vmatmul.mubr.bf16.gmra.mrb[0].mxu0 %v707
      %v1093 = vpop.f32.mrb[0].mxu0
      %v1094 = vadd.f32 0.0, %v1093
      %v1095 = vpop.f32.mrb[0].mxu0
      %v1096 = vpop.f32.mrb[0].mxu0
      %v1097 = vadd.f32 0.0, %v1096
      %v1098 = vpop.f32.mrb[0].mxu0
      %1099 = vmatprep.mubr.bf16.mxu0 %v712
      %1100 = vmatmul.mubr.bf16.gmra.mrb[0].mxu0 %v711
      %v1101 = vpop.f32.mrb[0].mxu0
      %v1102 = vadd.f32 0.0, %v1101
      %v1103 = vpop.f32.mrb[0].mxu0
      %v1104 = vpop.f32.mrb[0].mxu0
      %v1105 = vadd.f32 0.0, %v1104
      %v1106 = vpop.f32.mrb[0].mxu0
      %1107 = vmatprep.mubr.bf16.mxu0 %v716
      %1108 = vmatmul.mubr.bf16.gmra.mrb[0].mxu0 %v715
      %v1109 = vpop.f32.mrb[0].mxu0
      %v1110 = vadd.f32 0.0, %v1109
      %v1111 = vpop.f32.mrb[0].mxu0
      %v1112 = vpop.f32.mrb[0].mxu0
      %v1113 = vadd.f32 0.0, %v1112
      %v1114 = vpop.f32.mrb[0].mxu0
      %1115 = vmatprep.mubr.bf16.mxu0 %v720
      %1116 = vmatmul.mubr.bf16.gmra.mrb[0].mxu0 %v719
      %v1117 = vpop.f32.mrb[0].mxu0
      %v1118 = vadd.f32 0.0, %v1117
      %v1119 = vpop.f32.mrb[0].mxu0
      %v1120 = vpop.f32.mrb[0].mxu0
      %v1121 = vadd.f32 0.0, %v1120
      %v1122 = vpop.f32.mrb[0].mxu0
      %1123 = vmatprep.mubr.bf16.mxu0 %v724
      %1124 = vmatmul.mubr.bf16.gmra.mrb[0].mxu0 %v723
      %v1125 = vpop.f32.mrb[0].mxu0
      %v1126 = vadd.f32 0.0, %v1125
      %v1127 = vpop.f32.mrb[0].mxu0
      %v1128 = vpop.f32.mrb[0].mxu0
      %v1129 = vadd.f32 0.0, %v1128
      %v1130 = vpop.f32.mrb[0].mxu0
      %1131 = vmatprep.mubr.bf16.mxu0 %v728
      %1132 = vmatmul.mubr.bf16.gmra.mrb[0].mxu0 %v727
      %v1133 = vpop.f32.mrb[0].mxu0
      %v1134 = vadd.f32 0.0, %v1133
      %v1135 = vpop.f32.mrb[0].mxu0
      %v1136 = vpop.f32.mrb[0].mxu0
      %v1137 = vadd.f32 0.0, %v1136
      %v1138 = vpop.f32.mrb[0].mxu0
      %1139 = vmatprep.mubr.bf16.mxu0 %v732
      %1140 = vmatmul.mubr.bf16.gmra.mrb[0].mxu0 %v731
      %v1141 = vpop.f32.mrb[0].mxu0
      %v1142 = vadd.f32 0.0, %v1141
      %v1143 = vpop.f32.mrb[0].mxu0
      %v1144 = vpop.f32.mrb[0].mxu0
      %v1145 = vadd.f32 0.0, %v1144
      %v1146 = vpop.f32.mrb[0].mxu0
      %1147 = vmatprep.mubr.bf16.mxu0 %v736
      %1148 = vmatmul.mubr.bf16.gmra.mrb[0].mxu0 %v735
      %v1149 = vpop.f32.mrb[0].mxu0
      %v1150 = vadd.f32 0.0, %v1149
      %v1151 = vpop.f32.mrb[0].mxu0
      %v1152 = vpop.f32.mrb[0].mxu0
      %v1153 = vadd.f32 0.0, %v1152
      %v1154 = vpop.f32.mrb[0].mxu0
      %1155 = vdwg.mxu0
      %1156 = vmatprep.subr.bf16.mxu0 0
      %1157 = vmatpush1.bf16.msra.mxu0 %v947
      %1158 = vmatprep.subr.bf16.mxu0 0
      %1159 = vmatpush1.bf16.msra.mxu0 %v948
      %1160 = vmatprep.subr.bf16.mxu0 0
      %1161 = vmatpush1.bf16.msra.mxu0 %v949
      %1162 = vmatprep.subr.bf16.mxu0 0
      %1163 = vmatpush1.bf16.msra.mxu0 %v950
      %1164 = vmatprep.subr.bf16.mxu0 0
      %1165 = vmatpush1.bf16.msra.mxu0 %v951
      %1166 = vmatprep.subr.bf16.mxu0 0
      %1167 = vmatpush1.bf16.msra.mxu0 %v952
      %1168 = vmatprep.subr.bf16.mxu0 0
      %1169 = vmatpush1.bf16.msra.mxu0 %v953
      %1170 = vmatprep.subr.bf16.mxu0 0
      %1171 = vmatpush1.bf16.msra.mxu0 %v954
      %1172 = vmatprep.subr.bf16.mxu0 0
      %1173 = vmatpush1.bf16.msra.mxu0 %v955
      %1174 = vmatprep.subr.bf16.mxu0 0
      %1175 = vmatpush1.bf16.msra.mxu0 %v956
      %1176 = vmatprep.subr.bf16.mxu0 0
      %1177 = vmatpush1.bf16.msra.mxu0 %v957
      %1178 = vmatprep.subr.bf16.mxu0 0
      %1179 = vmatpush1.bf16.msra.mxu0 %v958
      %1180 = vmatprep.subr.bf16.mxu0 0
      %1181 = vmatpush1.bf16.msra.mxu0 %v959
      %1182 = vmatprep.subr.bf16.mxu0 0
      %1183 = vmatpush1.bf16.msra.mxu0 %v960
      %1184 = vmatprep.subr.bf16.mxu0 0
      %1185 = vmatpush1.bf16.msra.mxu0 %v961
      %1186 = vmatprep.subr.bf16.mxu0 0
      %1187 = vmatpush1.bf16.msra.mxu0 %v962
      %1188 = vmatprep.mubr.bf16.mxu0 %v678
      %1189 = vmatmul.mubr.bf16.gmra.mrb[0].mxu0 %v677
      %v1190 = vpop.f32.mrb[0].mxu0
      %v1191 = vadd.f32 %v1030, %v1190
      %v1192 = vpop.f32.mrb[0].mxu0
      %v1193 = vpop.f32.mrb[0].mxu0
      %v1194 = vadd.f32 %v1033, %v1193
      %v1195 = vpop.f32.mrb[0].mxu0
      %1196 = vmatprep.mubr.bf16.mxu0 %v682
      %1197 = vmatmul.mubr.bf16.gmra.mrb[0].mxu0 %v681
      %v1198 = vpop.f32.mrb[0].mxu0
      %v1199 = vadd.f32 %v1038, %v1198
      %v1200 = vpop.f32.mrb[0].mxu0
      %v1201 = vpop.f32.mrb[0].mxu0
      %v1202 = vadd.f32 %v1041, %v1201
      %v1203 = vpop.f32.mrb[0].mxu0
      %1204 = vmatprep.mubr.bf16.mxu0 %v686
      %1205 = vmatmul.mubr.bf16.gmra.mrb[0].mxu0 %v685
      %v1206 = vpop.f32.mrb[0].mxu0
      %v1207 = vadd.f32 %v1046, %v1206
      %v1208 = vpop.f32.mrb[0].mxu0
      %v1209 = vpop.f32.mrb[0].mxu0
      %v1210 = vadd.f32 %v1049, %v1209
      %v1211 = vpop.f32.mrb[0].mxu0
      %1212 = vmatprep.mubr.bf16.mxu0 %v690
      %1213 = vmatmul.mubr.bf16.gmra.mrb[0].mxu0 %v689
      %v1214 = vpop.f32.mrb[0].mxu0
      %v1215 = vadd.f32 %v1054, %v1214
      %v1216 = vpop.f32.mrb[0].mxu0
      %v1217 = vpop.f32.mrb[0].mxu0
      %v1218 = vadd.f32 %v1057, %v1217
      %v1219 = vpop.f32.mrb[0].mxu0
      %1220 = vmatprep.mubr.bf16.mxu0 %v694
      %1221 = vmatmul.mubr.bf16.gmra.mrb[0].mxu0 %v693
      %v1222 = vpop.f32.mrb[0].mxu0
      %v1223 = vadd.f32 %v1062, %v1222
      %v1224 = vpop.f32.mrb[0].mxu0
      %v1225 = vpop.f32.mrb[0].mxu0
      %v1226 = vadd.f32 %v1065, %v1225
      %v1227 = vpop.f32.mrb[0].mxu0
      %1228 = vmatprep.mubr.bf16.mxu0 %v698
      %1229 = vmatmul.mubr.bf16.gmra.mrb[0].mxu0 %v697
      %v1230 = vpop.f32.mrb[0].mxu0
      %v1231 = vadd.f32 %v1070, %v1230
      %v1232 = vpop.f32.mrb[0].mxu0
      %v1233 = vpop.f32.mrb[0].mxu0
      %v1234 = vadd.f32 %v1073, %v1233
      %v1235 = vpop.f32.mrb[0].mxu0
      %1236 = vmatprep.mubr.bf16.mxu0 %v702
      %1237 = vmatmul.mubr.bf16.gmra.mrb[0].mxu0 %v701
      %v1238 = vpop.f32.mrb[0].mxu0
      %v1239 = vadd.f32 %v1078, %v1238
      %v1240 = vpop.f32.mrb[0].mxu0
      %v1241 = vpop.f32.mrb[0].mxu0
      %v1242 = vadd.f32 %v1081, %v1241
      %v1243 = vpop.f32.mrb[0].mxu0
      %1244 = vmatprep.mubr.bf16.mxu0 %v706
      %1245 = vmatmul.mubr.bf16.gmra.mrb[0].mxu0 %v705
      %v1246 = vpop.f32.mrb[0].mxu0
      %v1247 = vadd.f32 %v1086, %v1246
      %v1248 = vpop.f32.mrb[0].mxu0
      %v1249 = vpop.f32.mrb[0].mxu0
      %v1250 = vadd.f32 %v1089, %v1249
      %v1251 = vpop.f32.mrb[0].mxu0
      %1252 = vmatprep.mubr.bf16.mxu0 %v710
      %1253 = vmatmul.mubr.bf16.gmra.mrb[0].mxu0 %v709
      %v1254 = vpop.f32.mrb[0].mxu0
      %v1255 = vadd.f32 %v1094, %v1254
      %v1256 = vpop.f32.mrb[0].mxu0
      %v1257 = vpop.f32.mrb[0].mxu0
      %v1258 = vadd.f32 %v1097, %v1257
      %v1259 = vpop.f32.mrb[0].mxu0
      %1260 = vmatprep.mubr.bf16.mxu0 %v714
      %1261 = vmatmul.mubr.bf16.gmra.mrb[0].mxu0 %v713
      %v1262 = vpop.f32.mrb[0].mxu0
      %v1263 = vadd.f32 %v1102, %v1262
      %v1264 = vpop.f32.mrb[0].mxu0
      %v1265 = vpop.f32.mrb[0].mxu0
      %v1266 = vadd.f32 %v1105, %v1265
      %v1267 = vpop.f32.mrb[0].mxu0
      %1268 = vmatprep.mubr.bf16.mxu0 %v718
      %1269 = vmatmul.mubr.bf16.gmra.mrb[0].mxu0 %v717
      %v1270 = vpop.f32.mrb[0].mxu0
      %v1271 = vadd.f32 %v1110, %v1270
      %v1272 = vpop.f32.mrb[0].mxu0
      %v1273 = vpop.f32.mrb[0].mxu0
      %v1274 = vadd.f32 %v1113, %v1273
      %v1275 = vpop.f32.mrb[0].mxu0
      %1276 = vmatprep.mubr.bf16.mxu0 %v722
      %1277 = vmatmul.mubr.bf16.gmra.mrb[0].mxu0 %v721
      %v1278 = vpop.f32.mrb[0].mxu0
      %v1279 = vadd.f32 %v1118, %v1278
      %v1280 = vpop.f32.mrb[0].mxu0
      %v1281 = vpop.f32.mrb[0].mxu0
      %v1282 = vadd.f32 %v1121, %v1281
      %v1283 = vpop.f32.mrb[0].mxu0
      %1284 = vmatprep.mubr.bf16.mxu0 %v726
      %1285 = vmatmul.mubr.bf16.gmra.mrb[0].mxu0 %v725
      %v1286 = vpop.f32.mrb[0].mxu0
      %v1287 = vadd.f32 %v1126, %v1286
      %v1288 = vpop.f32.mrb[0].mxu0
      %v1289 = vpop.f32.mrb[0].mxu0
      %v1290 = vadd.f32 %v1129, %v1289
      %v1291 = vpop.f32.mrb[0].mxu0
      %1292 = vmatprep.mubr.bf16.mxu0 %v730
      %1293 = vmatmul.mubr.bf16.gmra.mrb[0].mxu0 %v729
      %v1294 = vpop.f32.mrb[0].mxu0
      %v1295 = vadd.f32 %v1134, %v1294
      %v1296 = vpop.f32.mrb[0].mxu0
      %v1297 = vpop.f32.mrb[0].mxu0
      %v1298 = vadd.f32 %v1137, %v1297
      %v1299 = vpop.f32.mrb[0].mxu0
      %1300 = vmatprep.mubr.bf16.mxu0 %v734
      %1301 = vmatmul.mubr.bf16.gmra.mrb[0].mxu0 %v733
      %v1302 = vpop.f32.mrb[0].mxu0
      %v1303 = vadd.f32 %v1142, %v1302
      %v1304 = vpop.f32.mrb[0].mxu0
      %v1305 = vpop.f32.mrb[0].mxu0
      %v1306 = vadd.f32 %v1145, %v1305
      %v1307 = vpop.f32.mrb[0].mxu0
      %1308 = vmatprep.mubr.bf16.mxu0 %v738
      %1309 = vmatmul.mubr.bf16.gmra.mrb[0].mxu0 %v737
      %v1310 = vpop.f32.mrb[0].mxu0
      %v1311 = vadd.f32 %v1150, %v1310
      %v1312 = vpop.f32.mrb[0].mxu0
      %v1313 = vpop.f32.mrb[0].mxu0
      %v1314 = vadd.f32 %v1153, %v1313
      %v1315 = vpop.f32.mrb[0].mxu0
      %1316 = vdwg.mxu0
      %v1317 = vadd.f32 %v319, %v1191
      %v1318 = vadd.f32 %v320, %v1194
      %v1319 = vadd.f32 %v321, %v1199
      %v1320 = vadd.f32 %v322, %v1202
      %v1321 = vadd.f32 %v323, %v1207
      %v1322 = vadd.f32 %v324, %v1210
      %v1323 = vadd.f32 %v325, %v1215
      %v1324 = vadd.f32 %v326, %v1218
      %v1325 = vadd.f32 %v327, %v1223
      %v1326 = vadd.f32 %v328, %v1226
      %v1327 = vadd.f32 %v329, %v1231
      %v1328 = vadd.f32 %v330, %v1234
      %v1329 = vadd.f32 %v331, %v1239
      %v1330 = vadd.f32 %v332, %v1242
      %v1331 = vadd.f32 %v333, %v1247
      %v1332 = vadd.f32 %v334, %v1250
      %v1333 = vadd.f32 %v335, %v1255
      %v1334 = vadd.f32 %v336, %v1258
      %v1335 = vadd.f32 %v337, %v1263
      %v1336 = vadd.f32 %v338, %v1266
      %v1337 = vadd.f32 %v339, %v1271
      %v1338 = vadd.f32 %v340, %v1274
      %v1339 = vadd.f32 %v341, %v1279
      %v1340 = vadd.f32 %v342, %v1282
      %v1341 = vadd.f32 %v343, %v1287
      %v1342 = vadd.f32 %v344, %v1290
      %v1343 = vadd.f32 %v345, %v1295
      %v1344 = vadd.f32 %v346, %v1298
      %v1345 = vadd.f32 %v347, %v1303
      %v1346 = vadd.f32 %v348, %v1306
      %v1347 = vadd.f32 %v349, %v1311
      %v1348 = vadd.f32 %v350, %v1314
      %1349 = vst [vmem:[#allocation2] sm:$0xff] %v1317
      %1350 = vst [vmem:[#allocation2 + $0x8] sm:$0xff] %v1318
      %1351 = vst [vmem:[#allocation2 + $0x10] sm:$0xff] %v1319
      %1352 = vst [vmem:[#allocation2 + $0x18] sm:$0xff] %v1320
      %1353 = vst [vmem:[#allocation2 + $0x20] sm:$0xff] %v1321
      %1354 = vst [vmem:[#allocation2 + $0x28] sm:$0xff] %v1322
      %1355 = vst [vmem:[#allocation2 + $0x30] sm:$0xff] %v1323
      %1356 = vst [vmem:[#allocation2 + $0x38] sm:$0xff] %v1324
      %1357 = vst [vmem:[#allocation2 + $0x40] sm:$0xff] %v1325
      %1358 = vst [vmem:[#allocation2 + $0x48] sm:$0xff] %v1326
      %1359 = vst [vmem:[#allocation2 + $0x50] sm:$0xff] %v1327
      %1360 = vst [vmem:[#allocation2 + $0x58] sm:$0xff] %v1328
      %1361 = vst [vmem:[#allocation2 + $0x60] sm:$0xff] %v1329
      %1362 = vst [vmem:[#allocation2 + $0x68] sm:$0xff] %v1330
      %1363 = vst [vmem:[#allocation2 + $0x70] sm:$0xff] %v1331
      %1364 = vst [vmem:[#allocation2 + $0x78] sm:$0xff] %v1332
      %1365 = vst [vmem:[#allocation2 + $0x80] sm:$0xff] %v1333
      %1366 = vst [vmem:[#allocation2 + $0x88] sm:$0xff] %v1334
      %1367 = vst [vmem:[#allocation2 + $0x90] sm:$0xff] %v1335
      %1368 = vst [vmem:[#allocation2 + $0x98] sm:$0xff] %v1336
      %1369 = vst [vmem:[#allocation2 + $0xa0] sm:$0xff] %v1337
      %1370 = vst [vmem:[#allocation2 + $0xa8] sm:$0xff] %v1338
      %1371 = vst [vmem:[#allocation2 + $0xb0] sm:$0xff] %v1339
      %1372 = vst [vmem:[#allocation2 + $0xb8] sm:$0xff] %v1340
      %1373 = vst [vmem:[#allocation2 + $0xc0] sm:$0xff] %v1341
      %1374 = vst [vmem:[#allocation2 + $0xc8] sm:$0xff] %v1342
      %1375 = vst [vmem:[#allocation2 + $0xd0] sm:$0xff] %v1343
      %1376 = vst [vmem:[#allocation2 + $0xd8] sm:$0xff] %v1344
      %1377 = vst [vmem:[#allocation2 + $0xe0] sm:$0xff] %v1345
      %1378 = vst [vmem:[#allocation2 + $0xe8] sm:$0xff] %v1346
      %1379 = vst [vmem:[#allocation2 + $0xf0] sm:$0xff] %v1347
      %1380 = vst [vmem:[#allocation2 + $0xf8] sm:$0xff] %v1348
      // Predicated region
      $region45: #{gcn_forward.4} parent=39 // pred_check
        %p1381 = pneg %p282
      $region46: #{gcn_forward.4} parent=39 // pred_check_branch
        %1383 = sbr.rel (%p1381) target = $region48
      $region47: #{gcn_forward.4} parent=39 // pred_region
        %v1384 = vld [vmem:[%s273] sm:$0xff]
        %v1385 = vld [vmem:[%s273 + $0x8] sm:$0xff]
        %v1386 = vld [vmem:[%s273 + $0x10] sm:$0xff]
        %v1387 = vld [vmem:[%s273 + $0x18] sm:$0xff]
        %v1388 = vld [vmem:[%s273 + $0x20] sm:$0xff]
        %v1389 = vld [vmem:[%s273 + $0x28] sm:$0xff]
        %v1390 = vld [vmem:[%s273 + $0x30] sm:$0xff]
        %v1391 = vld [vmem:[%s273 + $0x38] sm:$0xff]
        %v1392 = vld [vmem:[%s273 + $0x40] sm:$0xff]
        %v1393 = vld [vmem:[%s273 + $0x48] sm:$0xff]
        %v1394 = vld [vmem:[%s273 + $0x50] sm:$0xff]
        %v1395 = vld [vmem:[%s273 + $0x58] sm:$0xff]
        %v1396 = vld [vmem:[%s273 + $0x60] sm:$0xff]
        %v1397 = vld [vmem:[%s273 + $0x68] sm:$0xff]
        %v1398 = vld [vmem:[%s273 + $0x70] sm:$0xff]
        %v1399 = vld [vmem:[%s273 + $0x78] sm:$0xff]
        %v1400 = vld [vmem:[%s273 + $0x80] sm:$0xff]
        %v1401 = vld [vmem:[%s273 + $0x88] sm:$0xff]
        %v1402 = vld [vmem:[%s273 + $0x90] sm:$0xff]
        %v1403 = vld [vmem:[%s273 + $0x98] sm:$0xff]
        %v1404 = vld [vmem:[%s273 + $0xa0] sm:$0xff]
        %v1405 = vld [vmem:[%s273 + $0xa8] sm:$0xff]
        %v1406 = vld [vmem:[%s273 + $0xb0] sm:$0xff]
        %v1407 = vld [vmem:[%s273 + $0xb8] sm:$0xff]
        %v1408 = vld [vmem:[%s273 + $0xc0] sm:$0xff]
        %v1409 = vld [vmem:[%s273 + $0xc8] sm:$0xff]
        %v1410 = vld [vmem:[%s273 + $0xd0] sm:$0xff]
        %v1411 = vld [vmem:[%s273 + $0xd8] sm:$0xff]
        %v1412 = vld [vmem:[%s273 + $0xe0] sm:$0xff]
        %v1413 = vld [vmem:[%s273 + $0xe8] sm:$0xff]
        %v1414 = vld [vmem:[%s273 + $0xf0] sm:$0xff]
        %v1415 = vld [vmem:[%s273 + $0xf8] sm:$0xff]
        %v1416 = vld [vmem:[#allocation2] sm:$0xff]
        %v1417 = vld [vmem:[#allocation2 + $0x8] sm:$0xff]
        %v1418 = vld [vmem:[#allocation2 + $0x10] sm:$0xff]
        %v1419 = vld [vmem:[#allocation2 + $0x18] sm:$0xff]
        %v1420 = vld [vmem:[#allocation2 + $0x20] sm:$0xff]
        %v1421 = vld [vmem:[#allocation2 + $0x28] sm:$0xff]
        %v1422 = vld [vmem:[#allocation2 + $0x30] sm:$0xff]
        %v1423 = vld [vmem:[#allocation2 + $0x38] sm:$0xff]
        %v1424 = vld [vmem:[#allocation2 + $0x40] sm:$0xff]
        %v1425 = vld [vmem:[#allocation2 + $0x48] sm:$0xff]
        %v1426 = vld [vmem:[#allocation2 + $0x50] sm:$0xff]
        %v1427 = vld [vmem:[#allocation2 + $0x58] sm:$0xff]
        %v1428 = vld [vmem:[#allocation2 + $0x60] sm:$0xff]
        %v1429 = vld [vmem:[#allocation2 + $0x68] sm:$0xff]
        %v1430 = vld [vmem:[#allocation2 + $0x70] sm:$0xff]
        %v1431 = vld [vmem:[#allocation2 + $0x78] sm:$0xff]
        %v1432 = vld [vmem:[#allocation2 + $0x80] sm:$0xff]
        %v1433 = vld [vmem:[#allocation2 + $0x88] sm:$0xff]
        %v1434 = vld [vmem:[#allocation2 + $0x90] sm:$0xff]
        %v1435 = vld [vmem:[#allocation2 + $0x98] sm:$0xff]
        %v1436 = vld [vmem:[#allocation2 + $0xa0] sm:$0xff]
        %v1437 = vld [vmem:[#allocation2 + $0xa8] sm:$0xff]
        %v1438 = vld [vmem:[#allocation2 + $0xb0] sm:$0xff]
        %v1439 = vld [vmem:[#allocation2 + $0xb8] sm:$0xff]
        %v1440 = vld [vmem:[#allocation2 + $0xc0] sm:$0xff]
        %v1441 = vld [vmem:[#allocation2 + $0xc8] sm:$0xff]
        %v1442 = vld [vmem:[#allocation2 + $0xd0] sm:$0xff]
        %v1443 = vld [vmem:[#allocation2 + $0xd8] sm:$0xff]
        %v1444 = vld [vmem:[#allocation2 + $0xe0] sm:$0xff]
        %v1445 = vld [vmem:[#allocation2 + $0xe8] sm:$0xff]
        %v1446 = vld [vmem:[#allocation2 + $0xf0] sm:$0xff]
        %v1447 = vld [vmem:[#allocation2 + $0xf8] sm:$0xff]
        %1449 = vset.pattern.permute.xlu0 0
        %1450 = vperm.xlu0 %1449, %v1384
        %v1451 = vpop.permute.xlu0 %1450
        %1454 = vset.pattern.permute.xlu0 0
        %1455 = vperm.xlu0 %1454, %v1385
        %v1456 = vpop.permute.xlu0 %1455
        %1459 = vset.pattern.permute.xlu0 0
        %1460 = vperm.xlu0 %1459, %v1386
        %v1461 = vpop.permute.xlu0 %1460
        %1464 = vset.pattern.permute.xlu0 0
        %1465 = vperm.xlu0 %1464, %v1387
        %v1466 = vpop.permute.xlu0 %1465
        %1469 = vset.pattern.permute.xlu0 0
        %1470 = vperm.xlu0 %1469, %v1388
        %v1471 = vpop.permute.xlu0 %1470
        %1474 = vset.pattern.permute.xlu0 0
        %1475 = vperm.xlu0 %1474, %v1389
        %v1476 = vpop.permute.xlu0 %1475
        %1479 = vset.pattern.permute.xlu0 0
        %1480 = vperm.xlu0 %1479, %v1390
        %v1481 = vpop.permute.xlu0 %1480
        %1484 = vset.pattern.permute.xlu0 0
        %1485 = vperm.xlu0 %1484, %v1391
        %v1486 = vpop.permute.xlu0 %1485
        %1489 = vset.pattern.permute.xlu0 0
        %1490 = vperm.xlu0 %1489, %v1392
        %v1491 = vpop.permute.xlu0 %1490
        %1494 = vset.pattern.permute.xlu0 0
        %1495 = vperm.xlu0 %1494, %v1393
        %v1496 = vpop.permute.xlu0 %1495
        %1499 = vset.pattern.permute.xlu0 0
        %1500 = vperm.xlu0 %1499, %v1394
        %v1501 = vpop.permute.xlu0 %1500
        %1504 = vset.pattern.permute.xlu0 0
        %1505 = vperm.xlu0 %1504, %v1395
        %v1506 = vpop.permute.xlu0 %1505
        %1509 = vset.pattern.permute.xlu0 0
        %1510 = vperm.xlu0 %1509, %v1396
        %v1511 = vpop.permute.xlu0 %1510
        %1514 = vset.pattern.permute.xlu0 0
        %1515 = vperm.xlu0 %1514, %v1397
        %v1516 = vpop.permute.xlu0 %1515
        %1519 = vset.pattern.permute.xlu0 0
        %1520 = vperm.xlu0 %1519, %v1398
        %v1521 = vpop.permute.xlu0 %1520
        %1524 = vset.pattern.permute.xlu0 0
        %1525 = vperm.xlu0 %1524, %v1399
        %v1526 = vpop.permute.xlu0 %1525
        %1529 = vset.pattern.permute.xlu0 0
        %1530 = vperm.xlu0 %1529, %v1400
        %v1531 = vpop.permute.xlu0 %1530
        %1534 = vset.pattern.permute.xlu0 0
        %1535 = vperm.xlu0 %1534, %v1401
        %v1536 = vpop.permute.xlu0 %1535
        %1539 = vset.pattern.permute.xlu0 0
        %1540 = vperm.xlu0 %1539, %v1402
        %v1541 = vpop.permute.xlu0 %1540
        %1544 = vset.pattern.permute.xlu0 0
        %1545 = vperm.xlu0 %1544, %v1403
        %v1546 = vpop.permute.xlu0 %1545
        %1549 = vset.pattern.permute.xlu0 0
        %1550 = vperm.xlu0 %1549, %v1404
        %v1551 = vpop.permute.xlu0 %1550
        %1554 = vset.pattern.permute.xlu0 0
        %1555 = vperm.xlu0 %1554, %v1405
        %v1556 = vpop.permute.xlu0 %1555
        %1559 = vset.pattern.permute.xlu0 0
        %1560 = vperm.xlu0 %1559, %v1406
        %v1561 = vpop.permute.xlu0 %1560
        %1564 = vset.pattern.permute.xlu0 0
        %1565 = vperm.xlu0 %1564, %v1407
        %v1566 = vpop.permute.xlu0 %1565
        %1569 = vset.pattern.permute.xlu0 0
        %1570 = vperm.xlu0 %1569, %v1408
        %v1571 = vpop.permute.xlu0 %1570
        %1574 = vset.pattern.permute.xlu0 0
        %1575 = vperm.xlu0 %1574, %v1409
        %v1576 = vpop.permute.xlu0 %1575
        %1579 = vset.pattern.permute.xlu0 0
        %1580 = vperm.xlu0 %1579, %v1410
        %v1581 = vpop.permute.xlu0 %1580
        %1584 = vset.pattern.permute.xlu0 0
        %1585 = vperm.xlu0 %1584, %v1411
        %v1586 = vpop.permute.xlu0 %1585
        %1589 = vset.pattern.permute.xlu0 0
        %1590 = vperm.xlu0 %1589, %v1412
        %v1591 = vpop.permute.xlu0 %1590
        %1594 = vset.pattern.permute.xlu0 0
        %1595 = vperm.xlu0 %1594, %v1413
        %v1596 = vpop.permute.xlu0 %1595
        %1599 = vset.pattern.permute.xlu0 0
        %1600 = vperm.xlu0 %1599, %v1414
        %v1601 = vpop.permute.xlu0 %1600
        %1604 = vset.pattern.permute.xlu0 0
        %1605 = vperm.xlu0 %1604, %v1415
        %v1606 = vpop.permute.xlu0 %1605
        %v1608 = vmul.f32 %v1451, %v1416
        %v1609 = vmul.f32 %v1456, %v1417
        %v1610 = vmul.f32 %v1461, %v1418
        %v1611 = vmul.f32 %v1466, %v1419
        %v1612 = vmul.f32 %v1471, %v1420
        %v1613 = vmul.f32 %v1476, %v1421
        %v1614 = vmul.f32 %v1481, %v1422
        %v1615 = vmul.f32 %v1486, %v1423
        %v1616 = vmul.f32 %v1491, %v1424
        %v1617 = vmul.f32 %v1496, %v1425
        %v1618 = vmul.f32 %v1501, %v1426
        %v1619 = vmul.f32 %v1506, %v1427
        %v1620 = vmul.f32 %v1511, %v1428
        %v1621 = vmul.f32 %v1516, %v1429
        %v1622 = vmul.f32 %v1521, %v1430
        %v1623 = vmul.f32 %v1526, %v1431
        %v1624 = vmul.f32 %v1531, %v1432
        %v1625 = vmul.f32 %v1536, %v1433
        %v1626 = vmul.f32 %v1541, %v1434
        %v1627 = vmul.f32 %v1546, %v1435
        %v1628 = vmul.f32 %v1551, %v1436
        %v1629 = vmul.f32 %v1556, %v1437
        %v1630 = vmul.f32 %v1561, %v1438
        %v1631 = vmul.f32 %v1566, %v1439
        %v1632 = vmul.f32 %v1571, %v1440
        %v1633 = vmul.f32 %v1576, %v1441
        %v1634 = vmul.f32 %v1581, %v1442
        %v1635 = vmul.f32 %v1586, %v1443
        %v1636 = vmul.f32 %v1591, %v1444
        %v1637 = vmul.f32 %v1596, %v1445
        %v1638 = vmul.f32 %v1601, %v1446
        %v1639 = vmul.f32 %v1606, %v1447
        %v1640 = vld [vmem:[%s3] sm:$0x1]
        %v1642 = vlaneseq
        %v1643 = vshrl.u32 %v1642, 7
        %v1644 = vsub.s32 0, %v1643
        %v1645 = vrot.slane %v1640, %v1644
        %v1647 = vadd.f32 %v1608, %v1645
        %v1648 = vadd.f32 %v1609, %v1645
        %v1649 = vadd.f32 %v1610, %v1645
        %v1650 = vadd.f32 %v1611, %v1645
        %v1651 = vadd.f32 %v1612, %v1645
        %v1652 = vadd.f32 %v1613, %v1645
        %v1653 = vadd.f32 %v1614, %v1645
        %v1654 = vadd.f32 %v1615, %v1645
        %v1655 = vadd.f32 %v1616, %v1645
        %v1656 = vadd.f32 %v1617, %v1645
        %v1657 = vadd.f32 %v1618, %v1645
        %v1658 = vadd.f32 %v1619, %v1645
        %v1659 = vadd.f32 %v1620, %v1645
        %v1660 = vadd.f32 %v1621, %v1645
        %v1661 = vadd.f32 %v1622, %v1645
        %v1662 = vadd.f32 %v1623, %v1645
        %v1663 = vadd.f32 %v1624, %v1645
        %v1664 = vadd.f32 %v1625, %v1645
        %v1665 = vadd.f32 %v1626, %v1645
        %v1666 = vadd.f32 %v1627, %v1645
        %v1667 = vadd.f32 %v1628, %v1645
        %v1668 = vadd.f32 %v1629, %v1645
        %v1669 = vadd.f32 %v1630, %v1645
        %v1670 = vadd.f32 %v1631, %v1645
        %v1671 = vadd.f32 %v1632, %v1645
        %v1672 = vadd.f32 %v1633, %v1645
        %v1673 = vadd.f32 %v1634, %v1645
        %v1674 = vadd.f32 %v1635, %v1645
        %v1675 = vadd.f32 %v1636, %v1645
        %v1676 = vadd.f32 %v1637, %v1645
        %v1677 = vadd.f32 %v1638, %v1645
        %v1678 = vadd.f32 %v1639, %v1645
        %v1679 = vmax.f32 %v1647, 0.0
        %v1680 = vmax.f32 %v1648, 0.0
        %v1681 = vmax.f32 %v1649, 0.0
        %v1682 = vmax.f32 %v1650, 0.0
        %v1683 = vmax.f32 %v1651, 0.0
        %v1684 = vmax.f32 %v1652, 0.0
        %v1685 = vmax.f32 %v1653, 0.0
        %v1686 = vmax.f32 %v1654, 0.0
        %v1687 = vmax.f32 %v1655, 0.0
        %v1688 = vmax.f32 %v1656, 0.0
        %v1689 = vmax.f32 %v1657, 0.0
        %v1690 = vmax.f32 %v1658, 0.0
        %v1691 = vmax.f32 %v1659, 0.0
        %v1692 = vmax.f32 %v1660, 0.0
        %v1693 = vmax.f32 %v1661, 0.0
        %v1694 = vmax.f32 %v1662, 0.0
        %v1695 = vmax.f32 %v1663, 0.0
        %v1696 = vmax.f32 %v1664, 0.0
        %v1697 = vmax.f32 %v1665, 0.0
        %v1698 = vmax.f32 %v1666, 0.0
        %v1699 = vmax.f32 %v1667, 0.0
        %v1700 = vmax.f32 %v1668, 0.0
        %v1701 = vmax.f32 %v1669, 0.0
        %v1702 = vmax.f32 %v1670, 0.0
        %v1703 = vmax.f32 %v1671, 0.0
        %v1704 = vmax.f32 %v1672, 0.0
        %v1705 = vmax.f32 %v1673, 0.0
        %v1706 = vmax.f32 %v1674, 0.0
        %v1707 = vmax.f32 %v1675, 0.0
        %v1708 = vmax.f32 %v1676, 0.0
        %v1709 = vmax.f32 %v1677, 0.0
        %v1710 = vmax.f32 %v1678, 0.0
        %v1711 = vpack.c.bf16 %v1680, %v1679
        %v1712 = vpack.c.bf16 %v1682, %v1681
        %v1713 = vpack.c.bf16 %v1684, %v1683
        %v1714 = vpack.c.bf16 %v1686, %v1685
        %v1715 = vpack.c.bf16 %v1688, %v1687
        %v1716 = vpack.c.bf16 %v1690, %v1689
        %v1717 = vpack.c.bf16 %v1692, %v1691
        %v1718 = vpack.c.bf16 %v1694, %v1693
        %v1719 = vpack.c.bf16 %v1696, %v1695
        %v1720 = vpack.c.bf16 %v1698, %v1697
        %v1721 = vpack.c.bf16 %v1700, %v1699
        %v1722 = vpack.c.bf16 %v1702, %v1701
        %v1723 = vpack.c.bf16 %v1704, %v1703
        %v1724 = vpack.c.bf16 %v1706, %v1705
        %v1725 = vpack.c.bf16 %v1708, %v1707
        %v1726 = vpack.c.bf16 %v1710, %v1709
        %v1727 = vld [vmem:[%s4] sm:$0xf]
        %v1728 = vld [vmem:[%s4 + $0x4] sm:$0xf]
        %v1729 = vld [vmem:[%s4 + $0x8] sm:$0xf]
        %v1730 = vld [vmem:[%s4 + $0xc] sm:$0xf]
        %v1731 = vld [vmem:[%s4 + $0x10] sm:$0xf]
        %v1732 = vld [vmem:[%s4 + $0x14] sm:$0xf]
        %v1733 = vld [vmem:[%s4 + $0x18] sm:$0xf]
        %v1734 = vld [vmem:[%s4 + $0x1c] sm:$0xf]
        %v1735 = vld [vmem:[%s4 + $0x20] sm:$0xf]
        %v1736 = vld [vmem:[%s4 + $0x24] sm:$0xf]
        %v1737 = vld [vmem:[%s4 + $0x28] sm:$0xf]
        %v1738 = vld [vmem:[%s4 + $0x2c] sm:$0xf]
        %v1739 = vld [vmem:[%s4 + $0x30] sm:$0xf]
        %v1740 = vld [vmem:[%s4 + $0x34] sm:$0xf]
        %v1741 = vld [vmem:[%s4 + $0x38] sm:$0xf]
        %v1742 = vld [vmem:[%s4 + $0x3c] sm:$0xf]
        %v1759 = vunpack.c.l.b16 %v1727
        %v1760 = vunpack.c.l.b16 %v1728
        %v1761 = vunpack.c.l.b16 %v1729
        %v1762 = vunpack.c.l.b16 %v1730
        %v1763 = vunpack.c.l.b16 %v1731
        %v1764 = vunpack.c.l.b16 %v1732
        %v1765 = vunpack.c.l.b16 %v1733
        %v1766 = vunpack.c.l.b16 %v1734
        %v1767 = vunpack.c.l.b16 %v1735
        %v1768 = vunpack.c.l.b16 %v1736
        %v1769 = vunpack.c.l.b16 %v1737
        %v1770 = vunpack.c.l.b16 %v1738
        %v1771 = vunpack.c.l.b16 %v1739
        %v1772 = vunpack.c.l.b16 %v1740
        %v1773 = vunpack.c.l.b16 %v1741
        %v1774 = vunpack.c.l.b16 %v1742
        %v1775 = vpack.c.b16 %v1760, %v1759
        %v1776 = vpack.c.b16 %v1762, %v1761
        %v1777 = vpack.c.b16 %v1764, %v1763
        %v1778 = vpack.c.b16 %v1766, %v1765
        %v1779 = vpack.c.b16 %v1768, %v1767
        %v1780 = vpack.c.b16 %v1770, %v1769
        %v1781 = vpack.c.b16 %v1772, %v1771
        %v1782 = vpack.c.b16 %v1774, %v1773
        %1791 = vmatprep.subr.bf16.mxu0 0
        %1792 = vmatpush1.bf16.msra.mxu0 %v1775
        %1793 = vmatprep.subr.bf16.mxu0 0
        %1794 = vmatpush1.bf16.msra.mxu0 %v1776
        %1795 = vmatprep.subr.bf16.mxu0 0
        %1796 = vmatpush1.bf16.msra.mxu0 %v1777
        %1797 = vmatprep.subr.bf16.mxu0 0
        %1798 = vmatpush1.bf16.msra.mxu0 %v1778
        %1799 = vmatprep.subr.bf16.mxu0 0
        %1800 = vmatpush1.bf16.msra.mxu0 %v1779
        %1801 = vmatprep.subr.bf16.mxu0 0
        %1802 = vmatpush1.bf16.msra.mxu0 %v1780
        %1803 = vmatprep.subr.bf16.mxu0 0
        %1804 = vmatpush1.bf16.msra.mxu0 %v1781
        %1805 = vmatprep.subr.bf16.mxu0 0
        %1806 = vmatpush1.bf16.msra.mxu0 %v1782
        %1807 = vmatprep.subr.bf16.mxu0 0
        %1808 = vmatpush1.bf16.msra.mxu0 0
        %1809 = vmatprep.subr.bf16.mxu0 0
        %1810 = vmatpush1.bf16.msra.mxu0 0
        %1811 = vmatprep.subr.bf16.mxu0 0
        %1812 = vmatpush1.bf16.msra.mxu0 0
        %1813 = vmatprep.subr.bf16.mxu0 0
        %1814 = vmatpush1.bf16.msra.mxu0 0
        %1815 = vmatprep.subr.bf16.mxu0 0
        %1816 = vmatpush1.bf16.msra.mxu0 0
        %1817 = vmatprep.subr.bf16.mxu0 0
        %1818 = vmatpush1.bf16.msra.mxu0 0
        %1819 = vmatprep.subr.bf16.mxu0 0
        %1820 = vmatpush1.bf16.msra.mxu0 0
        %1821 = vmatprep.subr.bf16.mxu0 0
        %1822 = vmatpush1.bf16.msra.mxu0 0
        %1823 = vmatprep.mubr.bf16.mxu0 0
        %1824 = vmatmul.mubr.bf16.gmra.mrb[0].mxu0 %v1711
        %v1825 = vpop.f32.mrb[0].mxu0
        %v1826 = vadd.f32 0.0, %v1825
        %v1827 = vpop.f32.mrb[0].mxu0
        %v1828 = vpop.f32.mrb[0].mxu0
        %v1829 = vadd.f32 0.0, %v1828
        %v1830 = vpop.f32.mrb[0].mxu0
        %1831 = vmatprep.mubr.bf16.mxu0 0
        %1832 = vmatmul.mubr.bf16.gmra.mrb[0].mxu0 %v1712
        %v1833 = vpop.f32.mrb[0].mxu0
        %v1834 = vadd.f32 0.0, %v1833
        %v1835 = vpop.f32.mrb[0].mxu0
        %v1836 = vpop.f32.mrb[0].mxu0
        %v1837 = vadd.f32 0.0, %v1836
        %v1838 = vpop.f32.mrb[0].mxu0
        %1839 = vmatprep.mubr.bf16.mxu0 0
        %1840 = vmatmul.mubr.bf16.gmra.mrb[0].mxu0 %v1713
        %v1841 = vpop.f32.mrb[0].mxu0
        %v1842 = vadd.f32 0.0, %v1841
        %v1843 = vpop.f32.mrb[0].mxu0
        %v1844 = vpop.f32.mrb[0].mxu0
        %v1845 = vadd.f32 0.0, %v1844
        %v1846 = vpop.f32.mrb[0].mxu0
        %1847 = vmatprep.mubr.bf16.mxu0 0
        %1848 = vmatmul.mubr.bf16.gmra.mrb[0].mxu0 %v1714
        %v1849 = vpop.f32.mrb[0].mxu0
        %v1850 = vadd.f32 0.0, %v1849
        %v1851 = vpop.f32.mrb[0].mxu0
        %v1852 = vpop.f32.mrb[0].mxu0
        %v1853 = vadd.f32 0.0, %v1852
        %v1854 = vpop.f32.mrb[0].mxu0
        %1855 = vmatprep.mubr.bf16.mxu0 0
        %1856 = vmatmul.mubr.bf16.gmra.mrb[0].mxu0 %v1715
        %v1857 = vpop.f32.mrb[0].mxu0
        %v1858 = vadd.f32 0.0, %v1857
        %v1859 = vpop.f32.mrb[0].mxu0
        %v1860 = vpop.f32.mrb[0].mxu0
        %v1861 = vadd.f32 0.0, %v1860
        %v1862 = vpop.f32.mrb[0].mxu0
        %1863 = vmatprep.mubr.bf16.mxu0 0
        %1864 = vmatmul.mubr.bf16.gmra.mrb[0].mxu0 %v1716
        %v1865 = vpop.f32.mrb[0].mxu0
        %v1866 = vadd.f32 0.0, %v1865
        %v1867 = vpop.f32.mrb[0].mxu0
        %v1868 = vpop.f32.mrb[0].mxu0
        %v1869 = vadd.f32 0.0, %v1868
        %v1870 = vpop.f32.mrb[0].mxu0
        %1871 = vmatprep.mubr.bf16.mxu0 0
        %1872 = vmatmul.mubr.bf16.gmra.mrb[0].mxu0 %v1717
        %v1873 = vpop.f32.mrb[0].mxu0
        %v1874 = vadd.f32 0.0, %v1873
        %v1875 = vpop.f32.mrb[0].mxu0
        %v1876 = vpop.f32.mrb[0].mxu0
        %v1877 = vadd.f32 0.0, %v1876
        %v1878 = vpop.f32.mrb[0].mxu0
        %1879 = vmatprep.mubr.bf16.mxu0 0
        %1880 = vmatmul.mubr.bf16.gmra.mrb[0].mxu0 %v1718
        %v1881 = vpop.f32.mrb[0].mxu0
        %v1882 = vadd.f32 0.0, %v1881
        %v1883 = vpop.f32.mrb[0].mxu0
        %v1884 = vpop.f32.mrb[0].mxu0
        %v1885 = vadd.f32 0.0, %v1884
        %v1886 = vpop.f32.mrb[0].mxu0
        %1887 = vmatprep.mubr.bf16.mxu0 0
        %1888 = vmatmul.mubr.bf16.gmra.mrb[0].mxu0 %v1719
        %v1889 = vpop.f32.mrb[0].mxu0
        %v1890 = vadd.f32 0.0, %v1889
        %v1891 = vpop.f32.mrb[0].mxu0
        %v1892 = vpop.f32.mrb[0].mxu0
        %v1893 = vadd.f32 0.0, %v1892
        %v1894 = vpop.f32.mrb[0].mxu0
        %1895 = vmatprep.mubr.bf16.mxu0 0
        %1896 = vmatmul.mubr.bf16.gmra.mrb[0].mxu0 %v1720
        %v1897 = vpop.f32.mrb[0].mxu0
        %v1898 = vadd.f32 0.0, %v1897
        %v1899 = vpop.f32.mrb[0].mxu0
        %v1900 = vpop.f32.mrb[0].mxu0
        %v1901 = vadd.f32 0.0, %v1900
        %v1902 = vpop.f32.mrb[0].mxu0
        %1903 = vmatprep.mubr.bf16.mxu0 0
        %1904 = vmatmul.mubr.bf16.gmra.mrb[0].mxu0 %v1721
        %v1905 = vpop.f32.mrb[0].mxu0
        %v1906 = vadd.f32 0.0, %v1905
        %v1907 = vpop.f32.mrb[0].mxu0
        %v1908 = vpop.f32.mrb[0].mxu0
        %v1909 = vadd.f32 0.0, %v1908
        %v1910 = vpop.f32.mrb[0].mxu0
        %1911 = vmatprep.mubr.bf16.mxu0 0
        %1912 = vmatmul.mubr.bf16.gmra.mrb[0].mxu0 %v1722
        %v1913 = vpop.f32.mrb[0].mxu0
        %v1914 = vadd.f32 0.0, %v1913
        %v1915 = vpop.f32.mrb[0].mxu0
        %v1916 = vpop.f32.mrb[0].mxu0
        %v1917 = vadd.f32 0.0, %v1916
        %v1918 = vpop.f32.mrb[0].mxu0
        %1919 = vmatprep.mubr.bf16.mxu0 0
        %1920 = vmatmul.mubr.bf16.gmra.mrb[0].mxu0 %v1723
        %v1921 = vpop.f32.mrb[0].mxu0
        %v1922 = vadd.f32 0.0, %v1921
        %v1923 = vpop.f32.mrb[0].mxu0
        %v1924 = vpop.f32.mrb[0].mxu0
        %v1925 = vadd.f32 0.0, %v1924
        %v1926 = vpop.f32.mrb[0].mxu0
        %1927 = vmatprep.mubr.bf16.mxu0 0
        %1928 = vmatmul.mubr.bf16.gmra.mrb[0].mxu0 %v1724
        %v1929 = vpop.f32.mrb[0].mxu0
        %v1930 = vadd.f32 0.0, %v1929
        %v1931 = vpop.f32.mrb[0].mxu0
        %v1932 = vpop.f32.mrb[0].mxu0
        %v1933 = vadd.f32 0.0, %v1932
        %v1934 = vpop.f32.mrb[0].mxu0
        %1935 = vmatprep.mubr.bf16.mxu0 0
        %1936 = vmatmul.mubr.bf16.gmra.mrb[0].mxu0 %v1725
        %v1937 = vpop.f32.mrb[0].mxu0
        %v1938 = vadd.f32 0.0, %v1937
        %v1939 = vpop.f32.mrb[0].mxu0
        %v1940 = vpop.f32.mrb[0].mxu0
        %v1941 = vadd.f32 0.0, %v1940
        %v1942 = vpop.f32.mrb[0].mxu0
        %1943 = vmatprep.mubr.bf16.mxu0 0
        %1944 = vmatmul.mubr.bf16.gmra.mrb[0].mxu0 %v1726
        %v1945 = vpop.f32.mrb[0].mxu0
        %v1946 = vadd.f32 0.0, %v1945
        %v1947 = vpop.f32.mrb[0].mxu0
        %v1948 = vpop.f32.mrb[0].mxu0
        %v1949 = vadd.f32 0.0, %v1948
        %v1950 = vpop.f32.mrb[0].mxu0
        %1951 = vdwg.mxu0
        %v1952 = vmul.f32 %v1451, %v1826
        %v1953 = vmul.f32 %v1456, %v1829
        %v1954 = vmul.f32 %v1461, %v1834
        %v1955 = vmul.f32 %v1466, %v1837
        %v1956 = vmul.f32 %v1471, %v1842
        %v1957 = vmul.f32 %v1476, %v1845
        %v1958 = vmul.f32 %v1481, %v1850
        %v1959 = vmul.f32 %v1486, %v1853
        %v1960 = vmul.f32 %v1491, %v1858
        %v1961 = vmul.f32 %v1496, %v1861
        %v1962 = vmul.f32 %v1501, %v1866
        %v1963 = vmul.f32 %v1506, %v1869
        %v1964 = vmul.f32 %v1511, %v1874
        %v1965 = vmul.f32 %v1516, %v1877
        %v1966 = vmul.f32 %v1521, %v1882
        %v1967 = vmul.f32 %v1526, %v1885
        %v1968 = vmul.f32 %v1531, %v1890
        %v1969 = vmul.f32 %v1536, %v1893
        %v1970 = vmul.f32 %v1541, %v1898
        %v1971 = vmul.f32 %v1546, %v1901
        %v1972 = vmul.f32 %v1551, %v1906
        %v1973 = vmul.f32 %v1556, %v1909
        %v1974 = vmul.f32 %v1561, %v1914
        %v1975 = vmul.f32 %v1566, %v1917
        %v1976 = vmul.f32 %v1571, %v1922
        %v1977 = vmul.f32 %v1576, %v1925
        %v1978 = vmul.f32 %v1581, %v1930
        %v1979 = vmul.f32 %v1586, %v1933
        %v1980 = vmul.f32 %v1591, %v1938
        %v1981 = vmul.f32 %v1596, %v1941
        %v1982 = vmul.f32 %v1601, %v1946
        %v1983 = vmul.f32 %v1606, %v1949
        %v1984 = vpack.c.bf16 %v1953, %v1952
        %v1985 = vpack.c.bf16 %v1955, %v1954
        %v1986 = vpack.c.bf16 %v1957, %v1956
        %v1987 = vpack.c.bf16 %v1959, %v1958
        %v1988 = vpack.c.bf16 %v1961, %v1960
        %v1989 = vpack.c.bf16 %v1963, %v1962
        %v1990 = vpack.c.bf16 %v1965, %v1964
        %v1991 = vpack.c.bf16 %v1967, %v1966
        %v1992 = vpack.c.bf16 %v1969, %v1968
        %v1993 = vpack.c.bf16 %v1971, %v1970
        %v1994 = vpack.c.bf16 %v1973, %v1972
        %v1995 = vpack.c.bf16 %v1975, %v1974
        %v1996 = vpack.c.bf16 %v1977, %v1976
        %v1997 = vpack.c.bf16 %v1979, %v1978
        %v1998 = vpack.c.bf16 %v1981, %v1980
        %v1999 = vpack.c.bf16 %v1983, %v1982
        %v2016 = vunpack.c.l.b16 %v1984
        %v2017 = vunpack.c.h.b16 %v1984
        %v2018 = vunpack.c.l.b16 %v1985
        %v2019 = vunpack.c.h.b16 %v1985
        %v2020 = vunpack.c.l.b16 %v1986
        %v2021 = vunpack.c.h.b16 %v1986
        %v2022 = vunpack.c.l.b16 %v1987
        %v2023 = vunpack.c.h.b16 %v1987
        %v2024 = vunpack.c.l.b16 %v1988
        %v2025 = vunpack.c.h.b16 %v1988
        %v2026 = vunpack.c.l.b16 %v1989
        %v2027 = vunpack.c.h.b16 %v1989
        %v2028 = vunpack.c.l.b16 %v1990
        %v2029 = vunpack.c.h.b16 %v1990
        %v2030 = vunpack.c.l.b16 %v1991
        %v2031 = vunpack.c.h.b16 %v1991
        %v2032 = vunpack.c.l.b16 %v1992
        %v2033 = vunpack.c.h.b16 %v1992
        %v2034 = vunpack.c.l.b16 %v1993
        %v2035 = vunpack.c.h.b16 %v1993
        %v2036 = vunpack.c.l.b16 %v1994
        %v2037 = vunpack.c.h.b16 %v1994
        %v2038 = vunpack.c.l.b16 %v1995
        %v2039 = vunpack.c.h.b16 %v1995
        %v2040 = vunpack.c.l.b16 %v1996
        %v2041 = vunpack.c.h.b16 %v1996
        %v2042 = vunpack.c.l.b16 %v1997
        %v2043 = vunpack.c.h.b16 %v1997
        %v2044 = vunpack.c.l.b16 %v1998
        %v2045 = vunpack.c.h.b16 %v1998
        %v2046 = vunpack.c.l.b16 %v1999
        %v2047 = vunpack.c.h.b16 %v1999
        %v2048 = vpack.c.b16 %v2016, %v2016
        %v2049 = vpack.c.b16 %v2017, %v2017
        %v2050 = vpack.c.b16 %v2018, %v2018
        %v2051 = vpack.c.b16 %v2019, %v2019
        %v2052 = vpack.c.b16 %v2020, %v2020
        %v2053 = vpack.c.b16 %v2021, %v2021
        %v2054 = vpack.c.b16 %v2022, %v2022
        %v2055 = vpack.c.b16 %v2023, %v2023
        %v2056 = vpack.c.b16 %v2024, %v2024
        %v2057 = vpack.c.b16 %v2025, %v2025
        %v2058 = vpack.c.b16 %v2026, %v2026
        %v2059 = vpack.c.b16 %v2027, %v2027
        %v2060 = vpack.c.b16 %v2028, %v2028
        %v2061 = vpack.c.b16 %v2029, %v2029
        %v2062 = vpack.c.b16 %v2030, %v2030
        %v2063 = vpack.c.b16 %v2031, %v2031
        %v2064 = vpack.c.b16 %v2032, %v2032
        %v2065 = vpack.c.b16 %v2033, %v2033
        %v2066 = vpack.c.b16 %v2034, %v2034
        %v2067 = vpack.c.b16 %v2035, %v2035
        %v2068 = vpack.c.b16 %v2036, %v2036
        %v2069 = vpack.c.b16 %v2037, %v2037
        %v2070 = vpack.c.b16 %v2038, %v2038
        %v2071 = vpack.c.b16 %v2039, %v2039
        %v2072 = vpack.c.b16 %v2040, %v2040
        %v2073 = vpack.c.b16 %v2041, %v2041
        %v2074 = vpack.c.b16 %v2042, %v2042
        %v2075 = vpack.c.b16 %v2043, %v2043
        %v2076 = vpack.c.b16 %v2044, %v2044
        %v2077 = vpack.c.b16 %v2045, %v2045
        %v2078 = vpack.c.b16 %v2046, %v2046
        %v2079 = vpack.c.b16 %v2047, %v2047
        %2112 = vst [vmem:[%s279] sm:$0xf] %v2048
        %2113 = vst [vmem:[%s279 + $0x4] sm:$0xf] %v2049
        %2114 = vst [vmem:[%s279 + $0x8] sm:$0xf] %v2050
        %2115 = vst [vmem:[%s279 + $0xc] sm:$0xf] %v2051
        %2116 = vst [vmem:[%s279 + $0x10] sm:$0xf] %v2052
        %2117 = vst [vmem:[%s279 + $0x14] sm:$0xf] %v2053
        %2118 = vst [vmem:[%s279 + $0x18] sm:$0xf] %v2054
        %2119 = vst [vmem:[%s279 + $0x1c] sm:$0xf] %v2055
        %2120 = vst [vmem:[%s279 + $0x20] sm:$0xf] %v2056
        %2121 = vst [vmem:[%s279 + $0x24] sm:$0xf] %v2057
        %2122 = vst [vmem:[%s279 + $0x28] sm:$0xf] %v2058
        %2123 = vst [vmem:[%s279 + $0x2c] sm:$0xf] %v2059
        %2124 = vst [vmem:[%s279 + $0x30] sm:$0xf] %v2060
        %2125 = vst [vmem:[%s279 + $0x34] sm:$0xf] %v2061
        %2126 = vst [vmem:[%s279 + $0x38] sm:$0xf] %v2062
        %2127 = vst [vmem:[%s279 + $0x3c] sm:$0xf] %v2063
        %2128 = vst [vmem:[%s279 + $0x40] sm:$0xf] %v2064
        %2129 = vst [vmem:[%s279 + $0x44] sm:$0xf] %v2065
        %2130 = vst [vmem:[%s279 + $0x48] sm:$0xf] %v2066
        %2131 = vst [vmem:[%s279 + $0x4c] sm:$0xf] %v2067
        %2132 = vst [vmem:[%s279 + $0x50] sm:$0xf] %v2068
        %2133 = vst [vmem:[%s279 + $0x54] sm:$0xf] %v2069
        %2134 = vst [vmem:[%s279 + $0x58] sm:$0xf] %v2070
        %2135 = vst [vmem:[%s279 + $0x5c] sm:$0xf] %v2071
        %2136 = vst [vmem:[%s279 + $0x60] sm:$0xf] %v2072
        %2137 = vst [vmem:[%s279 + $0x64] sm:$0xf] %v2073
        %2138 = vst [vmem:[%s279 + $0x68] sm:$0xf] %v2074
        %2139 = vst [vmem:[%s279 + $0x6c] sm:$0xf] %v2075
        %2140 = vst [vmem:[%s279 + $0x70] sm:$0xf] %v2076
        %2141 = vst [vmem:[%s279 + $0x74] sm:$0xf] %v2077
        %2142 = vst [vmem:[%s279 + $0x78] sm:$0xf] %v2078
        %2143 = vst [vmem:[%s279 + $0x7c] sm:$0xf] %v2079
      $region48: #{gcn_forward.4} parent=39 // pred_fallthru
        _
      %s2144 = smul.u32 32, %s20
      %p2145 = scmp.lt.s32.totalorder %s2144, 63
      %s2146 = scalar_select %p2145, %s2144, 63
      %s2147 = smul.addr %s2146, 4
      %s2148 = scalar_lea.vmem %s5, %s2147
      // Predicated region
      $region49: #{gcn_forward.4} parent=39 // pred_check
        %p2149 = pneg %p163
      $region50: #{gcn_forward.4} parent=39 // pred_check_branch
        %2151 = sbr.rel (%p2149) target = $region52
      $region51: #{gcn_forward.4} parent=39 // pred_region
        %s2152 = smul.u32 32, %s20
      $region52: #{gcn_forward.4} parent=39 // pred_fallthru
        _
    $region40: #{gcn_forward.4} parent=5 // pred_fallthru
      _
    %p2153 = scmp.le.s32.totalorder 2, %s11
    // Predicated region
    $region53: #{gcn_forward.4} parent=5 // pred_check
      %p2154 = pneg %p2153
    $region54: #{gcn_forward.4} parent=5 // pred_check_branch
      %2156 = sbr.rel (%p2154) target = $region56
    $region55: #{gcn_forward.4} parent=5 // pred_region
      %s2157 = ssub.s32 %s11, 2
      // Predicated region
      $region57: #{gcn_forward.4} parent=55 // pred_check
        %p2158 = pneg %p169
      $region58: #{gcn_forward.4} parent=55 // pred_check_branch
        %2160 = sbr.rel (%p2158) target = $region60
      $region59: #{gcn_forward.4} parent=55 // pred_region
        %s2161 = smul.u32 32, %s22
        %p2162 = scmp.lt.s32.totalorder %s2161, 63
        %s2163 = scalar_select %p2162, %s2161, 63
        %s2164 = smul.addr %s2163, 4
        %s2165 = scalar_lea.vmem %s5, %s2164
      $region60: #{gcn_forward.4} parent=55 // pred_fallthru
        _
    $region56: #{gcn_forward.4} parent=5 // pred_fallthru
      _
  $region6: #{gcn_forward.4} parent=0 // loop_footer
    %s15 = sadd.s32 1, %s11
  $region7: #{gcn_forward.4} parent=0 // loop_footer_branch
    %10 = sbr.rel target = $region3
  $region8: #{gcn_forward.4} parent=0 // loop_exit
    _

// kernel: gcn_forward.5
$region0: #{gcn_forward.5}
  #allocation0 [shape = 'u32[]', space=smem, size = 0x4, offset = 0x4, fixed_abs, tag = 'smem constant byte address 0x4 - core index']
  #allocation1 [shape = 'u32[144,128]{1,0:T(1,128)}', space=vmem, size = 0x12000, scoped, tag = 'internal scratch']
  #allocation2 [shape = 'f32[256,128]{1,0:T(8,128)}', space=vmem, size = 0x20000, scoped, tag = 'scratch operand']
  %s0 = inlined_call_operand.vmem [shape: bf16[512,512], index: 0, kind: input, shape index: {}]
  %s1 = inlined_call_operand.vmem [shape: bf16[512,128], index: 1, kind: input, shape index: {}]
  %s2 = inlined_call_operand.vmem [shape: f32[512,1], index: 2, kind: input, shape index: {}]
  %s3 = inlined_call_operand.vmem [shape: f32[1,128], index: 3, kind: input, shape index: {}]
  %s4 = inlined_call_operand.vmem [shape: bf16[512,128], index: 4, kind: output, shape index: {}]
  %s5 = sld [smem:[#allocation0]]
  $region57: #{gcn_forward.5} parent=0
    _
  %s7 = ssub.s32 1, %s5
  %s8 = scalar_select 0, %s7, %s5
  loop: start=0, step=1, limit=4
  $region2: #{gcn_forward.5} parent=0 // loop_pre_header
    _
  $region3: #{gcn_forward.5} parent=0 // loop_header
    %s10 = sphi 0, %s14
    %p11 = scmp.ge.s32.totalorder %s10, 4
    %s17 = sphi 0, %s29
    %s18 = sphi 0, %s25
    %s19 = sphi 0, %s17
    %s20 = sphi 0, %s18
    %s21 = sphi 0, %s19
    %s22 = sphi 0, %s20
    %s34 = sphi 0, %s36
    %s37 = sphi 0, %s34
    %s38 = sphi 0, %s37
    %s54 = sphi 0, %s38
    %s58 = sphi 0, %s58
    %s60 = sphi 0, %s58
    %s61 = sphi 0, %s60
    %s75 = sphi 0, %s61
    %s81 = sphi 0, %s83
    %s84 = sphi 0, %s81
    %s85 = sphi 0, %s84
    %s101 = sphi 0, %s85
    %s105 = sphi 0, %s105
    %s107 = sphi 0, %s105
    %s108 = sphi 0, %s107
    %s122 = sphi 0, %s108
    %s128 = sphi 0, %s130
    %s131 = sphi 0, %s128
    %s132 = sphi 0, %s131
    %s148 = sphi 0, %s132
  $region4: #{gcn_forward.5} parent=0 // loop_header_branch
    %13 = sbr.rel (%p11) target = $region8
  $region5: #{gcn_forward.5} parent=0 // loop_body
    %s15 = ssub.s32 %s10, 1
    %s16 = ssub.s32 %s10, 2
    %s23 = sadd.s32 1, %s18
    %p24 = scmp.ge.s32.totalorder %s23, 1
    %s25 = scalar_select %p24, 0, %s23
    %s26 = sadd.s32 1, %s17
    %s27 = scalar_select %p24, %s26, %s17
    %p28 = scmp.ge.s32.totalorder %s27, 2
    %s29 = scalar_select %p28, 0, %s27
    %s30 = ssub.s32 %s17, %s29
    %s31 = ssub.s32 %s18, %s25
    %s32 = sor.u32 %s30, %s31
    %p33 = scmp.eq.s32.totalorder %s32, 0
    %s35 = sadd.s32 %s34, 1
    %s36 = scalar_select %p33, %s34, %s35
    %p39 = pneg %p33
    %p40 = scmp.eq.s32.totalorder %s10, 1
    %p41 = por %p39, %p40
    %p42 = scmp.ne.s32.totalorder %s34, %s37
    %p43 = scmp.eq.s32.totalorder %s10, 0
    %p44 = por %p42, %p43
    %p45 = scmp.ne.s32.totalorder %s34, %s37
    %p46 = scmp.eq.s32.totalorder %s15, 1
    %p47 = por %p45, %p46
    %p48 = scmp.ne.s32.totalorder %s37, %s38
    %p49 = scmp.eq.s32.totalorder %s15, 0
    %p50 = por %p48, %p49
    %p51 = scmp.ne.s32.totalorder %s37, %s38
    %p52 = scmp.eq.s32.totalorder %s16, 1
    %p53 = por %p51, %p52
    %p55 = scmp.ne.s32.totalorder %s38, %s54
    %p56 = scmp.eq.s32.totalorder %s16, 0
    %p57 = por %p55, %p56
    %s59 = sadd.s32 %s58, 1
    %p62 = scmp.eq.s32.totalorder %s10, 1
    %p63 = scmp.ne.s32.totalorder %s58, %s60
    %p64 = scmp.eq.s32.totalorder %s10, 0
    %p65 = por %p63, %p64
    %p66 = scmp.ne.s32.totalorder %s58, %s60
    %p67 = scmp.eq.s32.totalorder %s15, 1
    %p68 = por %p66, %p67
    %p69 = scmp.ne.s32.totalorder %s60, %s61
    %p70 = scmp.eq.s32.totalorder %s15, 0
    %p71 = por %p69, %p70
    %p72 = scmp.ne.s32.totalorder %s60, %s61
    %p73 = scmp.eq.s32.totalorder %s16, 1
    %p74 = por %p72, %p73
    %p76 = scmp.ne.s32.totalorder %s61, %s75
    %p77 = scmp.eq.s32.totalorder %s16, 0
    %p78 = por %p76, %p77
    %s79 = ssub.s32 %s17, %s29
    %p80 = scmp.eq.s32.totalorder %s79, 0
    %s82 = sadd.s32 %s81, 1
    %s83 = scalar_select %p80, %s81, %s82
    %p86 = pneg %p80
    %p87 = scmp.eq.s32.totalorder %s10, 1
    %p88 = por %p86, %p87
    %p89 = scmp.ne.s32.totalorder %s81, %s84
    %p90 = scmp.eq.s32.totalorder %s10, 0
    %p91 = por %p89, %p90
    %p92 = scmp.ne.s32.totalorder %s81, %s84
    %p93 = scmp.eq.s32.totalorder %s15, 1
    %p94 = por %p92, %p93
    %p95 = scmp.ne.s32.totalorder %s84, %s85
    %p96 = scmp.eq.s32.totalorder %s15, 0
    %p97 = por %p95, %p96
    %p98 = scmp.ne.s32.totalorder %s84, %s85
    %p99 = scmp.eq.s32.totalorder %s16, 1
    %p100 = por %p98, %p99
    %p102 = scmp.ne.s32.totalorder %s85, %s101
    %p103 = scmp.eq.s32.totalorder %s16, 0
    %p104 = por %p102, %p103
    %s106 = sadd.s32 %s105, 1
    %p109 = scmp.eq.s32.totalorder %s10, 1
    %p110 = scmp.ne.s32.totalorder %s105, %s107
    %p111 = scmp.eq.s32.totalorder %s10, 0
    %p112 = por %p110, %p111
    %p113 = scmp.ne.s32.totalorder %s105, %s107
    %p114 = scmp.eq.s32.totalorder %s15, 1
    %p115 = por %p113, %p114
    %p116 = scmp.ne.s32.totalorder %s107, %s108
    %p117 = scmp.eq.s32.totalorder %s15, 0
    %p118 = por %p116, %p117
    %p119 = scmp.ne.s32.totalorder %s107, %s108
    %p120 = scmp.eq.s32.totalorder %s16, 1
    %p121 = por %p119, %p120
    %p123 = scmp.ne.s32.totalorder %s108, %s122
    %p124 = scmp.eq.s32.totalorder %s16, 0
    %p125 = por %p123, %p124
    %s126 = ssub.s32 %s17, %s29
    %p127 = scmp.eq.s32.totalorder %s126, 0
    %s129 = sadd.s32 %s128, 1
    %s130 = scalar_select %p127, %s128, %s129
    %p133 = pneg %p127
    %p134 = scmp.eq.s32.totalorder %s10, 1
    %p135 = por %p133, %p134
    %p136 = scmp.ne.s32.totalorder %s128, %s131
    %p137 = scmp.eq.s32.totalorder %s10, 0
    %p138 = por %p136, %p137
    %p139 = scmp.ne.s32.totalorder %s128, %s131
    %p140 = scmp.eq.s32.totalorder %s15, 1
    %p141 = por %p139, %p140
    %p142 = scmp.ne.s32.totalorder %s131, %s132
    %p143 = scmp.eq.s32.totalorder %s15, 0
    %p144 = por %p142, %p143
    %p145 = scmp.ne.s32.totalorder %s131, %s132
    %p146 = scmp.eq.s32.totalorder %s16, 1
    %p147 = por %p145, %p146
    %p149 = scmp.ne.s32.totalorder %s132, %s148
    %p150 = scmp.eq.s32.totalorder %s16, 0
    %p151 = por %p149, %p150
    %p152 = scmp.le.s32.totalorder 1, %s10
    %p153 = scmp.lt.s32.totalorder %s10, 3
    %p154 = pnand %p152, %p153
    %p155 = pneg %p154
    // Predicated region
    $region9: #{gcn_forward.5} parent=5 // pred_check
      _
    $region10: #{gcn_forward.5} parent=5 // pred_check_branch
      %157 = sbr.rel (%p154) target = $region12
    $region11: #{gcn_forward.5} parent=5 // pred_region
      %s158 = ssub.s32 %s10, 1
      // Predicated region
      $region13: #{gcn_forward.5} parent=11 // pred_check
        %p159 = pneg %p71
      $region14: #{gcn_forward.5} parent=11 // pred_check_branch
        %161 = sbr.rel (%p159) target = $region16
      $region15: #{gcn_forward.5} parent=11 // pred_region
        _
      $region16: #{gcn_forward.5} parent=11 // pred_fallthru
        _
      // Predicated region
      $region17: #{gcn_forward.5} parent=11 // pred_check
        %p162 = pneg %p118
      $region18: #{gcn_forward.5} parent=11 // pred_check_branch
        %164 = sbr.rel (%p162) target = $region20
      $region19: #{gcn_forward.5} parent=11 // pred_region
        _
      $region20: #{gcn_forward.5} parent=11 // pred_fallthru
        _
    $region12: #{gcn_forward.5} parent=5 // pred_fallthru
      _
    %p165 = scmp.lt.s32.totalorder %s10, 2
    // Predicated region
    $region21: #{gcn_forward.5} parent=5 // pred_check
      %p166 = pneg %p165
    $region22: #{gcn_forward.5} parent=5 // pred_check_branch
      %168 = sbr.rel (%p166) target = $region24
    $region23: #{gcn_forward.5} parent=5 // pred_region
      // Predicated region
      $region25: #{gcn_forward.5} parent=23 // pred_check
        %p169 = pneg %p44
      $region26: #{gcn_forward.5} parent=23 // pred_check_branch
        %171 = sbr.rel (%p169) target = $region28
      $region27: #{gcn_forward.5} parent=23 // pred_region
        %s172 = smul.u32 32, %s17
        %s173 = smul.u32 4, %s18
        %p174 = scmp.lt.s32.totalorder %s172, 63
        %s175 = scalar_select %p174, %s172, 63
        %p176 = scmp.lt.s32.totalorder %s173, 3
        %s177 = scalar_select %p176, %s173, 3
        %s178 = smul.addr %s175, 4
        %s179 = sadd.s32 %s177, %s178
        %s180 = smul.addr %s179, 4
        %s181 = scalar_lea.vmem %s0, %s180
        %s182 = smul.u32 32, %s17
        %s183 = smul.u32 4, %s18
      $region28: #{gcn_forward.5} parent=23 // pred_fallthru
        _
      // Predicated region
      $region29: #{gcn_forward.5} parent=23 // pred_check
        %p184 = pneg %p91
      $region30: #{gcn_forward.5} parent=23 // pred_check_branch
        %186 = sbr.rel (%p184) target = $region32
      $region31: #{gcn_forward.5} parent=23 // pred_region
        %s187 = smul.u32 32, %s17
        %p188 = scmp.lt.s32.totalorder %s187, 63
        %s189 = scalar_select %p188, %s187, 63
        %s190 = smul.addr %s189, 8
        %s191 = scalar_lea.vmem %s2, %s190
        %s192 = smul.u32 32, %s17
      $region32: #{gcn_forward.5} parent=23 // pred_fallthru
        _
    $region24: #{gcn_forward.5} parent=5 // pred_fallthru
      _
    %p193 = scmp.le.s32.totalorder 1, %s10
    %p194 = scmp.lt.s32.totalorder %s10, 3
    %p195 = pnand %p193, %p194
    %p196 = pneg %p195
    // Predicated region
    $region33: #{gcn_forward.5} parent=5 // pred_check
      _
    $region34: #{gcn_forward.5} parent=5 // pred_check_branch
      %198 = sbr.rel (%p195) target = $region36
    $region35: #{gcn_forward.5} parent=5 // pred_region
      %s199 = ssub.s32 %s10, 1
      %s200 = smul.u32 32, %s19
      %s201 = smul.u32 4, %s20
      %p202 = scmp.lt.s32.totalorder %s200, 63
      %s203 = scalar_select %p202, %s200, 63
      %p204 = scmp.lt.s32.totalorder %s201, 3
      %s205 = scalar_select %p204, %s201, 3
      %s206 = smul.addr %s203, 4
      %s207 = sadd.s32 %s205, %s206
      %s208 = smul.addr %s207, 4
      %s209 = scalar_lea.vmem %s0, %s208
      %p210 = pneg %p50
      %p211 = pneg %p47
      %p212 = pneg %p71
      %p213 = pneg %p68
      %s214 = smul.u32 32, %s19
      %p215 = scmp.lt.s32.totalorder %s214, 63
      %s216 = scalar_select %p215, %s214, 63
      %s217 = smul.addr %s216, 8
      %s218 = scalar_lea.vmem %s2, %s217
      %p219 = pneg %p97
      %p220 = pneg %p94
      %p221 = pneg %p118
      %p222 = pneg %p115
      %p223 = pneg %p144
      %p224 = pneg %p141
      %s225 = smul.u32 32, %s19
      %p226 = scmp.lt.s32.totalorder %s225, 63
      %s227 = scalar_select %p226, %s225, 63
      %s228 = smul.addr %s227, 4
      %s229 = scalar_lea.vmem %s4, %s228
      %s230 = smul.u32 32, %s19
      %s231 = smul.u32 4, %s20
      %p232 = scmp.lt.s32.totalorder %s230, 63
      %s233 = scalar_select %p232, %s230, 63
      %p234 = scmp.lt.s32.totalorder %s231, 3
      %s235 = scalar_select %p234, %s231, 3
      %s236 = smul.addr %s233, 4
      %s237 = sadd.s32 %s235, %s236
      %s238 = smul.addr %s237, 4
      %s239 = scalar_lea.vmem %s0, %s238
      %s240 = smul.u32 32, %s19
      %s241 = smul.u32 4, %s20
      %s242 = smul.u32 32, %s19
      %p243 = scmp.lt.s32.totalorder %s242, 63
      %s244 = scalar_select %p243, %s242, 63
      %s245 = smul.addr %s244, 8
      %s246 = scalar_lea.vmem %s2, %s245
      %s247 = smul.u32 32, %s19
      %s248 = smul.u32 32, %s19
      %p249 = scmp.lt.s32.totalorder %s248, 63
      %s250 = scalar_select %p249, %s248, 63
      %s251 = smul.addr %s250, 4
      %s252 = scalar_lea.vmem %s4, %s251
      %s253 = smul.u32 32, %s19
      %p255 = scmp.eq.s32.totalorder %s20, 0
      // Predicated region
      $region37: #{gcn_forward.5} parent=35 // pred_check
        %p256 = pneg %p255
      $region38: #{gcn_forward.5} parent=35 // pred_check_branch
        %258 = sbr.rel (%p256) target = $region40
      $region39: #{gcn_forward.5} parent=35 // pred_region
        %259 = vst [vmem:[#allocation2] sm:$0xff] 0.0
        %260 = vst [vmem:[#allocation2 + $0x8] sm:$0xff] 0.0
        %261 = vst [vmem:[#allocation2 + $0x10] sm:$0xff] 0.0
        %262 = vst [vmem:[#allocation2 + $0x18] sm:$0xff] 0.0
        %263 = vst [vmem:[#allocation2 + $0x20] sm:$0xff] 0.0
        %264 = vst [vmem:[#allocation2 + $0x28] sm:$0xff] 0.0
        %265 = vst [vmem:[#allocation2 + $0x30] sm:$0xff] 0.0
        %266 = vst [vmem:[#allocation2 + $0x38] sm:$0xff] 0.0
        %267 = vst [vmem:[#allocation2 + $0x40] sm:$0xff] 0.0
        %268 = vst [vmem:[#allocation2 + $0x48] sm:$0xff] 0.0
        %269 = vst [vmem:[#allocation2 + $0x50] sm:$0xff] 0.0
        %270 = vst [vmem:[#allocation2 + $0x58] sm:$0xff] 0.0
        %271 = vst [vmem:[#allocation2 + $0x60] sm:$0xff] 0.0
        %272 = vst [vmem:[#allocation2 + $0x68] sm:$0xff] 0.0
        %273 = vst [vmem:[#allocation2 + $0x70] sm:$0xff] 0.0
        %274 = vst [vmem:[#allocation2 + $0x78] sm:$0xff] 0.0
        %275 = vst [vmem:[#allocation2 + $0x80] sm:$0xff] 0.0
        %276 = vst [vmem:[#allocation2 + $0x88] sm:$0xff] 0.0
        %277 = vst [vmem:[#allocation2 + $0x90] sm:$0xff] 0.0
        %278 = vst [vmem:[#allocation2 + $0x98] sm:$0xff] 0.0
        %279 = vst [vmem:[#allocation2 + $0xa0] sm:$0xff] 0.0
        %280 = vst [vmem:[#allocation2 + $0xa8] sm:$0xff] 0.0
        %281 = vst [vmem:[#allocation2 + $0xb0] sm:$0xff] 0.0
        %282 = vst [vmem:[#allocation2 + $0xb8] sm:$0xff] 0.0
        %283 = vst [vmem:[#allocation2 + $0xc0] sm:$0xff] 0.0
        %284 = vst [vmem:[#allocation2 + $0xc8] sm:$0xff] 0.0
        %285 = vst [vmem:[#allocation2 + $0xd0] sm:$0xff] 0.0
        %286 = vst [vmem:[#allocation2 + $0xd8] sm:$0xff] 0.0
        %287 = vst [vmem:[#allocation2 + $0xe0] sm:$0xff] 0.0
        %288 = vst [vmem:[#allocation2 + $0xe8] sm:$0xff] 0.0
        %289 = vst [vmem:[#allocation2 + $0xf0] sm:$0xff] 0.0
        %290 = vst [vmem:[#allocation2 + $0xf8] sm:$0xff] 0.0
      $region40: #{gcn_forward.5} parent=35 // pred_fallthru
        _
      %s291 = smul.u32 %s20, 512
      %v292 = vld [vmem:[#allocation2] sm:$0xff]
      %v293 = vld [vmem:[#allocation2 + $0x8] sm:$0xff]
      %v294 = vld [vmem:[#allocation2 + $0x10] sm:$0xff]
      %v295 = vld [vmem:[#allocation2 + $0x18] sm:$0xff]
      %v296 = vld [vmem:[#allocation2 + $0x20] sm:$0xff]
      %v297 = vld [vmem:[#allocation2 + $0x28] sm:$0xff]
      %v298 = vld [vmem:[#allocation2 + $0x30] sm:$0xff]
      %v299 = vld [vmem:[#allocation2 + $0x38] sm:$0xff]
      %v300 = vld [vmem:[#allocation2 + $0x40] sm:$0xff]
      %v301 = vld [vmem:[#allocation2 + $0x48] sm:$0xff]
      %v302 = vld [vmem:[#allocation2 + $0x50] sm:$0xff]
      %v303 = vld [vmem:[#allocation2 + $0x58] sm:$0xff]
      %v304 = vld [vmem:[#allocation2 + $0x60] sm:$0xff]
      %v305 = vld [vmem:[#allocation2 + $0x68] sm:$0xff]
      %v306 = vld [vmem:[#allocation2 + $0x70] sm:$0xff]
      %v307 = vld [vmem:[#allocation2 + $0x78] sm:$0xff]
      %v308 = vld [vmem:[#allocation2 + $0x80] sm:$0xff]
      %v309 = vld [vmem:[#allocation2 + $0x88] sm:$0xff]
      %v310 = vld [vmem:[#allocation2 + $0x90] sm:$0xff]
      %v311 = vld [vmem:[#allocation2 + $0x98] sm:$0xff]
      %v312 = vld [vmem:[#allocation2 + $0xa0] sm:$0xff]
      %v313 = vld [vmem:[#allocation2 + $0xa8] sm:$0xff]
      %v314 = vld [vmem:[#allocation2 + $0xb0] sm:$0xff]
      %v315 = vld [vmem:[#allocation2 + $0xb8] sm:$0xff]
      %v316 = vld [vmem:[#allocation2 + $0xc0] sm:$0xff]
      %v317 = vld [vmem:[#allocation2 + $0xc8] sm:$0xff]
      %v318 = vld [vmem:[#allocation2 + $0xd0] sm:$0xff]
      %v319 = vld [vmem:[#allocation2 + $0xd8] sm:$0xff]
      %v320 = vld [vmem:[#allocation2 + $0xe0] sm:$0xff]
      %v321 = vld [vmem:[#allocation2 + $0xe8] sm:$0xff]
      %v322 = vld [vmem:[#allocation2 + $0xf0] sm:$0xff]
      %v323 = vld [vmem:[#allocation2 + $0xf8] sm:$0xff]
      %v324 = vld [vmem:[%s239] sm:$0xff]
      %v325 = vld [vmem:[%s239 + $0x8] sm:$0xff]
      %v326 = vld [vmem:[%s239 + $0x10] sm:$0xff]
      %v327 = vld [vmem:[%s239 + $0x18] sm:$0xff]
      %v328 = vld [vmem:[%s239 + $0x20] sm:$0xff]
      %v329 = vld [vmem:[%s239 + $0x28] sm:$0xff]
      %v330 = vld [vmem:[%s239 + $0x30] sm:$0xff]
      %v331 = vld [vmem:[%s239 + $0x38] sm:$0xff]
      %v332 = vld [vmem:[%s239 + $0x40] sm:$0xff]
      %v333 = vld [vmem:[%s239 + $0x48] sm:$0xff]
      %v334 = vld [vmem:[%s239 + $0x50] sm:$0xff]
      %v335 = vld [vmem:[%s239 + $0x58] sm:$0xff]
      %v336 = vld [vmem:[%s239 + $0x60] sm:$0xff]
      %v337 = vld [vmem:[%s239 + $0x68] sm:$0xff]
      %v338 = vld [vmem:[%s239 + $0x70] sm:$0xff]
      %v339 = vld [vmem:[%s239 + $0x78] sm:$0xff]
      %v340 = vld [vmem:[%s239 + $0x80] sm:$0xff]
      %v341 = vld [vmem:[%s239 + $0x88] sm:$0xff]
      %v342 = vld [vmem:[%s239 + $0x90] sm:$0xff]
      %v343 = vld [vmem:[%s239 + $0x98] sm:$0xff]
      %v344 = vld [vmem:[%s239 + $0xa0] sm:$0xff]
      %v345 = vld [vmem:[%s239 + $0xa8] sm:$0xff]
      %v346 = vld [vmem:[%s239 + $0xb0] sm:$0xff]
      %v347 = vld [vmem:[%s239 + $0xb8] sm:$0xff]
      %v348 = vld [vmem:[%s239 + $0xc0] sm:$0xff]
      %v349 = vld [vmem:[%s239 + $0xc8] sm:$0xff]
      %v350 = vld [vmem:[%s239 + $0xd0] sm:$0xff]
      %v351 = vld [vmem:[%s239 + $0xd8] sm:$0xff]
      %v352 = vld [vmem:[%s239 + $0xe0] sm:$0xff]
      %v353 = vld [vmem:[%s239 + $0xe8] sm:$0xff]
      %v354 = vld [vmem:[%s239 + $0xf0] sm:$0xff]
      %v355 = vld [vmem:[%s239 + $0xf8] sm:$0xff]
      %v356 = vld [vmem:[%s239 + $0x100] sm:$0xff]
      %v357 = vld [vmem:[%s239 + $0x108] sm:$0xff]
      %v358 = vld [vmem:[%s239 + $0x110] sm:$0xff]
      %v359 = vld [vmem:[%s239 + $0x118] sm:$0xff]
      %v360 = vld [vmem:[%s239 + $0x120] sm:$0xff]
      %v361 = vld [vmem:[%s239 + $0x128] sm:$0xff]
      %v362 = vld [vmem:[%s239 + $0x130] sm:$0xff]
      %v363 = vld [vmem:[%s239 + $0x138] sm:$0xff]
      %v364 = vld [vmem:[%s239 + $0x140] sm:$0xff]
      %v365 = vld [vmem:[%s239 + $0x148] sm:$0xff]
      %v366 = vld [vmem:[%s239 + $0x150] sm:$0xff]
      %v367 = vld [vmem:[%s239 + $0x158] sm:$0xff]
      %v368 = vld [vmem:[%s239 + $0x160] sm:$0xff]
      %v369 = vld [vmem:[%s239 + $0x168] sm:$0xff]
      %v370 = vld [vmem:[%s239 + $0x170] sm:$0xff]
      %v371 = vld [vmem:[%s239 + $0x178] sm:$0xff]
      %v372 = vld [vmem:[%s239 + $0x180] sm:$0xff]
      %v373 = vld [vmem:[%s239 + $0x188] sm:$0xff]
      %v374 = vld [vmem:[%s239 + $0x190] sm:$0xff]
      %v375 = vld [vmem:[%s239 + $0x198] sm:$0xff]
      %v376 = vld [vmem:[%s239 + $0x1a0] sm:$0xff]
      %v377 = vld [vmem:[%s239 + $0x1a8] sm:$0xff]
      %v378 = vld [vmem:[%s239 + $0x1b0] sm:$0xff]
      %v379 = vld [vmem:[%s239 + $0x1b8] sm:$0xff]
      %v380 = vld [vmem:[%s239 + $0x1c0] sm:$0xff]
      %v381 = vld [vmem:[%s239 + $0x1c8] sm:$0xff]
      %v382 = vld [vmem:[%s239 + $0x1d0] sm:$0xff]
      %v383 = vld [vmem:[%s239 + $0x1d8] sm:$0xff]
      %v384 = vld [vmem:[%s239 + $0x1e0] sm:$0xff]
      %v385 = vld [vmem:[%s239 + $0x1e8] sm:$0xff]
      %v386 = vld [vmem:[%s239 + $0x1f0] sm:$0xff]
      %v387 = vld [vmem:[%s239 + $0x1f8] sm:$0xff]
      %s388 = sshra.s32 %s291, 3
      %s389 = sand.u32 %s291, 7
      %s390 = smul.addr %s388, 4
      %s391 = scalar_lea.vmem %s1, %s390
      %v392 = vld [vmem:[%s391] sm:$0xf]
      %v393 = vld [vmem:[%s391 + $0x4] sm:$0xf]
      %v394 = vld [vmem:[%s391 + $0x8] sm:$0xf]
      %v395 = vld [vmem:[%s391 + $0xc] sm:$0xf]
      %v396 = vld [vmem:[%s391 + $0x10] sm:$0xf]
      %v397 = vld [vmem:[%s391 + $0x14] sm:$0xf]
      %v398 = vld [vmem:[%s391 + $0x18] sm:$0xf]
      %v399 = vld [vmem:[%s391 + $0x1c] sm:$0xf]
      %v400 = vld [vmem:[%s391 + $0x20] sm:$0xf]
      %v401 = vld [vmem:[%s391 + $0x24] sm:$0xf]
      %v402 = vld [vmem:[%s391 + $0x28] sm:$0xf]
      %v403 = vld [vmem:[%s391 + $0x2c] sm:$0xf]
      %v404 = vld [vmem:[%s391 + $0x30] sm:$0xf]
      %v405 = vld [vmem:[%s391 + $0x34] sm:$0xf]
      %v406 = vld [vmem:[%s391 + $0x38] sm:$0xf]
      %v407 = vld [vmem:[%s391 + $0x3c] sm:$0xf]
      %v408 = vld [vmem:[%s391 + $0x40] sm:$0xf]
      %v409 = vld [vmem:[%s391 + $0x44] sm:$0xf]
      %v410 = vld [vmem:[%s391 + $0x48] sm:$0xf]
      %v411 = vld [vmem:[%s391 + $0x4c] sm:$0xf]
      %v412 = vld [vmem:[%s391 + $0x50] sm:$0xf]
      %v413 = vld [vmem:[%s391 + $0x54] sm:$0xf]
      %v414 = vld [vmem:[%s391 + $0x58] sm:$0xf]
      %v415 = vld [vmem:[%s391 + $0x5c] sm:$0xf]
      %v416 = vld [vmem:[%s391 + $0x60] sm:$0xf]
      %v417 = vld [vmem:[%s391 + $0x64] sm:$0xf]
      %v418 = vld [vmem:[%s391 + $0x68] sm:$0xf]
      %v419 = vld [vmem:[%s391 + $0x6c] sm:$0xf]
      %v420 = vld [vmem:[%s391 + $0x70] sm:$0xf]
      %v421 = vld [vmem:[%s391 + $0x74] sm:$0xf]
      %v422 = vld [vmem:[%s391 + $0x78] sm:$0xf]
      %v423 = vld [vmem:[%s391 + $0x7c] sm:$0xf]
      %v424 = vld [vmem:[%s391 + $0x80] sm:$0xf]
      %v425 = vld [vmem:[%s391 + $0x84] sm:$0xf]
      %v426 = vld [vmem:[%s391 + $0x88] sm:$0xf]
      %v427 = vld [vmem:[%s391 + $0x8c] sm:$0xf]
      %v428 = vld [vmem:[%s391 + $0x90] sm:$0xf]
      %v429 = vld [vmem:[%s391 + $0x94] sm:$0xf]
      %v430 = vld [vmem:[%s391 + $0x98] sm:$0xf]
      %v431 = vld [vmem:[%s391 + $0x9c] sm:$0xf]
      %v432 = vld [vmem:[%s391 + $0xa0] sm:$0xf]
      %v433 = vld [vmem:[%s391 + $0xa4] sm:$0xf]
      %v434 = vld [vmem:[%s391 + $0xa8] sm:$0xf]
      %v435 = vld [vmem:[%s391 + $0xac] sm:$0xf]
      %v436 = vld [vmem:[%s391 + $0xb0] sm:$0xf]
      %v437 = vld [vmem:[%s391 + $0xb4] sm:$0xf]
      %v438 = vld [vmem:[%s391 + $0xb8] sm:$0xf]
      %v439 = vld [vmem:[%s391 + $0xbc] sm:$0xf]
      %v440 = vld [vmem:[%s391 + $0xc0] sm:$0xf]
      %v441 = vld [vmem:[%s391 + $0xc4] sm:$0xf]
      %v442 = vld [vmem:[%s391 + $0xc8] sm:$0xf]
      %v443 = vld [vmem:[%s391 + $0xcc] sm:$0xf]
      %v444 = vld [vmem:[%s391 + $0xd0] sm:$0xf]
      %v445 = vld [vmem:[%s391 + $0xd4] sm:$0xf]
      %v446 = vld [vmem:[%s391 + $0xd8] sm:$0xf]
      %v447 = vld [vmem:[%s391 + $0xdc] sm:$0xf]
      %v448 = vld [vmem:[%s391 + $0xe0] sm:$0xf]
      %v449 = vld [vmem:[%s391 + $0xe4] sm:$0xf]
      %v450 = vld [vmem:[%s391 + $0xe8] sm:$0xf]
      %v451 = vld [vmem:[%s391 + $0xec] sm:$0xf]
      %v452 = vld [vmem:[%s391 + $0xf0] sm:$0xf]
      %v453 = vld [vmem:[%s391 + $0xf4] sm:$0xf]
      %v454 = vld [vmem:[%s391 + $0xf8] sm:$0xf]
      %v455 = vld [vmem:[%s391 + $0xfc] sm:$0xf]
      %v520 = vunpack.c.l.b16 %v324
      %v521 = vunpack.c.h.b16 %v324
      %v522 = vunpack.c.l.b16 %v325
      %v523 = vunpack.c.h.b16 %v325
      %v524 = vunpack.c.l.b16 %v326
      %v525 = vunpack.c.h.b16 %v326
      %v526 = vunpack.c.l.b16 %v327
      %v527 = vunpack.c.h.b16 %v327
      %v528 = vunpack.c.l.b16 %v328
      %v529 = vunpack.c.h.b16 %v328
      %v530 = vunpack.c.l.b16 %v329
      %v531 = vunpack.c.h.b16 %v329
      %v532 = vunpack.c.l.b16 %v330
      %v533 = vunpack.c.h.b16 %v330
      %v534 = vunpack.c.l.b16 %v331
      %v535 = vunpack.c.h.b16 %v331
      %v536 = vunpack.c.l.b16 %v332
      %v537 = vunpack.c.h.b16 %v332
      %v538 = vunpack.c.l.b16 %v333
      %v539 = vunpack.c.h.b16 %v333
      %v540 = vunpack.c.l.b16 %v334
      %v541 = vunpack.c.h.b16 %v334
      %v542 = vunpack.c.l.b16 %v335
      %v543 = vunpack.c.h.b16 %v335
      %v544 = vunpack.c.l.b16 %v336
      %v545 = vunpack.c.h.b16 %v336
      %v546 = vunpack.c.l.b16 %v337
      %v547 = vunpack.c.h.b16 %v337
      %v548 = vunpack.c.l.b16 %v338
      %v549 = vunpack.c.h.b16 %v338
      %v550 = vunpack.c.l.b16 %v339
      %v551 = vunpack.c.h.b16 %v339
      %v552 = vunpack.c.l.b16 %v340
      %v553 = vunpack.c.h.b16 %v340
      %v554 = vunpack.c.l.b16 %v341
      %v555 = vunpack.c.h.b16 %v341
      %v556 = vunpack.c.l.b16 %v342
      %v557 = vunpack.c.h.b16 %v342
      %v558 = vunpack.c.l.b16 %v343
      %v559 = vunpack.c.h.b16 %v343
      %v560 = vunpack.c.l.b16 %v344
      %v561 = vunpack.c.h.b16 %v344
      %v562 = vunpack.c.l.b16 %v345
      %v563 = vunpack.c.h.b16 %v345
      %v564 = vunpack.c.l.b16 %v346
      %v565 = vunpack.c.h.b16 %v346
      %v566 = vunpack.c.l.b16 %v347
      %v567 = vunpack.c.h.b16 %v347
      %v568 = vunpack.c.l.b16 %v348
      %v569 = vunpack.c.h.b16 %v348
      %v570 = vunpack.c.l.b16 %v349
      %v571 = vunpack.c.h.b16 %v349
      %v572 = vunpack.c.l.b16 %v350
      %v573 = vunpack.c.h.b16 %v350
      %v574 = vunpack.c.l.b16 %v351
      %v575 = vunpack.c.h.b16 %v351
      %v576 = vunpack.c.l.b16 %v352
      %v577 = vunpack.c.h.b16 %v352
      %v578 = vunpack.c.l.b16 %v353
      %v579 = vunpack.c.h.b16 %v353
      %v580 = vunpack.c.l.b16 %v354
      %v581 = vunpack.c.h.b16 %v354
      %v582 = vunpack.c.l.b16 %v355
      %v583 = vunpack.c.h.b16 %v355
      %v584 = vunpack.c.l.b16 %v356
      %v585 = vunpack.c.h.b16 %v356
      %v586 = vunpack.c.l.b16 %v357
      %v587 = vunpack.c.h.b16 %v357
      %v588 = vunpack.c.l.b16 %v358
      %v589 = vunpack.c.h.b16 %v358
      %v590 = vunpack.c.l.b16 %v359
      %v591 = vunpack.c.h.b16 %v359
      %v592 = vunpack.c.l.b16 %v360
      %v593 = vunpack.c.h.b16 %v360
      %v594 = vunpack.c.l.b16 %v361
      %v595 = vunpack.c.h.b16 %v361
      %v596 = vunpack.c.l.b16 %v362
      %v597 = vunpack.c.h.b16 %v362
      %v598 = vunpack.c.l.b16 %v363
      %v599 = vunpack.c.h.b16 %v363
      %v600 = vunpack.c.l.b16 %v364
      %v601 = vunpack.c.h.b16 %v364
      %v602 = vunpack.c.l.b16 %v365
      %v603 = vunpack.c.h.b16 %v365
      %v604 = vunpack.c.l.b16 %v366
      %v605 = vunpack.c.h.b16 %v366
      %v606 = vunpack.c.l.b16 %v367
      %v607 = vunpack.c.h.b16 %v367
      %v608 = vunpack.c.l.b16 %v368
      %v609 = vunpack.c.h.b16 %v368
      %v610 = vunpack.c.l.b16 %v369
      %v611 = vunpack.c.h.b16 %v369
      %v612 = vunpack.c.l.b16 %v370
      %v613 = vunpack.c.h.b16 %v370
      %v614 = vunpack.c.l.b16 %v371
      %v615 = vunpack.c.h.b16 %v371
      %v616 = vunpack.c.l.b16 %v372
      %v617 = vunpack.c.h.b16 %v372
      %v618 = vunpack.c.l.b16 %v373
      %v619 = vunpack.c.h.b16 %v373
      %v620 = vunpack.c.l.b16 %v374
      %v621 = vunpack.c.h.b16 %v374
      %v622 = vunpack.c.l.b16 %v375
      %v623 = vunpack.c.h.b16 %v375
      %v624 = vunpack.c.l.b16 %v376
      %v625 = vunpack.c.h.b16 %v376
      %v626 = vunpack.c.l.b16 %v377
      %v627 = vunpack.c.h.b16 %v377
      %v628 = vunpack.c.l.b16 %v378
      %v629 = vunpack.c.h.b16 %v378
      %v630 = vunpack.c.l.b16 %v379
      %v631 = vunpack.c.h.b16 %v379
      %v632 = vunpack.c.l.b16 %v380
      %v633 = vunpack.c.h.b16 %v380
      %v634 = vunpack.c.l.b16 %v381
      %v635 = vunpack.c.h.b16 %v381
      %v636 = vunpack.c.l.b16 %v382
      %v637 = vunpack.c.h.b16 %v382
      %v638 = vunpack.c.l.b16 %v383
      %v639 = vunpack.c.h.b16 %v383
      %v640 = vunpack.c.l.b16 %v384
      %v641 = vunpack.c.h.b16 %v384
      %v642 = vunpack.c.l.b16 %v385
      %v643 = vunpack.c.h.b16 %v385
      %v644 = vunpack.c.l.b16 %v386
      %v645 = vunpack.c.h.b16 %v386
      %v646 = vunpack.c.l.b16 %v387
      %v647 = vunpack.c.h.b16 %v387
      %v648 = vpack.c.b16 %v524, %v520
      %v649 = vpack.c.b16 %v525, %v521
      %v650 = vpack.c.b16 %v526, %v522
      %v651 = vpack.c.b16 %v527, %v523
      %v652 = vpack.c.b16 %v532, %v528
      %v653 = vpack.c.b16 %v533, %v529
      %v654 = vpack.c.b16 %v534, %v530
      %v655 = vpack.c.b16 %v535, %v531
      %v656 = vpack.c.b16 %v540, %v536
      %v657 = vpack.c.b16 %v541, %v537
      %v658 = vpack.c.b16 %v542, %v538
      %v659 = vpack.c.b16 %v543, %v539
      %v660 = vpack.c.b16 %v548, %v544
      %v661 = vpack.c.b16 %v549, %v545
      %v662 = vpack.c.b16 %v550, %v546
      %v663 = vpack.c.b16 %v551, %v547
      %v664 = vpack.c.b16 %v556, %v552
      %v665 = vpack.c.b16 %v557, %v553
      %v666 = vpack.c.b16 %v558, %v554
      %v667 = vpack.c.b16 %v559, %v555
      %v668 = vpack.c.b16 %v564, %v560
      %v669 = vpack.c.b16 %v565, %v561
      %v670 = vpack.c.b16 %v566, %v562
      %v671 = vpack.c.b16 %v567, %v563
      %v672 = vpack.c.b16 %v572, %v568
      %v673 = vpack.c.b16 %v573, %v569
      %v674 = vpack.c.b16 %v574, %v570
      %v675 = vpack.c.b16 %v575, %v571
      %v676 = vpack.c.b16 %v580, %v576
      %v677 = vpack.c.b16 %v581, %v577
      %v678 = vpack.c.b16 %v582, %v578
      %v679 = vpack.c.b16 %v583, %v579
      %v680 = vpack.c.b16 %v588, %v584
      %v681 = vpack.c.b16 %v589, %v585
      %v682 = vpack.c.b16 %v590, %v586
      %v683 = vpack.c.b16 %v591, %v587
      %v684 = vpack.c.b16 %v596, %v592
      %v685 = vpack.c.b16 %v597, %v593
      %v686 = vpack.c.b16 %v598, %v594
      %v687 = vpack.c.b16 %v599, %v595
      %v688 = vpack.c.b16 %v604, %v600
      %v689 = vpack.c.b16 %v605, %v601
      %v690 = vpack.c.b16 %v606, %v602
      %v691 = vpack.c.b16 %v607, %v603
      %v692 = vpack.c.b16 %v612, %v608
      %v693 = vpack.c.b16 %v613, %v609
      %v694 = vpack.c.b16 %v614, %v610
      %v695 = vpack.c.b16 %v615, %v611
      %v696 = vpack.c.b16 %v620, %v616
      %v697 = vpack.c.b16 %v621, %v617
      %v698 = vpack.c.b16 %v622, %v618
      %v699 = vpack.c.b16 %v623, %v619
      %v700 = vpack.c.b16 %v628, %v624
      %v701 = vpack.c.b16 %v629, %v625
      %v702 = vpack.c.b16 %v630, %v626
      %v703 = vpack.c.b16 %v631, %v627
      %v704 = vpack.c.b16 %v636, %v632
      %v705 = vpack.c.b16 %v637, %v633
      %v706 = vpack.c.b16 %v638, %v634
      %v707 = vpack.c.b16 %v639, %v635
      %v708 = vpack.c.b16 %v644, %v640
      %v709 = vpack.c.b16 %v645, %v641
      %v710 = vpack.c.b16 %v646, %v642
      %v711 = vpack.c.b16 %v647, %v643
      %v840 = vunpack.c.l.b16 %v392
      %v841 = vunpack.c.l.b16 %v393
      %v842 = vunpack.c.l.b16 %v394
      %v843 = vunpack.c.l.b16 %v395
      %v844 = vunpack.c.l.b16 %v396
      %v845 = vunpack.c.l.b16 %v397
      %v846 = vunpack.c.l.b16 %v398
      %v847 = vunpack.c.l.b16 %v399
      %v848 = vunpack.c.l.b16 %v400
      %v849 = vunpack.c.l.b16 %v401
      %v850 = vunpack.c.l.b16 %v402
      %v851 = vunpack.c.l.b16 %v403
      %v852 = vunpack.c.l.b16 %v404
      %v853 = vunpack.c.l.b16 %v405
      %v854 = vunpack.c.l.b16 %v406
      %v855 = vunpack.c.l.b16 %v407
      %v856 = vunpack.c.l.b16 %v408
      %v857 = vunpack.c.l.b16 %v409
      %v858 = vunpack.c.l.b16 %v410
      %v859 = vunpack.c.l.b16 %v411
      %v860 = vunpack.c.l.b16 %v412
      %v861 = vunpack.c.l.b16 %v413
      %v862 = vunpack.c.l.b16 %v414
      %v863 = vunpack.c.l.b16 %v415
      %v864 = vunpack.c.l.b16 %v416
      %v865 = vunpack.c.l.b16 %v417
      %v866 = vunpack.c.l.b16 %v418
      %v867 = vunpack.c.l.b16 %v419
      %v868 = vunpack.c.l.b16 %v420
      %v869 = vunpack.c.l.b16 %v421
      %v870 = vunpack.c.l.b16 %v422
      %v871 = vunpack.c.l.b16 %v423
      %v872 = vunpack.c.l.b16 %v424
      %v873 = vunpack.c.l.b16 %v425
      %v874 = vunpack.c.l.b16 %v426
      %v875 = vunpack.c.l.b16 %v427
      %v876 = vunpack.c.l.b16 %v428
      %v877 = vunpack.c.l.b16 %v429
      %v878 = vunpack.c.l.b16 %v430
      %v879 = vunpack.c.l.b16 %v431
      %v880 = vunpack.c.l.b16 %v432
      %v881 = vunpack.c.l.b16 %v433
      %v882 = vunpack.c.l.b16 %v434
      %v883 = vunpack.c.l.b16 %v435
      %v884 = vunpack.c.l.b16 %v436
      %v885 = vunpack.c.l.b16 %v437
      %v886 = vunpack.c.l.b16 %v438
      %v887 = vunpack.c.l.b16 %v439
      %v888 = vunpack.c.l.b16 %v440
      %v889 = vunpack.c.l.b16 %v441
      %v890 = vunpack.c.l.b16 %v442
      %v891 = vunpack.c.l.b16 %v443
      %v892 = vunpack.c.l.b16 %v444
      %v893 = vunpack.c.l.b16 %v445
      %v894 = vunpack.c.l.b16 %v446
      %v895 = vunpack.c.l.b16 %v447
      %v896 = vunpack.c.l.b16 %v448
      %v897 = vunpack.c.l.b16 %v449
      %v898 = vunpack.c.l.b16 %v450
      %v899 = vunpack.c.l.b16 %v451
      %v900 = vunpack.c.l.b16 %v452
      %v901 = vunpack.c.l.b16 %v453
      %v902 = vunpack.c.l.b16 %v454
      %v903 = vunpack.c.l.b16 %v455
      %v904 = vpack.c.b16 %v841, %v840
      %v905 = vpack.c.b16 %v843, %v842
      %v906 = vpack.c.b16 %v845, %v844
      %v907 = vpack.c.b16 %v847, %v846
      %v908 = vpack.c.b16 %v849, %v848
      %v909 = vpack.c.b16 %v851, %v850
      %v910 = vpack.c.b16 %v853, %v852
      %v911 = vpack.c.b16 %v855, %v854
      %v912 = vpack.c.b16 %v857, %v856
      %v913 = vpack.c.b16 %v859, %v858
      %v914 = vpack.c.b16 %v861, %v860
      %v915 = vpack.c.b16 %v863, %v862
      %v916 = vpack.c.b16 %v865, %v864
      %v917 = vpack.c.b16 %v867, %v866
      %v918 = vpack.c.b16 %v869, %v868
      %v919 = vpack.c.b16 %v871, %v870
      %v920 = vpack.c.b16 %v873, %v872
      %v921 = vpack.c.b16 %v875, %v874
      %v922 = vpack.c.b16 %v877, %v876
      %v923 = vpack.c.b16 %v879, %v878
      %v924 = vpack.c.b16 %v881, %v880
      %v925 = vpack.c.b16 %v883, %v882
      %v926 = vpack.c.b16 %v885, %v884
      %v927 = vpack.c.b16 %v887, %v886
      %v928 = vpack.c.b16 %v889, %v888
      %v929 = vpack.c.b16 %v891, %v890
      %v930 = vpack.c.b16 %v893, %v892
      %v931 = vpack.c.b16 %v895, %v894
      %v932 = vpack.c.b16 %v897, %v896
      %v933 = vpack.c.b16 %v899, %v898
      %v934 = vpack.c.b16 %v901, %v900
      %v935 = vpack.c.b16 %v903, %v902
      %968 = vmatprep.subr.bf16.mxu0 0
      %969 = vmatpush1.bf16.msra.mxu0 %v904
      %970 = vmatprep.subr.bf16.mxu0 0
      %971 = vmatpush1.bf16.msra.mxu0 %v905
      %972 = vmatprep.subr.bf16.mxu0 0
      %973 = vmatpush1.bf16.msra.mxu0 %v906
      %974 = vmatprep.subr.bf16.mxu0 0
      %975 = vmatpush1.bf16.msra.mxu0 %v907
      %976 = vmatprep.subr.bf16.mxu0 0
      %977 = vmatpush1.bf16.msra.mxu0 %v908
      %978 = vmatprep.subr.bf16.mxu0 0
      %979 = vmatpush1.bf16.msra.mxu0 %v909
      %980 = vmatprep.subr.bf16.mxu0 0
      %981 = vmatpush1.bf16.msra.mxu0 %v910
      %982 = vmatprep.subr.bf16.mxu0 0
      %983 = vmatpush1.bf16.msra.mxu0 %v911
      %984 = vmatprep.subr.bf16.mxu0 0
      %985 = vmatpush1.bf16.msra.mxu0 %v912
      %986 = vmatprep.subr.bf16.mxu0 0
      %987 = vmatpush1.bf16.msra.mxu0 %v913
      %988 = vmatprep.subr.bf16.mxu0 0
      %989 = vmatpush1.bf16.msra.mxu0 %v914
      %990 = vmatprep.subr.bf16.mxu0 0
      %991 = vmatpush1.bf16.msra.mxu0 %v915
      %992 = vmatprep.subr.bf16.mxu0 0
      %993 = vmatpush1.bf16.msra.mxu0 %v916
      %994 = vmatprep.subr.bf16.mxu0 0
      %995 = vmatpush1.bf16.msra.mxu0 %v917
      %996 = vmatprep.subr.bf16.mxu0 0
      %997 = vmatpush1.bf16.msra.mxu0 %v918
      %998 = vmatprep.subr.bf16.mxu0 0
      %999 = vmatpush1.bf16.msra.mxu0 %v919
      %1000 = vmatprep.mubr.bf16.mxu0 %v649
      %1001 = vmatmul.mubr.bf16.gmra.mrb[0].mxu0 %v648
      %v1002 = vpop.f32.mrb[0].mxu0
      %v1003 = vadd.f32 0.0, %v1002
      %v1004 = vpop.f32.mrb[0].mxu0
      %v1005 = vpop.f32.mrb[0].mxu0
      %v1006 = vadd.f32 0.0, %v1005
      %v1007 = vpop.f32.mrb[0].mxu0
      %1008 = vmatprep.mubr.bf16.mxu0 %v653
      %1009 = vmatmul.mubr.bf16.gmra.mrb[0].mxu0 %v652
      %v1010 = vpop.f32.mrb[0].mxu0
      %v1011 = vadd.f32 0.0, %v1010
      %v1012 = vpop.f32.mrb[0].mxu0
      %v1013 = vpop.f32.mrb[0].mxu0
      %v1014 = vadd.f32 0.0, %v1013
      %v1015 = vpop.f32.mrb[0].mxu0
      %1016 = vmatprep.mubr.bf16.mxu0 %v657
      %1017 = vmatmul.mubr.bf16.gmra.mrb[0].mxu0 %v656
      %v1018 = vpop.f32.mrb[0].mxu0
      %v1019 = vadd.f32 0.0, %v1018
      %v1020 = vpop.f32.mrb[0].mxu0
      %v1021 = vpop.f32.mrb[0].mxu0
      %v1022 = vadd.f32 0.0, %v1021
      %v1023 = vpop.f32.mrb[0].mxu0
      %1024 = vmatprep.mubr.bf16.mxu0 %v661
      %1025 = vmatmul.mubr.bf16.gmra.mrb[0].mxu0 %v660
      %v1026 = vpop.f32.mrb[0].mxu0
      %v1027 = vadd.f32 0.0, %v1026
      %v1028 = vpop.f32.mrb[0].mxu0
      %v1029 = vpop.f32.mrb[0].mxu0
      %v1030 = vadd.f32 0.0, %v1029
      %v1031 = vpop.f32.mrb[0].mxu0
      %1032 = vmatprep.mubr.bf16.mxu0 %v665
      %1033 = vmatmul.mubr.bf16.gmra.mrb[0].mxu0 %v664
      %v1034 = vpop.f32.mrb[0].mxu0
      %v1035 = vadd.f32 0.0, %v1034
      %v1036 = vpop.f32.mrb[0].mxu0
      %v1037 = vpop.f32.mrb[0].mxu0
      %v1038 = vadd.f32 0.0, %v1037
      %v1039 = vpop.f32.mrb[0].mxu0
      %1040 = vmatprep.mubr.bf16.mxu0 %v669
      %1041 = vmatmul.mubr.bf16.gmra.mrb[0].mxu0 %v668
      %v1042 = vpop.f32.mrb[0].mxu0
      %v1043 = vadd.f32 0.0, %v1042
      %v1044 = vpop.f32.mrb[0].mxu0
      %v1045 = vpop.f32.mrb[0].mxu0
      %v1046 = vadd.f32 0.0, %v1045
      %v1047 = vpop.f32.mrb[0].mxu0
      %1048 = vmatprep.mubr.bf16.mxu0 %v673
      %1049 = vmatmul.mubr.bf16.gmra.mrb[0].mxu0 %v672
      %v1050 = vpop.f32.mrb[0].mxu0
      %v1051 = vadd.f32 0.0, %v1050
      %v1052 = vpop.f32.mrb[0].mxu0
      %v1053 = vpop.f32.mrb[0].mxu0
      %v1054 = vadd.f32 0.0, %v1053
      %v1055 = vpop.f32.mrb[0].mxu0
      %1056 = vmatprep.mubr.bf16.mxu0 %v677
      %1057 = vmatmul.mubr.bf16.gmra.mrb[0].mxu0 %v676
      %v1058 = vpop.f32.mrb[0].mxu0
      %v1059 = vadd.f32 0.0, %v1058
      %v1060 = vpop.f32.mrb[0].mxu0
      %v1061 = vpop.f32.mrb[0].mxu0
      %v1062 = vadd.f32 0.0, %v1061
      %v1063 = vpop.f32.mrb[0].mxu0
      %1064 = vmatprep.mubr.bf16.mxu0 %v681
      %1065 = vmatmul.mubr.bf16.gmra.mrb[0].mxu0 %v680
      %v1066 = vpop.f32.mrb[0].mxu0
      %v1067 = vadd.f32 0.0, %v1066
      %v1068 = vpop.f32.mrb[0].mxu0
      %v1069 = vpop.f32.mrb[0].mxu0
      %v1070 = vadd.f32 0.0, %v1069
      %v1071 = vpop.f32.mrb[0].mxu0
      %1072 = vmatprep.mubr.bf16.mxu0 %v685
      %1073 = vmatmul.mubr.bf16.gmra.mrb[0].mxu0 %v684
      %v1074 = vpop.f32.mrb[0].mxu0
      %v1075 = vadd.f32 0.0, %v1074
      %v1076 = vpop.f32.mrb[0].mxu0
      %v1077 = vpop.f32.mrb[0].mxu0
      %v1078 = vadd.f32 0.0, %v1077
      %v1079 = vpop.f32.mrb[0].mxu0
      %1080 = vmatprep.mubr.bf16.mxu0 %v689
      %1081 = vmatmul.mubr.bf16.gmra.mrb[0].mxu0 %v688
      %v1082 = vpop.f32.mrb[0].mxu0
      %v1083 = vadd.f32 0.0, %v1082
      %v1084 = vpop.f32.mrb[0].mxu0
      %v1085 = vpop.f32.mrb[0].mxu0
      %v1086 = vadd.f32 0.0, %v1085
      %v1087 = vpop.f32.mrb[0].mxu0
      %1088 = vmatprep.mubr.bf16.mxu0 %v693
      %1089 = vmatmul.mubr.bf16.gmra.mrb[0].mxu0 %v692
      %v1090 = vpop.f32.mrb[0].mxu0
      %v1091 = vadd.f32 0.0, %v1090
      %v1092 = vpop.f32.mrb[0].mxu0
      %v1093 = vpop.f32.mrb[0].mxu0
      %v1094 = vadd.f32 0.0, %v1093
      %v1095 = vpop.f32.mrb[0].mxu0
      %1096 = vmatprep.mubr.bf16.mxu0 %v697
      %1097 = vmatmul.mubr.bf16.gmra.mrb[0].mxu0 %v696
      %v1098 = vpop.f32.mrb[0].mxu0
      %v1099 = vadd.f32 0.0, %v1098
      %v1100 = vpop.f32.mrb[0].mxu0
      %v1101 = vpop.f32.mrb[0].mxu0
      %v1102 = vadd.f32 0.0, %v1101
      %v1103 = vpop.f32.mrb[0].mxu0
      %1104 = vmatprep.mubr.bf16.mxu0 %v701
      %1105 = vmatmul.mubr.bf16.gmra.mrb[0].mxu0 %v700
      %v1106 = vpop.f32.mrb[0].mxu0
      %v1107 = vadd.f32 0.0, %v1106
      %v1108 = vpop.f32.mrb[0].mxu0
      %v1109 = vpop.f32.mrb[0].mxu0
      %v1110 = vadd.f32 0.0, %v1109
      %v1111 = vpop.f32.mrb[0].mxu0
      %1112 = vmatprep.mubr.bf16.mxu0 %v705
      %1113 = vmatmul.mubr.bf16.gmra.mrb[0].mxu0 %v704
      %v1114 = vpop.f32.mrb[0].mxu0
      %v1115 = vadd.f32 0.0, %v1114
      %v1116 = vpop.f32.mrb[0].mxu0
      %v1117 = vpop.f32.mrb[0].mxu0
      %v1118 = vadd.f32 0.0, %v1117
      %v1119 = vpop.f32.mrb[0].mxu0
      %1120 = vmatprep.mubr.bf16.mxu0 %v709
      %1121 = vmatmul.mubr.bf16.gmra.mrb[0].mxu0 %v708
      %v1122 = vpop.f32.mrb[0].mxu0
      %v1123 = vadd.f32 0.0, %v1122
      %v1124 = vpop.f32.mrb[0].mxu0
      %v1125 = vpop.f32.mrb[0].mxu0
      %v1126 = vadd.f32 0.0, %v1125
      %v1127 = vpop.f32.mrb[0].mxu0
      %1128 = vdwg.mxu0
      %1129 = vmatprep.subr.bf16.mxu0 0
      %1130 = vmatpush1.bf16.msra.mxu0 %v920
      %1131 = vmatprep.subr.bf16.mxu0 0
      %1132 = vmatpush1.bf16.msra.mxu0 %v921
      %1133 = vmatprep.subr.bf16.mxu0 0
      %1134 = vmatpush1.bf16.msra.mxu0 %v922
      %1135 = vmatprep.subr.bf16.mxu0 0
      %1136 = vmatpush1.bf16.msra.mxu0 %v923
      %1137 = vmatprep.subr.bf16.mxu0 0
      %1138 = vmatpush1.bf16.msra.mxu0 %v924
      %1139 = vmatprep.subr.bf16.mxu0 0
      %1140 = vmatpush1.bf16.msra.mxu0 %v925
      %1141 = vmatprep.subr.bf16.mxu0 0
      %1142 = vmatpush1.bf16.msra.mxu0 %v926
      %1143 = vmatprep.subr.bf16.mxu0 0
      %1144 = vmatpush1.bf16.msra.mxu0 %v927
      %1145 = vmatprep.subr.bf16.mxu0 0
      %1146 = vmatpush1.bf16.msra.mxu0 %v928
      %1147 = vmatprep.subr.bf16.mxu0 0
      %1148 = vmatpush1.bf16.msra.mxu0 %v929
      %1149 = vmatprep.subr.bf16.mxu0 0
      %1150 = vmatpush1.bf16.msra.mxu0 %v930
      %1151 = vmatprep.subr.bf16.mxu0 0
      %1152 = vmatpush1.bf16.msra.mxu0 %v931
      %1153 = vmatprep.subr.bf16.mxu0 0
      %1154 = vmatpush1.bf16.msra.mxu0 %v932
      %1155 = vmatprep.subr.bf16.mxu0 0
      %1156 = vmatpush1.bf16.msra.mxu0 %v933
      %1157 = vmatprep.subr.bf16.mxu0 0
      %1158 = vmatpush1.bf16.msra.mxu0 %v934
      %1159 = vmatprep.subr.bf16.mxu0 0
      %1160 = vmatpush1.bf16.msra.mxu0 %v935
      %1161 = vmatprep.mubr.bf16.mxu0 %v651
      %1162 = vmatmul.mubr.bf16.gmra.mrb[0].mxu0 %v650
      %v1163 = vpop.f32.mrb[0].mxu0
      %v1164 = vadd.f32 %v1003, %v1163
      %v1165 = vpop.f32.mrb[0].mxu0
      %v1166 = vpop.f32.mrb[0].mxu0
      %v1167 = vadd.f32 %v1006, %v1166
      %v1168 = vpop.f32.mrb[0].mxu0
      %1169 = vmatprep.mubr.bf16.mxu0 %v655
      %1170 = vmatmul.mubr.bf16.gmra.mrb[0].mxu0 %v654
      %v1171 = vpop.f32.mrb[0].mxu0
      %v1172 = vadd.f32 %v1011, %v1171
      %v1173 = vpop.f32.mrb[0].mxu0
      %v1174 = vpop.f32.mrb[0].mxu0
      %v1175 = vadd.f32 %v1014, %v1174
      %v1176 = vpop.f32.mrb[0].mxu0
      %1177 = vmatprep.mubr.bf16.mxu0 %v659
      %1178 = vmatmul.mubr.bf16.gmra.mrb[0].mxu0 %v658
      %v1179 = vpop.f32.mrb[0].mxu0
      %v1180 = vadd.f32 %v1019, %v1179
      %v1181 = vpop.f32.mrb[0].mxu0
      %v1182 = vpop.f32.mrb[0].mxu0
      %v1183 = vadd.f32 %v1022, %v1182
      %v1184 = vpop.f32.mrb[0].mxu0
      %1185 = vmatprep.mubr.bf16.mxu0 %v663
      %1186 = vmatmul.mubr.bf16.gmra.mrb[0].mxu0 %v662
      %v1187 = vpop.f32.mrb[0].mxu0
      %v1188 = vadd.f32 %v1027, %v1187
      %v1189 = vpop.f32.mrb[0].mxu0
      %v1190 = vpop.f32.mrb[0].mxu0
      %v1191 = vadd.f32 %v1030, %v1190
      %v1192 = vpop.f32.mrb[0].mxu0
      %1193 = vmatprep.mubr.bf16.mxu0 %v667
      %1194 = vmatmul.mubr.bf16.gmra.mrb[0].mxu0 %v666
      %v1195 = vpop.f32.mrb[0].mxu0
      %v1196 = vadd.f32 %v1035, %v1195
      %v1197 = vpop.f32.mrb[0].mxu0
      %v1198 = vpop.f32.mrb[0].mxu0
      %v1199 = vadd.f32 %v1038, %v1198
      %v1200 = vpop.f32.mrb[0].mxu0
      %1201 = vmatprep.mubr.bf16.mxu0 %v671
      %1202 = vmatmul.mubr.bf16.gmra.mrb[0].mxu0 %v670
      %v1203 = vpop.f32.mrb[0].mxu0
      %v1204 = vadd.f32 %v1043, %v1203
      %v1205 = vpop.f32.mrb[0].mxu0
      %v1206 = vpop.f32.mrb[0].mxu0
      %v1207 = vadd.f32 %v1046, %v1206
      %v1208 = vpop.f32.mrb[0].mxu0
      %1209 = vmatprep.mubr.bf16.mxu0 %v675
      %1210 = vmatmul.mubr.bf16.gmra.mrb[0].mxu0 %v674
      %v1211 = vpop.f32.mrb[0].mxu0
      %v1212 = vadd.f32 %v1051, %v1211
      %v1213 = vpop.f32.mrb[0].mxu0
      %v1214 = vpop.f32.mrb[0].mxu0
      %v1215 = vadd.f32 %v1054, %v1214
      %v1216 = vpop.f32.mrb[0].mxu0
      %1217 = vmatprep.mubr.bf16.mxu0 %v679
      %1218 = vmatmul.mubr.bf16.gmra.mrb[0].mxu0 %v678
      %v1219 = vpop.f32.mrb[0].mxu0
      %v1220 = vadd.f32 %v1059, %v1219
      %v1221 = vpop.f32.mrb[0].mxu0
      %v1222 = vpop.f32.mrb[0].mxu0
      %v1223 = vadd.f32 %v1062, %v1222
      %v1224 = vpop.f32.mrb[0].mxu0
      %1225 = vmatprep.mubr.bf16.mxu0 %v683
      %1226 = vmatmul.mubr.bf16.gmra.mrb[0].mxu0 %v682
      %v1227 = vpop.f32.mrb[0].mxu0
      %v1228 = vadd.f32 %v1067, %v1227
      %v1229 = vpop.f32.mrb[0].mxu0
      %v1230 = vpop.f32.mrb[0].mxu0
      %v1231 = vadd.f32 %v1070, %v1230
      %v1232 = vpop.f32.mrb[0].mxu0
      %1233 = vmatprep.mubr.bf16.mxu0 %v687
      %1234 = vmatmul.mubr.bf16.gmra.mrb[0].mxu0 %v686
      %v1235 = vpop.f32.mrb[0].mxu0
      %v1236 = vadd.f32 %v1075, %v1235
      %v1237 = vpop.f32.mrb[0].mxu0
      %v1238 = vpop.f32.mrb[0].mxu0
      %v1239 = vadd.f32 %v1078, %v1238
      %v1240 = vpop.f32.mrb[0].mxu0
      %1241 = vmatprep.mubr.bf16.mxu0 %v691
      %1242 = vmatmul.mubr.bf16.gmra.mrb[0].mxu0 %v690
      %v1243 = vpop.f32.mrb[0].mxu0
      %v1244 = vadd.f32 %v1083, %v1243
      %v1245 = vpop.f32.mrb[0].mxu0
      %v1246 = vpop.f32.mrb[0].mxu0
      %v1247 = vadd.f32 %v1086, %v1246
      %v1248 = vpop.f32.mrb[0].mxu0
      %1249 = vmatprep.mubr.bf16.mxu0 %v695
      %1250 = vmatmul.mubr.bf16.gmra.mrb[0].mxu0 %v694
      %v1251 = vpop.f32.mrb[0].mxu0
      %v1252 = vadd.f32 %v1091, %v1251
      %v1253 = vpop.f32.mrb[0].mxu0
      %v1254 = vpop.f32.mrb[0].mxu0
      %v1255 = vadd.f32 %v1094, %v1254
      %v1256 = vpop.f32.mrb[0].mxu0
      %1257 = vmatprep.mubr.bf16.mxu0 %v699
      %1258 = vmatmul.mubr.bf16.gmra.mrb[0].mxu0 %v698
      %v1259 = vpop.f32.mrb[0].mxu0
      %v1260 = vadd.f32 %v1099, %v1259
      %v1261 = vpop.f32.mrb[0].mxu0
      %v1262 = vpop.f32.mrb[0].mxu0
      %v1263 = vadd.f32 %v1102, %v1262
      %v1264 = vpop.f32.mrb[0].mxu0
      %1265 = vmatprep.mubr.bf16.mxu0 %v703
      %1266 = vmatmul.mubr.bf16.gmra.mrb[0].mxu0 %v702
      %v1267 = vpop.f32.mrb[0].mxu0
      %v1268 = vadd.f32 %v1107, %v1267
      %v1269 = vpop.f32.mrb[0].mxu0
      %v1270 = vpop.f32.mrb[0].mxu0
      %v1271 = vadd.f32 %v1110, %v1270
      %v1272 = vpop.f32.mrb[0].mxu0
      %1273 = vmatprep.mubr.bf16.mxu0 %v707
      %1274 = vmatmul.mubr.bf16.gmra.mrb[0].mxu0 %v706
      %v1275 = vpop.f32.mrb[0].mxu0
      %v1276 = vadd.f32 %v1115, %v1275
      %v1277 = vpop.f32.mrb[0].mxu0
      %v1278 = vpop.f32.mrb[0].mxu0
      %v1279 = vadd.f32 %v1118, %v1278
      %v1280 = vpop.f32.mrb[0].mxu0
      %1281 = vmatprep.mubr.bf16.mxu0 %v711
      %1282 = vmatmul.mubr.bf16.gmra.mrb[0].mxu0 %v710
      %v1283 = vpop.f32.mrb[0].mxu0
      %v1284 = vadd.f32 %v1123, %v1283
      %v1285 = vpop.f32.mrb[0].mxu0
      %v1286 = vpop.f32.mrb[0].mxu0
      %v1287 = vadd.f32 %v1126, %v1286
      %v1288 = vpop.f32.mrb[0].mxu0
      %1289 = vdwg.mxu0
      %v1290 = vadd.f32 %v292, %v1164
      %v1291 = vadd.f32 %v293, %v1167
      %v1292 = vadd.f32 %v294, %v1172
      %v1293 = vadd.f32 %v295, %v1175
      %v1294 = vadd.f32 %v296, %v1180
      %v1295 = vadd.f32 %v297, %v1183
      %v1296 = vadd.f32 %v298, %v1188
      %v1297 = vadd.f32 %v299, %v1191
      %v1298 = vadd.f32 %v300, %v1196
      %v1299 = vadd.f32 %v301, %v1199
      %v1300 = vadd.f32 %v302, %v1204
      %v1301 = vadd.f32 %v303, %v1207
      %v1302 = vadd.f32 %v304, %v1212
      %v1303 = vadd.f32 %v305, %v1215
      %v1304 = vadd.f32 %v306, %v1220
      %v1305 = vadd.f32 %v307, %v1223
      %v1306 = vadd.f32 %v308, %v1228
      %v1307 = vadd.f32 %v309, %v1231
      %v1308 = vadd.f32 %v310, %v1236
      %v1309 = vadd.f32 %v311, %v1239
      %v1310 = vadd.f32 %v312, %v1244
      %v1311 = vadd.f32 %v313, %v1247
      %v1312 = vadd.f32 %v314, %v1252
      %v1313 = vadd.f32 %v315, %v1255
      %v1314 = vadd.f32 %v316, %v1260
      %v1315 = vadd.f32 %v317, %v1263
      %v1316 = vadd.f32 %v318, %v1268
      %v1317 = vadd.f32 %v319, %v1271
      %v1318 = vadd.f32 %v320, %v1276
      %v1319 = vadd.f32 %v321, %v1279
      %v1320 = vadd.f32 %v322, %v1284
      %v1321 = vadd.f32 %v323, %v1287
      %1322 = vst [vmem:[#allocation2] sm:$0xff] %v1290
      %1323 = vst [vmem:[#allocation2 + $0x8] sm:$0xff] %v1291
      %1324 = vst [vmem:[#allocation2 + $0x10] sm:$0xff] %v1292
      %1325 = vst [vmem:[#allocation2 + $0x18] sm:$0xff] %v1293
      %1326 = vst [vmem:[#allocation2 + $0x20] sm:$0xff] %v1294
      %1327 = vst [vmem:[#allocation2 + $0x28] sm:$0xff] %v1295
      %1328 = vst [vmem:[#allocation2 + $0x30] sm:$0xff] %v1296
      %1329 = vst [vmem:[#allocation2 + $0x38] sm:$0xff] %v1297
      %1330 = vst [vmem:[#allocation2 + $0x40] sm:$0xff] %v1298
      %1331 = vst [vmem:[#allocation2 + $0x48] sm:$0xff] %v1299
      %1332 = vst [vmem:[#allocation2 + $0x50] sm:$0xff] %v1300
      %1333 = vst [vmem:[#allocation2 + $0x58] sm:$0xff] %v1301
      %1334 = vst [vmem:[#allocation2 + $0x60] sm:$0xff] %v1302
      %1335 = vst [vmem:[#allocation2 + $0x68] sm:$0xff] %v1303
      %1336 = vst [vmem:[#allocation2 + $0x70] sm:$0xff] %v1304
      %1337 = vst [vmem:[#allocation2 + $0x78] sm:$0xff] %v1305
      %1338 = vst [vmem:[#allocation2 + $0x80] sm:$0xff] %v1306
      %1339 = vst [vmem:[#allocation2 + $0x88] sm:$0xff] %v1307
      %1340 = vst [vmem:[#allocation2 + $0x90] sm:$0xff] %v1308
      %1341 = vst [vmem:[#allocation2 + $0x98] sm:$0xff] %v1309
      %1342 = vst [vmem:[#allocation2 + $0xa0] sm:$0xff] %v1310
      %1343 = vst [vmem:[#allocation2 + $0xa8] sm:$0xff] %v1311
      %1344 = vst [vmem:[#allocation2 + $0xb0] sm:$0xff] %v1312
      %1345 = vst [vmem:[#allocation2 + $0xb8] sm:$0xff] %v1313
      %1346 = vst [vmem:[#allocation2 + $0xc0] sm:$0xff] %v1314
      %1347 = vst [vmem:[#allocation2 + $0xc8] sm:$0xff] %v1315
      %1348 = vst [vmem:[#allocation2 + $0xd0] sm:$0xff] %v1316
      %1349 = vst [vmem:[#allocation2 + $0xd8] sm:$0xff] %v1317
      %1350 = vst [vmem:[#allocation2 + $0xe0] sm:$0xff] %v1318
      %1351 = vst [vmem:[#allocation2 + $0xe8] sm:$0xff] %v1319
      %1352 = vst [vmem:[#allocation2 + $0xf0] sm:$0xff] %v1320
      %1353 = vst [vmem:[#allocation2 + $0xf8] sm:$0xff] %v1321
      // Predicated region
      $region41: #{gcn_forward.5} parent=35 // pred_check
        %p1354 = pneg %p255
      $region42: #{gcn_forward.5} parent=35 // pred_check_branch
        %1356 = sbr.rel (%p1354) target = $region44
      $region43: #{gcn_forward.5} parent=35 // pred_region
        %v1357 = vld [vmem:[%s246] sm:$0xff]
        %v1358 = vld [vmem:[%s246 + $0x8] sm:$0xff]
        %v1359 = vld [vmem:[%s246 + $0x10] sm:$0xff]
        %v1360 = vld [vmem:[%s246 + $0x18] sm:$0xff]
        %v1361 = vld [vmem:[%s246 + $0x20] sm:$0xff]
        %v1362 = vld [vmem:[%s246 + $0x28] sm:$0xff]
        %v1363 = vld [vmem:[%s246 + $0x30] sm:$0xff]
        %v1364 = vld [vmem:[%s246 + $0x38] sm:$0xff]
        %v1365 = vld [vmem:[%s246 + $0x40] sm:$0xff]
        %v1366 = vld [vmem:[%s246 + $0x48] sm:$0xff]
        %v1367 = vld [vmem:[%s246 + $0x50] sm:$0xff]
        %v1368 = vld [vmem:[%s246 + $0x58] sm:$0xff]
        %v1369 = vld [vmem:[%s246 + $0x60] sm:$0xff]
        %v1370 = vld [vmem:[%s246 + $0x68] sm:$0xff]
        %v1371 = vld [vmem:[%s246 + $0x70] sm:$0xff]
        %v1372 = vld [vmem:[%s246 + $0x78] sm:$0xff]
        %v1373 = vld [vmem:[%s246 + $0x80] sm:$0xff]
        %v1374 = vld [vmem:[%s246 + $0x88] sm:$0xff]
        %v1375 = vld [vmem:[%s246 + $0x90] sm:$0xff]
        %v1376 = vld [vmem:[%s246 + $0x98] sm:$0xff]
        %v1377 = vld [vmem:[%s246 + $0xa0] sm:$0xff]
        %v1378 = vld [vmem:[%s246 + $0xa8] sm:$0xff]
        %v1379 = vld [vmem:[%s246 + $0xb0] sm:$0xff]
        %v1380 = vld [vmem:[%s246 + $0xb8] sm:$0xff]
        %v1381 = vld [vmem:[%s246 + $0xc0] sm:$0xff]
        %v1382 = vld [vmem:[%s246 + $0xc8] sm:$0xff]
        %v1383 = vld [vmem:[%s246 + $0xd0] sm:$0xff]
        %v1384 = vld [vmem:[%s246 + $0xd8] sm:$0xff]
        %v1385 = vld [vmem:[%s246 + $0xe0] sm:$0xff]
        %v1386 = vld [vmem:[%s246 + $0xe8] sm:$0xff]
        %v1387 = vld [vmem:[%s246 + $0xf0] sm:$0xff]
        %v1388 = vld [vmem:[%s246 + $0xf8] sm:$0xff]
        %v1389 = vld [vmem:[#allocation2] sm:$0xff]
        %v1390 = vld [vmem:[#allocation2 + $0x8] sm:$0xff]
        %v1391 = vld [vmem:[#allocation2 + $0x10] sm:$0xff]
        %v1392 = vld [vmem:[#allocation2 + $0x18] sm:$0xff]
        %v1393 = vld [vmem:[#allocation2 + $0x20] sm:$0xff]
        %v1394 = vld [vmem:[#allocation2 + $0x28] sm:$0xff]
        %v1395 = vld [vmem:[#allocation2 + $0x30] sm:$0xff]
        %v1396 = vld [vmem:[#allocation2 + $0x38] sm:$0xff]
        %v1397 = vld [vmem:[#allocation2 + $0x40] sm:$0xff]
        %v1398 = vld [vmem:[#allocation2 + $0x48] sm:$0xff]
        %v1399 = vld [vmem:[#allocation2 + $0x50] sm:$0xff]
        %v1400 = vld [vmem:[#allocation2 + $0x58] sm:$0xff]
        %v1401 = vld [vmem:[#allocation2 + $0x60] sm:$0xff]
        %v1402 = vld [vmem:[#allocation2 + $0x68] sm:$0xff]
        %v1403 = vld [vmem:[#allocation2 + $0x70] sm:$0xff]
        %v1404 = vld [vmem:[#allocation2 + $0x78] sm:$0xff]
        %v1405 = vld [vmem:[#allocation2 + $0x80] sm:$0xff]
        %v1406 = vld [vmem:[#allocation2 + $0x88] sm:$0xff]
        %v1407 = vld [vmem:[#allocation2 + $0x90] sm:$0xff]
        %v1408 = vld [vmem:[#allocation2 + $0x98] sm:$0xff]
        %v1409 = vld [vmem:[#allocation2 + $0xa0] sm:$0xff]
        %v1410 = vld [vmem:[#allocation2 + $0xa8] sm:$0xff]
        %v1411 = vld [vmem:[#allocation2 + $0xb0] sm:$0xff]
        %v1412 = vld [vmem:[#allocation2 + $0xb8] sm:$0xff]
        %v1413 = vld [vmem:[#allocation2 + $0xc0] sm:$0xff]
        %v1414 = vld [vmem:[#allocation2 + $0xc8] sm:$0xff]
        %v1415 = vld [vmem:[#allocation2 + $0xd0] sm:$0xff]
        %v1416 = vld [vmem:[#allocation2 + $0xd8] sm:$0xff]
        %v1417 = vld [vmem:[#allocation2 + $0xe0] sm:$0xff]
        %v1418 = vld [vmem:[#allocation2 + $0xe8] sm:$0xff]
        %v1419 = vld [vmem:[#allocation2 + $0xf0] sm:$0xff]
        %v1420 = vld [vmem:[#allocation2 + $0xf8] sm:$0xff]
        %1422 = vset.pattern.permute.xlu0 0
        %1423 = vperm.xlu0 %1422, %v1357
        %v1424 = vpop.permute.xlu0 %1423
        %1427 = vset.pattern.permute.xlu0 0
        %1428 = vperm.xlu0 %1427, %v1358
        %v1429 = vpop.permute.xlu0 %1428
        %1432 = vset.pattern.permute.xlu0 0
        %1433 = vperm.xlu0 %1432, %v1359
        %v1434 = vpop.permute.xlu0 %1433
        %1437 = vset.pattern.permute.xlu0 0
        %1438 = vperm.xlu0 %1437, %v1360
        %v1439 = vpop.permute.xlu0 %1438
        %1442 = vset.pattern.permute.xlu0 0
        %1443 = vperm.xlu0 %1442, %v1361
        %v1444 = vpop.permute.xlu0 %1443
        %1447 = vset.pattern.permute.xlu0 0
        %1448 = vperm.xlu0 %1447, %v1362
        %v1449 = vpop.permute.xlu0 %1448
        %1452 = vset.pattern.permute.xlu0 0
        %1453 = vperm.xlu0 %1452, %v1363
        %v1454 = vpop.permute.xlu0 %1453
        %1457 = vset.pattern.permute.xlu0 0
        %1458 = vperm.xlu0 %1457, %v1364
        %v1459 = vpop.permute.xlu0 %1458
        %1462 = vset.pattern.permute.xlu0 0
        %1463 = vperm.xlu0 %1462, %v1365
        %v1464 = vpop.permute.xlu0 %1463
        %1467 = vset.pattern.permute.xlu0 0
        %1468 = vperm.xlu0 %1467, %v1366
        %v1469 = vpop.permute.xlu0 %1468
        %1472 = vset.pattern.permute.xlu0 0
        %1473 = vperm.xlu0 %1472, %v1367
        %v1474 = vpop.permute.xlu0 %1473
        %1477 = vset.pattern.permute.xlu0 0
        %1478 = vperm.xlu0 %1477, %v1368
        %v1479 = vpop.permute.xlu0 %1478
        %1482 = vset.pattern.permute.xlu0 0
        %1483 = vperm.xlu0 %1482, %v1369
        %v1484 = vpop.permute.xlu0 %1483
        %1487 = vset.pattern.permute.xlu0 0
        %1488 = vperm.xlu0 %1487, %v1370
        %v1489 = vpop.permute.xlu0 %1488
        %1492 = vset.pattern.permute.xlu0 0
        %1493 = vperm.xlu0 %1492, %v1371
        %v1494 = vpop.permute.xlu0 %1493
        %1497 = vset.pattern.permute.xlu0 0
        %1498 = vperm.xlu0 %1497, %v1372
        %v1499 = vpop.permute.xlu0 %1498
        %1502 = vset.pattern.permute.xlu0 0
        %1503 = vperm.xlu0 %1502, %v1373
        %v1504 = vpop.permute.xlu0 %1503
        %1507 = vset.pattern.permute.xlu0 0
        %1508 = vperm.xlu0 %1507, %v1374
        %v1509 = vpop.permute.xlu0 %1508
        %1512 = vset.pattern.permute.xlu0 0
        %1513 = vperm.xlu0 %1512, %v1375
        %v1514 = vpop.permute.xlu0 %1513
        %1517 = vset.pattern.permute.xlu0 0
        %1518 = vperm.xlu0 %1517, %v1376
        %v1519 = vpop.permute.xlu0 %1518
        %1522 = vset.pattern.permute.xlu0 0
        %1523 = vperm.xlu0 %1522, %v1377
        %v1524 = vpop.permute.xlu0 %1523
        %1527 = vset.pattern.permute.xlu0 0
        %1528 = vperm.xlu0 %1527, %v1378
        %v1529 = vpop.permute.xlu0 %1528
        %1532 = vset.pattern.permute.xlu0 0
        %1533 = vperm.xlu0 %1532, %v1379
        %v1534 = vpop.permute.xlu0 %1533
        %1537 = vset.pattern.permute.xlu0 0
        %1538 = vperm.xlu0 %1537, %v1380
        %v1539 = vpop.permute.xlu0 %1538
        %1542 = vset.pattern.permute.xlu0 0
        %1543 = vperm.xlu0 %1542, %v1381
        %v1544 = vpop.permute.xlu0 %1543
        %1547 = vset.pattern.permute.xlu0 0
        %1548 = vperm.xlu0 %1547, %v1382
        %v1549 = vpop.permute.xlu0 %1548
        %1552 = vset.pattern.permute.xlu0 0
        %1553 = vperm.xlu0 %1552, %v1383
        %v1554 = vpop.permute.xlu0 %1553
        %1557 = vset.pattern.permute.xlu0 0
        %1558 = vperm.xlu0 %1557, %v1384
        %v1559 = vpop.permute.xlu0 %1558
        %1562 = vset.pattern.permute.xlu0 0
        %1563 = vperm.xlu0 %1562, %v1385
        %v1564 = vpop.permute.xlu0 %1563
        %1567 = vset.pattern.permute.xlu0 0
        %1568 = vperm.xlu0 %1567, %v1386
        %v1569 = vpop.permute.xlu0 %1568
        %1572 = vset.pattern.permute.xlu0 0
        %1573 = vperm.xlu0 %1572, %v1387
        %v1574 = vpop.permute.xlu0 %1573
        %1577 = vset.pattern.permute.xlu0 0
        %1578 = vperm.xlu0 %1577, %v1388
        %v1579 = vpop.permute.xlu0 %1578
        %v1581 = vmul.f32 %v1424, %v1389
        %v1582 = vmul.f32 %v1429, %v1390
        %v1583 = vmul.f32 %v1434, %v1391
        %v1584 = vmul.f32 %v1439, %v1392
        %v1585 = vmul.f32 %v1444, %v1393
        %v1586 = vmul.f32 %v1449, %v1394
        %v1587 = vmul.f32 %v1454, %v1395
        %v1588 = vmul.f32 %v1459, %v1396
        %v1589 = vmul.f32 %v1464, %v1397
        %v1590 = vmul.f32 %v1469, %v1398
        %v1591 = vmul.f32 %v1474, %v1399
        %v1592 = vmul.f32 %v1479, %v1400
        %v1593 = vmul.f32 %v1484, %v1401
        %v1594 = vmul.f32 %v1489, %v1402
        %v1595 = vmul.f32 %v1494, %v1403
        %v1596 = vmul.f32 %v1499, %v1404
        %v1597 = vmul.f32 %v1504, %v1405
        %v1598 = vmul.f32 %v1509, %v1406
        %v1599 = vmul.f32 %v1514, %v1407
        %v1600 = vmul.f32 %v1519, %v1408
        %v1601 = vmul.f32 %v1524, %v1409
        %v1602 = vmul.f32 %v1529, %v1410
        %v1603 = vmul.f32 %v1534, %v1411
        %v1604 = vmul.f32 %v1539, %v1412
        %v1605 = vmul.f32 %v1544, %v1413
        %v1606 = vmul.f32 %v1549, %v1414
        %v1607 = vmul.f32 %v1554, %v1415
        %v1608 = vmul.f32 %v1559, %v1416
        %v1609 = vmul.f32 %v1564, %v1417
        %v1610 = vmul.f32 %v1569, %v1418
        %v1611 = vmul.f32 %v1574, %v1419
        %v1612 = vmul.f32 %v1579, %v1420
        %v1613 = vld [vmem:[%s3] sm:$0x1]
        %v1615 = vlaneseq
        %v1616 = vshrl.u32 %v1615, 7
        %v1617 = vsub.s32 0, %v1616
        %v1618 = vrot.slane %v1613, %v1617
        %v1620 = vadd.f32 %v1581, %v1618
        %v1621 = vadd.f32 %v1582, %v1618
        %v1622 = vadd.f32 %v1583, %v1618
        %v1623 = vadd.f32 %v1584, %v1618
        %v1624 = vadd.f32 %v1585, %v1618
        %v1625 = vadd.f32 %v1586, %v1618
        %v1626 = vadd.f32 %v1587, %v1618
        %v1627 = vadd.f32 %v1588, %v1618
        %v1628 = vadd.f32 %v1589, %v1618
        %v1629 = vadd.f32 %v1590, %v1618
        %v1630 = vadd.f32 %v1591, %v1618
        %v1631 = vadd.f32 %v1592, %v1618
        %v1632 = vadd.f32 %v1593, %v1618
        %v1633 = vadd.f32 %v1594, %v1618
        %v1634 = vadd.f32 %v1595, %v1618
        %v1635 = vadd.f32 %v1596, %v1618
        %v1636 = vadd.f32 %v1597, %v1618
        %v1637 = vadd.f32 %v1598, %v1618
        %v1638 = vadd.f32 %v1599, %v1618
        %v1639 = vadd.f32 %v1600, %v1618
        %v1640 = vadd.f32 %v1601, %v1618
        %v1641 = vadd.f32 %v1602, %v1618
        %v1642 = vadd.f32 %v1603, %v1618
        %v1643 = vadd.f32 %v1604, %v1618
        %v1644 = vadd.f32 %v1605, %v1618
        %v1645 = vadd.f32 %v1606, %v1618
        %v1646 = vadd.f32 %v1607, %v1618
        %v1647 = vadd.f32 %v1608, %v1618
        %v1648 = vadd.f32 %v1609, %v1618
        %v1649 = vadd.f32 %v1610, %v1618
        %v1650 = vadd.f32 %v1611, %v1618
        %v1651 = vadd.f32 %v1612, %v1618
        %v1652 = vpack.c.bf16 %v1621, %v1620
        %v1653 = vpack.c.bf16 %v1623, %v1622
        %v1654 = vpack.c.bf16 %v1625, %v1624
        %v1655 = vpack.c.bf16 %v1627, %v1626
        %v1656 = vpack.c.bf16 %v1629, %v1628
        %v1657 = vpack.c.bf16 %v1631, %v1630
        %v1658 = vpack.c.bf16 %v1633, %v1632
        %v1659 = vpack.c.bf16 %v1635, %v1634
        %v1660 = vpack.c.bf16 %v1637, %v1636
        %v1661 = vpack.c.bf16 %v1639, %v1638
        %v1662 = vpack.c.bf16 %v1641, %v1640
        %v1663 = vpack.c.bf16 %v1643, %v1642
        %v1664 = vpack.c.bf16 %v1645, %v1644
        %v1665 = vpack.c.bf16 %v1647, %v1646
        %v1666 = vpack.c.bf16 %v1649, %v1648
        %v1667 = vpack.c.bf16 %v1651, %v1650
        %v1684 = vunpack.c.l.b16 %v1652
        %v1685 = vunpack.c.h.b16 %v1652
        %v1686 = vunpack.c.l.b16 %v1653
        %v1687 = vunpack.c.h.b16 %v1653
        %v1688 = vunpack.c.l.b16 %v1654
        %v1689 = vunpack.c.h.b16 %v1654
        %v1690 = vunpack.c.l.b16 %v1655
        %v1691 = vunpack.c.h.b16 %v1655
        %v1692 = vunpack.c.l.b16 %v1656
        %v1693 = vunpack.c.h.b16 %v1656
        %v1694 = vunpack.c.l.b16 %v1657
        %v1695 = vunpack.c.h.b16 %v1657
        %v1696 = vunpack.c.l.b16 %v1658
        %v1697 = vunpack.c.h.b16 %v1658
        %v1698 = vunpack.c.l.b16 %v1659
        %v1699 = vunpack.c.h.b16 %v1659
        %v1700 = vunpack.c.l.b16 %v1660
        %v1701 = vunpack.c.h.b16 %v1660
        %v1702 = vunpack.c.l.b16 %v1661
        %v1703 = vunpack.c.h.b16 %v1661
        %v1704 = vunpack.c.l.b16 %v1662
        %v1705 = vunpack.c.h.b16 %v1662
        %v1706 = vunpack.c.l.b16 %v1663
        %v1707 = vunpack.c.h.b16 %v1663
        %v1708 = vunpack.c.l.b16 %v1664
        %v1709 = vunpack.c.h.b16 %v1664
        %v1710 = vunpack.c.l.b16 %v1665
        %v1711 = vunpack.c.h.b16 %v1665
        %v1712 = vunpack.c.l.b16 %v1666
        %v1713 = vunpack.c.h.b16 %v1666
        %v1714 = vunpack.c.l.b16 %v1667
        %v1715 = vunpack.c.h.b16 %v1667
        %v1716 = vpack.c.b16 %v1684, %v1684
        %v1717 = vpack.c.b16 %v1685, %v1685
        %v1718 = vpack.c.b16 %v1686, %v1686
        %v1719 = vpack.c.b16 %v1687, %v1687
        %v1720 = vpack.c.b16 %v1688, %v1688
        %v1721 = vpack.c.b16 %v1689, %v1689
        %v1722 = vpack.c.b16 %v1690, %v1690
        %v1723 = vpack.c.b16 %v1691, %v1691
        %v1724 = vpack.c.b16 %v1692, %v1692
        %v1725 = vpack.c.b16 %v1693, %v1693
        %v1726 = vpack.c.b16 %v1694, %v1694
        %v1727 = vpack.c.b16 %v1695, %v1695
        %v1728 = vpack.c.b16 %v1696, %v1696
        %v1729 = vpack.c.b16 %v1697, %v1697
        %v1730 = vpack.c.b16 %v1698, %v1698
        %v1731 = vpack.c.b16 %v1699, %v1699
        %v1732 = vpack.c.b16 %v1700, %v1700
        %v1733 = vpack.c.b16 %v1701, %v1701
        %v1734 = vpack.c.b16 %v1702, %v1702
        %v1735 = vpack.c.b16 %v1703, %v1703
        %v1736 = vpack.c.b16 %v1704, %v1704
        %v1737 = vpack.c.b16 %v1705, %v1705
        %v1738 = vpack.c.b16 %v1706, %v1706
        %v1739 = vpack.c.b16 %v1707, %v1707
        %v1740 = vpack.c.b16 %v1708, %v1708
        %v1741 = vpack.c.b16 %v1709, %v1709
        %v1742 = vpack.c.b16 %v1710, %v1710
        %v1743 = vpack.c.b16 %v1711, %v1711
        %v1744 = vpack.c.b16 %v1712, %v1712
        %v1745 = vpack.c.b16 %v1713, %v1713
        %v1746 = vpack.c.b16 %v1714, %v1714
        %v1747 = vpack.c.b16 %v1715, %v1715
        %1780 = vst [vmem:[%s252] sm:$0xf] %v1716
        %1781 = vst [vmem:[%s252 + $0x4] sm:$0xf] %v1717
        %1782 = vst [vmem:[%s252 + $0x8] sm:$0xf] %v1718
        %1783 = vst [vmem:[%s252 + $0xc] sm:$0xf] %v1719
        %1784 = vst [vmem:[%s252 + $0x10] sm:$0xf] %v1720
        %1785 = vst [vmem:[%s252 + $0x14] sm:$0xf] %v1721
        %1786 = vst [vmem:[%s252 + $0x18] sm:$0xf] %v1722
        %1787 = vst [vmem:[%s252 + $0x1c] sm:$0xf] %v1723
        %1788 = vst [vmem:[%s252 + $0x20] sm:$0xf] %v1724
        %1789 = vst [vmem:[%s252 + $0x24] sm:$0xf] %v1725
        %1790 = vst [vmem:[%s252 + $0x28] sm:$0xf] %v1726
        %1791 = vst [vmem:[%s252 + $0x2c] sm:$0xf] %v1727
        %1792 = vst [vmem:[%s252 + $0x30] sm:$0xf] %v1728
        %1793 = vst [vmem:[%s252 + $0x34] sm:$0xf] %v1729
        %1794 = vst [vmem:[%s252 + $0x38] sm:$0xf] %v1730
        %1795 = vst [vmem:[%s252 + $0x3c] sm:$0xf] %v1731
        %1796 = vst [vmem:[%s252 + $0x40] sm:$0xf] %v1732
        %1797 = vst [vmem:[%s252 + $0x44] sm:$0xf] %v1733
        %1798 = vst [vmem:[%s252 + $0x48] sm:$0xf] %v1734
        %1799 = vst [vmem:[%s252 + $0x4c] sm:$0xf] %v1735
        %1800 = vst [vmem:[%s252 + $0x50] sm:$0xf] %v1736
        %1801 = vst [vmem:[%s252 + $0x54] sm:$0xf] %v1737
        %1802 = vst [vmem:[%s252 + $0x58] sm:$0xf] %v1738
        %1803 = vst [vmem:[%s252 + $0x5c] sm:$0xf] %v1739
        %1804 = vst [vmem:[%s252 + $0x60] sm:$0xf] %v1740
        %1805 = vst [vmem:[%s252 + $0x64] sm:$0xf] %v1741
        %1806 = vst [vmem:[%s252 + $0x68] sm:$0xf] %v1742
        %1807 = vst [vmem:[%s252 + $0x6c] sm:$0xf] %v1743
        %1808 = vst [vmem:[%s252 + $0x70] sm:$0xf] %v1744
        %1809 = vst [vmem:[%s252 + $0x74] sm:$0xf] %v1745
        %1810 = vst [vmem:[%s252 + $0x78] sm:$0xf] %v1746
        %1811 = vst [vmem:[%s252 + $0x7c] sm:$0xf] %v1747
      $region44: #{gcn_forward.5} parent=35 // pred_fallthru
        _
      %s1812 = smul.u32 32, %s19
      %p1813 = scmp.lt.s32.totalorder %s1812, 63
      %s1814 = scalar_select %p1813, %s1812, 63
      %s1815 = smul.addr %s1814, 4
      %s1816 = scalar_lea.vmem %s4, %s1815
      // Predicated region
      $region45: #{gcn_forward.5} parent=35 // pred_check
        %p1817 = pneg %p141
      $region46: #{gcn_forward.5} parent=35 // pred_check_branch
        %1819 = sbr.rel (%p1817) target = $region48
      $region47: #{gcn_forward.5} parent=35 // pred_region
        %s1820 = smul.u32 32, %s19
      $region48: #{gcn_forward.5} parent=35 // pred_fallthru
        _
    $region36: #{gcn_forward.5} parent=5 // pred_fallthru
      _
    %p1821 = scmp.le.s32.totalorder 2, %s10
    // Predicated region
    $region49: #{gcn_forward.5} parent=5 // pred_check
      %p1822 = pneg %p1821
    $region50: #{gcn_forward.5} parent=5 // pred_check_branch
      %1824 = sbr.rel (%p1822) target = $region52
    $region51: #{gcn_forward.5} parent=5 // pred_region
      %s1825 = ssub.s32 %s10, 2
      // Predicated region
      $region53: #{gcn_forward.5} parent=51 // pred_check
        %p1826 = pneg %p147
      $region54: #{gcn_forward.5} parent=51 // pred_check_branch
        %1828 = sbr.rel (%p1826) target = $region56
      $region55: #{gcn_forward.5} parent=51 // pred_region
        %s1829 = smul.u32 32, %s21
        %p1830 = scmp.lt.s32.totalorder %s1829, 63
        %s1831 = scalar_select %p1830, %s1829, 63
        %s1832 = smul.addr %s1831, 4
        %s1833 = scalar_lea.vmem %s4, %s1832
      $region56: #{gcn_forward.5} parent=51 // pred_fallthru
        _
    $region52: #{gcn_forward.5} parent=5 // pred_fallthru
      _
  $region6: #{gcn_forward.5} parent=0 // loop_footer
    %s14 = sadd.s32 1, %s10
  $region7: #{gcn_forward.5} parent=0 // loop_footer_branch
    %9 = sbr.rel target = $region3
  $region8: #{gcn_forward.5} parent=0 // loop_exit
    _

</llo_original>
